<compile_context>
chip_gen: v5e
topology: v5e:2x2
jax: 0.10.0
libtpu: 0.0.40
codegen_flags: <defaults>
</compile_context>

<pallas_src>
import functools

import jax
import jax.numpy as jnp
from jax.experimental import pallas as pl
from jax.experimental.pallas import tpu as pltpu

BN_EPS = 1e-5
LANE = 128


def _rup(x, m):
    return ((x + m - 1) // m) * m


# ---------------------------------------------------------------------------
# Static layouts (Python ints only)
# ---------------------------------------------------------------------------
def build_weight_layout(label_hierarchy, sprite_dim, align=LANE):
    """Column layout of the block-diagonal packed head weight W_all.
    Every per-sprite left/right slice starts on a 128-lane boundary."""
    n = len(label_hierarchy)
    lay = {"left": [], "right": [], "li_pad": [], "lj_pad": []}
    cur = _rup(label_hierarchy[0], align)          # classifier block at column 0
    for i in range(n - 1):
        Li, Lj = label_hierarchy[i], label_hierarchy[i + 1]
        lay["left"].append(cur)
        lay["li_pad"].append(_rup(Li, align))
        cur += sprite_dim * lay["li_pad"][i]
        lay["right"].append(cur)
        lay["lj_pad"].append(_rup(Lj, align))
        cur += sprite_dim * lay["lj_pad"][i]
    lay["total"] = cur                              # multiple of 128 by construction
    return lay


def build_out_layout(label_hierarchy):
    """Packed lane-dense output slab: [prob_0 .. prob_{n-1}, tm_0 .. tm_{n-2}, pad]."""
    n = len(label_hierarchy)
    lay = {"prob": [], "tm": []}
    cur = 0
    for i in range(n):
        lay["prob"].append(cur)
        cur += label_hierarchy[i]
    for i in range(n - 1):
        lay["tm"].append(cur)
        cur += label_hierarchy[i + 1] * label_hierarchy[i]
    lay["total"] = cur
    lay["padded"] = _rup(cur, LANE)
    return lay


# ---------------------------------------------------------------------------
# Generation-aware tiling helpers
# ---------------------------------------------------------------------------
def _vmem_budget_bytes():
    """~75% of this generation's VMEM (v7x 64 MiB -> 48 MiB, v5e/v6e 128 -> 96 MiB)."""
    try:
        cap = int(pltpu.get_tpu_info().vmem_capacity_bytes)
    except Exception:
        cap = 64 << 20                              # conservative fallback (v7x-sized)
    return max(32 << 20, (cap * 3) // 4)


def choose_block_b(B, C, HW, feat_itemsize, resident_weight_bytes, vmem_budget):
    """Biggest batch tile whose double-buffered feature slab fits the VMEM budget,
    rounded to a sublane multiple, with >= 2 grid tiles so v7x can use both TCs."""
    sub = 32 // feat_itemsize                       # 8 for f32, 16 for bf16 sublane packing
    row_bytes = _rup(C, sub) * _rup(HW, LANE) * feat_itemsize
    avail = vmem_budget - 2 * resident_weight_bytes - (4 << 20)
    bt = max(8, (avail // (2 * row_bytes)) // 8 * 8)
    b_pad8 = _rup(B, 8)
    if b_pad8 >= 16:
        bt = min(bt, max(8, (b_pad8 // 2) // 8 * 8))
    else:
        bt = min(bt, b_pad8)
    return int(bt)


def _const_spec(shape, single_buffer):
    """BlockSpec for a grid-constant input; optionally single-buffered."""
    nd = len(shape)
    idx = lambda b: (0,) * nd
    if single_buffer:
        return pl.BlockSpec(shape, idx, pipeline_mode=pl.Buffered(1))
    return pl.BlockSpec(shape, idx)


# ---------------------------------------------------------------------------
# Fused kernel: pool + fc(+folded BNs) + ELU + classifier + all transitions
# ---------------------------------------------------------------------------
def make_fused_kernel(label_hierarchy, sprite_dim, wlay, olay):
    n = len(label_hierarchy)
    L0 = label_hierarchy[0]
    S = sprite_dim

    def kernel(*refs):
        feat_ref, fcw_ref, fcb_ref, wall_ref, ball_ref = refs[:5]
        prior_refs = refs[5:5 + (n - 1)]
        out_ref = refs[5 + (n - 1)]

        # ---- AdaptiveAvgPool2d((1,1)): sum over the spatial (lane) axis of the
        # native (Bt, C, H*W) tile; 1/(H*W) is folded into fc_w at prepare time.
        feat = feat_ref[...].astype(jnp.float32)            # f32 accumulation
        pooled = jnp.sum(feat, axis=-1)                      # (Bt, C), C lane-dense

        # ---- (BN1 + Linear + BN2)-folded fc + ELU(alpha=1) ----
        x = jnp.dot(pooled, fcw_ref[...],
                    preferred_element_type=jnp.float32) + fcb_ref[...]
        x = jnp.where(x > 0.0, x, jnp.exp(jnp.minimum(x, 0.0)) - 1.0)
        bt = x.shape[0]

        # ---- classifier + all transition left/right nets: one MXU pass over the
        # 128-lane-aligned block-diagonal packed weight ----
        z = jnp.dot(x, wall_ref[...],
                    preferred_element_type=jnp.float32) + ball_ref[...]

        # ---- classifier softmax -> slab ----
        logit = z[:, 0:L0]
        logit = logit - jnp.max(logit, axis=-1, keepdims=True)
        e = jnp.exp(logit)
        prev = e / jnp.sum(e, axis=-1, keepdims=True)
        p0 = olay["prob"][0]
        out_ref[:, p0:p0 + L0] = prev

        # ---- transition levels (static unroll; everything stays on-chip) ----
        for i in range(n - 1):
            Li, Lj = label_hierarchy[i], label_hierarchy[i + 1]
            Lip, Ljp = wlay["li_pad"][i], wlay["lj_pad"][i]
            lo, ro = wlay["left"][i], wlay["right"][i]
            # tm accumulated directly in transposed (b, j, i) layout:
            #   tm_t[b, j, i] = sum_s tm_right[b, s, j] * tm_left[b, i, s]
            tm_t = jnp.zeros((bt, Lj, Li), jnp.float32)
            for s in range(S):                               # S == sprite_dim (tiny)
                left_s = z[:, lo + s * Lip: lo + s * Lip + Li]    # == tm_left[:, :, s]
                right_s = z[:, ro + s * Ljp: ro + s * Ljp + Lj]   # == tm_right[:, s, :]
                tm_t = tm_t + right_s[:, :, None] * left_s[:, None, :]
            # prior (gamma * W_prior + beta, pre-folded & pre-transposed; zeros if none)
            tm_t = tm_t + prior_refs[i][...][None, :, :]
            # softmax over torch's dim=-1 (child labels) == axis 1 in this layout,
            # matching torch.softmax(tm, dim=-1).transpose(1, 2)
            tm_t = tm_t - jnp.max(tm_t, axis=1, keepdims=True)
            e = jnp.exp(tm_t)
            tm_t = e / jnp.sum(e, axis=1, keepdims=True)
            # prob_{i+1}[b, j] = sum_i tm_t[b, j, i] * prev[b, i]
            prev = jnp.sum(tm_t * prev[:, None, :], axis=-1)
            poff = olay["prob"][i + 1]
            out_ref[:, poff:poff + Lj] = prev
            # write tm rows into the packed slab (row-major (j, i) flattening)
            toff = olay["tm"][i]
            for j in range(Lj):
                out_ref[:, toff + j * Li: toff + (j + 1) * Li] = tm_t[:, j, :]

        # deterministic lane padding of the slab tail
        pad = olay["padded"] - olay["total"]
        if pad:
            out_ref[:, olay["total"]:] = jnp.zeros((bt, pad), jnp.float32)

    return kernel


# ---------------------------------------------------------------------------
# Forward wrapper (single pallas_call, batch-tiled grid, one packed output slab)
# ---------------------------------------------------------------------------
def resnet_transition_forward(feat_map, fused, *, label_hierarchy, sprite_dim,
                              block_b=None, single_buffer_weights=True):
    B, C, H, W = feat_map.shape
    HW = H * W
    n = len(label_hierarchy)
    hid = fused["fc_w"].shape[1]
    total_w = fused["w_all"].shape[1]
    wlay = build_weight_layout(label_hierarchy, sprite_dim)
    olay = build_out_layout(label_hierarchy)

    # Native NCHW consumed as (B, C, H*W): contiguous collapse of the trailing
    # spatial dims only -> no transpose materialized in HBM.
    feat = feat_map.reshape(B, C, HW)

    vmem_budget = _vmem_budget_bytes()
    weight_bytes = sum(int(a.size) * a.dtype.itemsize
                       for a in [fused["fc_w"], fused["fc_b"], fused["w_all"],
                                 fused["b_all"], *fused["priors_t"]])
    bt = block_b if block_b is not None else choose_block_b(
        B, C, HW, feat.dtype.itemsize, weight_bytes, vmem_budget)

    # Pad the batch to a multiple of the tile (replaces the old "one giant tile"
    # fallback for non-divisible batches).
    b_pad = _rup(B, bt)
    if b_pad != B:
        feat = jnp.pad(feat, ((0, b_pad - B), (0, 0), (0, 0)))
    grid = (b_pad // bt,)

    kernel = make_fused_kernel(label_hierarchy, sprite_dim, wlay, olay)

    in_specs = [
        pl.BlockSpec((bt, C, HW), lambda b: (b, 0, 0)),              # feature-map tile
        _const_spec((C, hid), single_buffer_weights),                # BN-folded fc weight
        _const_spec((1, hid), single_buffer_weights),                # BN-folded fc bias
        _const_spec((hid, total_w), single_buffer_weights),          # packed head weights
        _const_spec((1, total_w), single_buffer_weights),            # packed head biases
    ]
    for i in range(n - 1):
        Lj, Li = label_hierarchy[i + 1], label_hierarchy[i]
        in_specs.append(_const_spec((Lj, Li), single_buffer_weights))  # transposed prior

    out_shape = jax.ShapeDtypeStruct((b_pad, olay["padded"]), jnp.float32)
    out_specs = pl.BlockSpec((bt, olay["padded"]), lambda b: (b, 0))

    slab = pl.pallas_call(
        kernel,
        grid=grid,
        out_shape=out_shape,
        in_specs=in_specs,
        out_specs=out_specs,
        compiler_params=pltpu.CompilerParams(
            dimension_semantics=("parallel",),
            vmem_limit_bytes=int(vmem_budget)),
    )(feat, fused["fc_w"], fused["fc_b"], fused["w_all"], fused["b_all"],
      *fused["priors_t"])

    # Split the tiny packed slab back into the torch-shaped outputs.
    probs = [slab[:B, olay["prob"][i]:olay["prob"][i] + label_hierarchy[i]]
             for i in range(n)]
    transition_matrices = [
        slab[:B, olay["tm"][i]:olay["tm"][i] + label_hierarchy[i + 1] * label_hierarchy[i]]
        .reshape(B, label_hierarchy[i + 1], label_hierarchy[i])
        for i in range(n - 1)
    ]
    # fine_to_coarse=False -> no reversal
    return probs, transition_matrices


# ---------------------------------------------------------------------------
# Parameter construction (torch layout) + one-time fused-parameter precompute
# ---------------------------------------------------------------------------
def init_params(key, feature_dim, hid_dim, label_hierarchy, sprite_dim):
    """Deterministic torch-layout parameters (Linear weights stored as (in, out))."""
    keys = iter(jax.random.split(key, 32))

    def linear(k, fan_in, fan_out):
        k1, k2 = jax.random.split(k)
        bound = 1.0 / jnp.sqrt(jnp.float32(fan_in))
        w = jax.random.uniform(k1, (fan_in, fan_out), jnp.float32, -bound, bound)
        b = jax.random.uniform(k2, (1, fan_out), jnp.float32, -bound, bound)
        return w, b

    n = len(label_hierarchy)
    split = hid_dim // n
    p = {}
    p["bn1_g"] = jnp.ones((1, feature_dim), jnp.float32)
    p["bn1_b"] = jnp.zeros((1, feature_dim), jnp.float32)
    p["bn1_m"] = jnp.zeros((1, feature_dim), jnp.float32)
    p["bn1_v"] = jnp.ones((1, feature_dim), jnp.float32)
    p["fc_w"], p["fc_b"] = linear(next(keys), feature_dim, hid_dim)
    p["bn2_g"] = jnp.ones((1, hid_dim), jnp.float32)
    p["bn2_b"] = jnp.zeros((1, hid_dim), jnp.float32)
    p["bn2_m"] = jnp.zeros((1, hid_dim), jnp.float32)
    p["bn2_v"] = jnp.ones((1, hid_dim), jnp.float32)
    p["cls_w"], p["cls_b"] = linear(next(keys), split, label_hierarchy[0])

    p["transitions"] = []
    for i in range(n - 1):
        Li, Lj = label_hierarchy[i], label_hierarchy[i + 1]
        wl, bl = linear(next(keys), split, Li * sprite_dim)    # torch col order (i, s)
        wr, br = linear(next(keys), split, sprite_dim * Lj)    # torch col order (s, j)
        if i in (0, 1):
            # W_s2f / W_f2o come from an .npz in the torch module; synthesized here.
            w_prior = jax.random.normal(next(keys), (Li, Lj), jnp.float32)
            gamma = jnp.ones((1,), jnp.float32)
            beta = jnp.zeros((1,), jnp.float32)
        else:
            w_prior = jnp.zeros((Li, Lj), jnp.float32)
            gamma = jnp.zeros((1,), jnp.float32)
            beta = jnp.zeros((1,), jnp.float32)
        p["transitions"].append(dict(wl=wl, bl=bl, wr=wr, br=br,
                                     w_prior=w_prior, gamma=gamma, beta=beta))
    return p


def prepare_fused_params(p, label_hierarchy, sprite_dim, hid_dim, pool_size):
    """One-time precompute: fold eval-mode BNs and the 1/(H*W) pool scale into fc,
    pack the 128-lane-aligned block-diagonal head weight W_all, and fold/transpose
    the priors."""
    n = len(label_hierarchy)
    S = sprite_dim
    split = hid_dim // n

    s1 = p["bn1_g"] * jax.lax.rsqrt(p["bn1_v"] + BN_EPS)       # (1, C)
    t1 = p["bn1_b"] - p["bn1_m"] * s1
    s2 = p["bn2_g"] * jax.lax.rsqrt(p["bn2_v"] + BN_EPS)       # (1, hid)
    t2 = p["bn2_b"] - p["bn2_m"] * s2
    fc_w = (s1.T * p["fc_w"]) * s2 / float(pool_size)          # pool mean folded in
    fc_b = (t1 @ p["fc_w"] + p["fc_b"]) * s2 + t2

    wlay = build_weight_layout(label_hierarchy, sprite_dim)
    w_all = jnp.zeros((hid_dim, wlay["total"]), jnp.float32)
    b_all = jnp.zeros((1, wlay["total"]), jnp.float32)

    L0 = label_hierarchy[0]
    w_all = w_all.at[0:split, 0:L0].set(p["cls_w"])            # classifier uses split 0
    b_all = b_all.at[:, 0:L0].set(p["cls_b"])

    priors_t = []
    for i in range(n - 1):
        Li, Lj = label_hierarchy[i], label_hierarchy[i + 1]
        Lip, Ljp = wlay["li_pad"][i], wlay["lj_pad"][i]
        lo, ro = wlay["left"][i], wlay["right"][i]
        tp = p["transitions"][i]
        r0, r1 = (i + 1) * split, (i + 2) * split              # level i+1 uses split i+1
        wl3 = tp["wl"].reshape(split, Li, S)                   # torch col order (i, s)
        bl2 = tp["bl"].reshape(Li, S)
        wr, br = tp["wr"], tp["br"]                            # torch col order (s, j)
        for s in range(S):
            w_all = w_all.at[r0:r1, lo + s * Lip: lo + s * Lip + Li].set(wl3[:, :, s])
            b_all = b_all.at[:, lo + s * Lip: lo + s * Lip + Li].set(bl2[:, s][None, :])
            w_all = w_all.at[r0:r1, ro + s * Ljp: ro + s * Ljp + Lj].set(wr[:, s * Lj:(s + 1) * Lj])
            b_all = b_all.at[:, ro + s * Ljp: ro + s * Ljp + Lj].set(br[:, s * Lj:(s + 1) * Lj])
        # Prior with gamma/beta folded, stored transposed as (Lj, Li).
        priors_t.append((tp["gamma"] * tp["w_prior"] + tp["beta"]).T)

    return dict(fc_w=fc_w, fc_b=fc_b, w_all=w_all, b_all=b_all, priors_t=priors_t)


# ---------------------------------------------------------------------------
# Pure-JAX reference (torch semantics, un-fused, raw params) for validation
# ---------------------------------------------------------------------------
def reference_forward(feat_map, p, label_hierarchy, sprite_dim):
    feat_map = feat_map.astype(jnp.float32)
    B, C, H, W = feat_map.shape
    n = len(label_hierarchy)
    hid = p["fc_w"].shape[1]
    split = hid // n
    pooled = jnp.mean(feat_map.reshape(B, C, H * W), axis=-1)
    x = (pooled - p["bn1_m"]) * jax.lax.rsqrt(p["bn1_v"] + BN_EPS) * p["bn1_g"] + p["bn1_b"]
    x = x @ p["fc_w"] + p["fc_b"]
    x = (x - p["bn2_m"]) * jax.lax.rsqrt(p["bn2_v"] + BN_EPS) * p["bn2_g"] + p["bn2_b"]
    x = jnp.where(x > 0, x, jnp.exp(x) - 1.0)
    splits = [x[:, i * split:(i + 1) * split] for i in range(n)]
    probs = [jax.nn.softmax(splits[0] @ p["cls_w"] + p["cls_b"], axis=-1)]
    tms = []
    for i in range(n - 1):
        tp = p["transitions"][i]
        Li, Lj = label_hierarchy[i], label_hierarchy[i + 1]
        left = (splits[i + 1] @ tp["wl"] + tp["bl"]).reshape(B, Li, sprite_dim)
        right = (splits[i + 1] @ tp["wr"] + tp["br"]).reshape(B, sprite_dim, Lj)
        tm = jnp.matmul(left, right)
        tm = tm + tp["gamma"] * tp["w_prior"] + tp["beta"]
        tm = jax.nn.softmax(tm, axis=-1)
        tm_t = jnp.swapaxes(tm, 1, 2)
        probs.append(jnp.einsum("bji,bi->bj", tm_t, probs[-1]))
        tms.append(tm_t)
    return probs, tms


if __name__ == "__main__":
    # Small shapes: B=16 (auto-tiled Bt=8 -> grid=(2,)), feature_dim=64 (stand-in
    # for ResNet50's 2048), 4x4 feature map, hid_dim=24 -> split_dim=8,
    # label_hierarchy=[3,5,7], sprite_dim=2.
    B, C, H, W = 16, 64, 4, 4
    hid_dim = 24
    label_hierarchy = [3, 5, 7]
    sprite_dim = 2

    key = jax.random.PRNGKey(0)
    k_feat, k_params = jax.random.split(key)
    # Extractor output (NCHW), emitted in bf16 so the kernel's dominant HBM read
    # is half-width.
    feat_map = jax.random.normal(k_feat, (B, C, H, W), jnp.float32).astype(jnp.bfloat16)
    raw_params = init_params(k_params, C, hid_dim, label_hierarchy, sprite_dim)
    fused_params = prepare_fused_params(raw_params, label_hierarchy, sprite_dim,
                                        hid_dim, H * W)

    def build_fwd(single_buffer):
        return jax.jit(functools.partial(
            resnet_transition_forward, label_hierarchy=label_hierarchy,
            sprite_dim=sprite_dim, single_buffer_weights=single_buffer))

    try:
        probs, tms = build_fwd(True)(feat_map, fused_params)
        jax.block_until_ready(probs)
    except Exception:
        # pl.Buffered(1) single-buffering not supported on this jax/backend:
        # fall back to default double-buffered constant weights.
        probs, tms = build_fwd(False)(feat_map, fused_params)
        jax.block_until_ready(probs)
    jax.block_until_ready(tms)

    # Validate against the un-fused pure-JAX reference (torch semantics).
    ref_probs, ref_tms = reference_forward(feat_map, raw_params, label_hierarchy, sprite_dim)
    for got, ref in zip(probs, ref_probs):
        assert jnp.allclose(got, ref, atol=5e-3, rtol=5e-3), float(jnp.max(jnp.abs(got - ref)))
    for got, ref in zip(tms, ref_tms):
        assert jnp.allclose(got, ref, atol=5e-3, rtol=5e-3), float(jnp.max(jnp.abs(got - ref)))

    for i, pv in enumerate(probs):
        assert pv.shape == (B, label_hierarchy[i])
        assert jnp.allclose(jnp.sum(pv, axis=-1), 1.0, atol=1e-4)
    for i, tm in enumerate(tms):
        assert tm.shape == (B, label_hierarchy[i + 1], label_hierarchy[i])

    print("KERNEL_OK")
</pallas_src>

<mosaic_0001>
module attributes {stable_mosaic.version = 11 : i64} {
  func.func @kernel(%arg0: i32, %arg1: memref<8x64x16xbf16, #tpu.memory_space<vmem>>, %arg2: memref<64x24xf32, #tpu.memory_space<vmem>>, %arg3: memref<1x24xf32, #tpu.memory_space<vmem>>, %arg4: memref<24x1152xf32, #tpu.memory_space<vmem>>, %arg5: memref<1x1152xf32, #tpu.memory_space<vmem>>, %arg6: memref<5x3xf32, #tpu.memory_space<vmem>>, %arg7: memref<7x5xf32, #tpu.memory_space<vmem>>, %arg8: memref<8x128xf32, #tpu.memory_space<vmem>>) attributes {dimension_semantics = [#tpu.dimension_semantics<parallel>], iteration_bounds = array<i64: 2>, scalar_prefetch = 0 : i64, scratch_operands = 0 : i64, tpu.core_type = #tpu.core_type<tc>, window_params = [{transform_indices = @transform_0, window_bounds = array<i64: 8, 64, 16>}, {pipeline_mode = #tpu.pipeline_mode<synchronous>, transform_indices = @transform_1, window_bounds = array<i64: 64, 24>}, {pipeline_mode = #tpu.pipeline_mode<synchronous>, transform_indices = @transform_2, window_bounds = array<i64: 1, 24>}, {pipeline_mode = #tpu.pipeline_mode<synchronous>, transform_indices = @transform_3, window_bounds = array<i64: 24, 1152>}, {pipeline_mode = #tpu.pipeline_mode<synchronous>, transform_indices = @transform_4, window_bounds = array<i64: 1, 1152>}, {pipeline_mode = #tpu.pipeline_mode<synchronous>, transform_indices = @transform_5, window_bounds = array<i64: 5, 3>}, {pipeline_mode = #tpu.pipeline_mode<synchronous>, transform_indices = @transform_6, window_bounds = array<i64: 7, 5>}, {transform_indices = @transform_7, window_bounds = array<i64: 8, 128>}]} {
    %c0 = arith.constant 0 : index
    %c0_0 = arith.constant 0 : index
    %c0_1 = arith.constant 0 : index
    %0 = vector.load %arg1[%c0, %c0_0, %c0_1] : memref<8x64x16xbf16, #tpu.memory_space<vmem>>, vector<8x64x16xbf16>
    %1 = arith.extf %0 : vector<8x64x16xbf16> to vector<8x64x16xf32>
    %cst = arith.constant dense<0.000000e+00> : vector<8x64xf32>
    %2 = vector.multi_reduction <add>, %1, %cst [2] : vector<8x64x16xf32> to vector<8x64xf32>
    %c0_2 = arith.constant 0 : index
    %c0_3 = arith.constant 0 : index
    %3 = vector.load %arg2[%c0_2, %c0_3] : memref<64x24xf32, #tpu.memory_space<vmem>>, vector<64x24xf32>
    %cst_4 = arith.constant dense<0.000000e+00> : vector<8x24xf32>
    %4 = tpu.matmul %2, %3, %cst_4 {dimension_numbers = #tpu.dot_dimension_numbers<[1], [0], [0], [1], [0, 0, 1, 1], [], []>} : vector<8x64xf32>, vector<64x24xf32>, vector<8x24xf32> -> vector<8x24xf32>
    %c0_5 = arith.constant 0 : index
    %c0_6 = arith.constant 0 : index
    %5 = vector.load %arg3[%c0_5, %c0_6] : memref<1x24xf32, #tpu.memory_space<vmem>>, vector<1x24xf32>
    %6 = vector.broadcast %5 : vector<1x24xf32> to vector<8x24xf32>
    %7 = arith.addf %4, %6 : vector<8x24xf32>
    %cst_7 = arith.constant 0.000000e+00 : f32
    %8 = vector.broadcast %cst_7 : f32 to vector<8x24xf32>
    %9 = arith.cmpf ogt, %7, %8 : vector<8x24xf32>
    %cst_8 = arith.constant 0.000000e+00 : f32
    %10 = vector.broadcast %cst_8 : f32 to vector<8x24xf32>
    %11 = arith.minimumf %7, %10 : vector<8x24xf32>
    %12 = math.exp %11 : vector<8x24xf32>
    %cst_9 = arith.constant 1.000000e+00 : f32
    %13 = vector.broadcast %cst_9 : f32 to vector<8x24xf32>
    %14 = arith.subf %12, %13 : vector<8x24xf32>
    %15 = arith.select %9, %7, %14 : vector<8x24xi1>, vector<8x24xf32>
    %c0_10 = arith.constant 0 : index
    %c0_11 = arith.constant 0 : index
    %16 = vector.load %arg4[%c0_10, %c0_11] : memref<24x1152xf32, #tpu.memory_space<vmem>>, vector<24x1152xf32>
    %cst_12 = arith.constant dense<0.000000e+00> : vector<8x1152xf32>
    %17 = tpu.matmul %15, %16, %cst_12 {dimension_numbers = #tpu.dot_dimension_numbers<[1], [0], [0], [1], [0, 0, 1, 1], [], []>} : vector<8x24xf32>, vector<24x1152xf32>, vector<8x1152xf32> -> vector<8x1152xf32>
    %c0_13 = arith.constant 0 : index
    %c0_14 = arith.constant 0 : index
    %18 = vector.load %arg5[%c0_13, %c0_14] : memref<1x1152xf32, #tpu.memory_space<vmem>>, vector<1x1152xf32>
    %19 = vector.broadcast %18 : vector<1x1152xf32> to vector<8x1152xf32>
    %20 = arith.addf %17, %19 : vector<8x1152xf32>
    %21 = vector.extract_strided_slice %20 {offsets = [0, 0], sizes = [8, 3], strides = [1, 1]} : vector<8x1152xf32> to vector<8x3xf32>
    %cst_15 = arith.constant dense<0xFF800000> : vector<8xf32>
    %22 = vector.multi_reduction <maximumf>, %21, %cst_15 [1] : vector<8x3xf32> to vector<8xf32>
    %23 = vector.shape_cast %22 : vector<8xf32> to vector<8x1xf32>
    %24 = vector.broadcast %23 : vector<8x1xf32> to vector<8x3xf32>
    %25 = arith.subf %21, %24 : vector<8x3xf32>
    %26 = math.exp %25 : vector<8x3xf32>
    %cst_16 = arith.constant dense<0.000000e+00> : vector<8xf32>
    %27 = vector.multi_reduction <add>, %26, %cst_16 [1] : vector<8x3xf32> to vector<8xf32>
    %28 = vector.shape_cast %27 : vector<8xf32> to vector<8x1xf32>
    %29 = vector.broadcast %28 : vector<8x1xf32> to vector<8x3xf32>
    %30 = arith.divf %26, %29 : vector<8x3xf32>
    %c0_17 = arith.constant 0 : index
    %c0_18 = arith.constant 0 : index
    %31 = vector.load %arg8[%c0_17, %c0_18] : memref<8x128xf32, #tpu.memory_space<vmem>>, vector<8x3xf32>
    tpu.vector_store %arg8[%c0_17, %c0_18], %30 {strides = array<i32>} : memref<8x128xf32, #tpu.memory_space<vmem>>, vector<8x3xf32>,
    %cst_19 = arith.constant 0.000000e+00 : f32
    %32 = vector.broadcast %cst_19 : f32 to vector<8x5x3xf32>
    %33 = vector.extract_strided_slice %20 {offsets = [0, 128], sizes = [8, 3], strides = [1, 1]} : vector<8x1152xf32> to vector<8x3xf32>
    %34 = vector.extract_strided_slice %20 {offsets = [0, 384], sizes = [8, 5], strides = [1, 1]} : vector<8x1152xf32> to vector<8x5xf32>
    %35 = vector.shape_cast %34 : vector<8x5xf32> to vector<8x5x1xf32>
    %36 = vector.shape_cast %33 : vector<8x3xf32> to vector<8x1x3xf32>
    %37 = vector.broadcast %35 : vector<8x5x1xf32> to vector<8x5x3xf32>
    %38 = vector.broadcast %36 : vector<8x1x3xf32> to vector<8x5x3xf32>
    %39 = arith.mulf %37, %38 : vector<8x5x3xf32>
    %40 = arith.addf %32, %39 : vector<8x5x3xf32>
    %41 = vector.extract_strided_slice %20 {offsets = [0, 256], sizes = [8, 3], strides = [1, 1]} : vector<8x1152xf32> to vector<8x3xf32>
    %42 = vector.extract_strided_slice %20 {offsets = [0, 512], sizes = [8, 5], strides = [1, 1]} : vector<8x1152xf32> to vector<8x5xf32>
    %43 = vector.shape_cast %42 : vector<8x5xf32> to vector<8x5x1xf32>
    %44 = vector.shape_cast %41 : vector<8x3xf32> to vector<8x1x3xf32>
    %45 = vector.broadcast %43 : vector<8x5x1xf32> to vector<8x5x3xf32>
    %46 = vector.broadcast %44 : vector<8x1x3xf32> to vector<8x5x3xf32>
    %47 = arith.mulf %45, %46 : vector<8x5x3xf32>
    %48 = arith.addf %40, %47 : vector<8x5x3xf32>
    %c0_20 = arith.constant 0 : index
    %c0_21 = arith.constant 0 : index
    %49 = vector.load %arg6[%c0_20, %c0_21] : memref<5x3xf32, #tpu.memory_space<vmem>>, vector<5x3xf32>
    %50 = vector.shape_cast %49 : vector<5x3xf32> to vector<1x5x3xf32>
    %51 = vector.broadcast %50 : vector<1x5x3xf32> to vector<8x5x3xf32>
    %52 = arith.addf %48, %51 : vector<8x5x3xf32>
    %cst_22 = arith.constant dense<0xFF800000> : vector<8x3xf32>
    %53 = vector.multi_reduction <maximumf>, %52, %cst_22 [1] : vector<8x5x3xf32> to vector<8x3xf32>
    %54 = vector.shape_cast %53 : vector<8x3xf32> to vector<8x1x3xf32>
    %55 = vector.broadcast %54 : vector<8x1x3xf32> to vector<8x5x3xf32>
    %56 = arith.subf %52, %55 : vector<8x5x3xf32>
    %57 = math.exp %56 : vector<8x5x3xf32>
    %cst_23 = arith.constant dense<0.000000e+00> : vector<8x3xf32>
    %58 = vector.multi_reduction <add>, %57, %cst_23 [1] : vector<8x5x3xf32> to vector<8x3xf32>
    %59 = vector.shape_cast %58 : vector<8x3xf32> to vector<8x1x3xf32>
    %60 = vector.broadcast %59 : vector<8x1x3xf32> to vector<8x5x3xf32>
    %61 = arith.divf %57, %60 : vector<8x5x3xf32>
    %62 = vector.shape_cast %30 : vector<8x3xf32> to vector<8x1x3xf32>
    %63 = vector.broadcast %62 : vector<8x1x3xf32> to vector<8x5x3xf32>
    %64 = arith.mulf %61, %63 : vector<8x5x3xf32>
    %cst_24 = arith.constant dense<0.000000e+00> : vector<8x5xf32>
    %65 = vector.multi_reduction <add>, %64, %cst_24 [2] : vector<8x5x3xf32> to vector<8x5xf32>
    %c0_25 = arith.constant 0 : index
    %c3 = arith.constant 3 : index
    %66 = vector.load %arg8[%c0_25, %c3] : memref<8x128xf32, #tpu.memory_space<vmem>>, vector<8x5xf32>
    tpu.vector_store %arg8[%c0_25, %c3], %65 {strides = array<i32>} : memref<8x128xf32, #tpu.memory_space<vmem>>, vector<8x5xf32>,
    %67 = vector.extract_strided_slice %61 {offsets = [0, 0, 0], sizes = [8, 1, 3], strides = [1, 1, 1]} : vector<8x5x3xf32> to vector<8x1x3xf32>
    %68 = vector.shape_cast %67 : vector<8x1x3xf32> to vector<8x3xf32>
    %c0_26 = arith.constant 0 : index
    %c15 = arith.constant 15 : index
    %69 = vector.load %arg8[%c0_26, %c15] : memref<8x128xf32, #tpu.memory_space<vmem>>, vector<8x3xf32>
    tpu.vector_store %arg8[%c0_26, %c15], %68 {strides = array<i32>} : memref<8x128xf32, #tpu.memory_space<vmem>>, vector<8x3xf32>,
    %70 = vector.extract_strided_slice %61 {offsets = [0, 1, 0], sizes = [8, 1, 3], strides = [1, 1, 1]} : vector<8x5x3xf32> to vector<8x1x3xf32>
    %71 = vector.shape_cast %70 : vector<8x1x3xf32> to vector<8x3xf32>
    %c0_27 = arith.constant 0 : index
    %c18 = arith.constant 18 : index
    %72 = vector.load %arg8[%c0_27, %c18] : memref<8x128xf32, #tpu.memory_space<vmem>>, vector<8x3xf32>
    tpu.vector_store %arg8[%c0_27, %c18], %71 {strides = array<i32>} : memref<8x128xf32, #tpu.memory_space<vmem>>, vector<8x3xf32>,
    %73 = vector.extract_strided_slice %61 {offsets = [0, 2, 0], sizes = [8, 1, 3], strides = [1, 1, 1]} : vector<8x5x3xf32> to vector<8x1x3xf32>
    %74 = vector.shape_cast %73 : vector<8x1x3xf32> to vector<8x3xf32>
    %c0_28 = arith.constant 0 : index
    %c21 = arith.constant 21 : index
    %75 = vector.load %arg8[%c0_28, %c21] : memref<8x128xf32, #tpu.memory_space<vmem>>, vector<8x3xf32>
    tpu.vector_store %arg8[%c0_28, %c21], %74 {strides = array<i32>} : memref<8x128xf32, #tpu.memory_space<vmem>>, vector<8x3xf32>,
    %76 = vector.extract_strided_slice %61 {offsets = [0, 3, 0], sizes = [8, 1, 3], strides = [1, 1, 1]} : vector<8x5x3xf32> to vector<8x1x3xf32>
    %77 = vector.shape_cast %76 : vector<8x1x3xf32> to vector<8x3xf32>
    %c0_29 = arith.constant 0 : index
    %c24 = arith.constant 24 : index
    %78 = vector.load %arg8[%c0_29, %c24] : memref<8x128xf32, #tpu.memory_space<vmem>>, vector<8x3xf32>
    tpu.vector_store %arg8[%c0_29, %c24], %77 {strides = array<i32>} : memref<8x128xf32, #tpu.memory_space<vmem>>, vector<8x3xf32>,
    %79 = vector.extract_strided_slice %61 {offsets = [0, 4, 0], sizes = [8, 1, 3], strides = [1, 1, 1]} : vector<8x5x3xf32> to vector<8x1x3xf32>
    %80 = vector.shape_cast %79 : vector<8x1x3xf32> to vector<8x3xf32>
    %c0_30 = arith.constant 0 : index
    %c27 = arith.constant 27 : index
    %81 = vector.load %arg8[%c0_30, %c27] : memref<8x128xf32, #tpu.memory_space<vmem>>, vector<8x3xf32>
    tpu.vector_store %arg8[%c0_30, %c27], %80 {strides = array<i32>} : memref<8x128xf32, #tpu.memory_space<vmem>>, vector<8x3xf32>,
    %cst_31 = arith.constant 0.000000e+00 : f32
    %82 = vector.broadcast %cst_31 : f32 to vector<8x7x5xf32>
    %83 = vector.extract_strided_slice %20 {offsets = [0, 640], sizes = [8, 5], strides = [1, 1]} : vector<8x1152xf32> to vector<8x5xf32>
    %84 = vector.extract_strided_slice %20 {offsets = [0, 896], sizes = [8, 7], strides = [1, 1]} : vector<8x1152xf32> to vector<8x7xf32>
    %85 = vector.shape_cast %84 : vector<8x7xf32> to vector<8x7x1xf32>
    %86 = vector.shape_cast %83 : vector<8x5xf32> to vector<8x1x5xf32>
    %87 = vector.broadcast %85 : vector<8x7x1xf32> to vector<8x7x5xf32>
    %88 = vector.broadcast %86 : vector<8x1x5xf32> to vector<8x7x5xf32>
    %89 = arith.mulf %87, %88 : vector<8x7x5xf32>
    %90 = arith.addf %82, %89 : vector<8x7x5xf32>
    %91 = vector.extract_strided_slice %20 {offsets = [0, 768], sizes = [8, 5], strides = [1, 1]} : vector<8x1152xf32> to vector<8x5xf32>
    %92 = vector.extract_strided_slice %20 {offsets = [0, 1024], sizes = [8, 7], strides = [1, 1]} : vector<8x1152xf32> to vector<8x7xf32>
    %93 = vector.shape_cast %92 : vector<8x7xf32> to vector<8x7x1xf32>
    %94 = vector.shape_cast %91 : vector<8x5xf32> to vector<8x1x5xf32>
    %95 = vector.broadcast %93 : vector<8x7x1xf32> to vector<8x7x5xf32>
    %96 = vector.broadcast %94 : vector<8x1x5xf32> to vector<8x7x5xf32>
    %97 = arith.mulf %95, %96 : vector<8x7x5xf32>
    %98 = arith.addf %90, %97 : vector<8x7x5xf32>
    %c0_32 = arith.constant 0 : index
    %c0_33 = arith.constant 0 : index
    %99 = vector.load %arg7[%c0_32, %c0_33] : memref<7x5xf32, #tpu.memory_space<vmem>>, vector<7x5xf32>
    %100 = vector.shape_cast %99 : vector<7x5xf32> to vector<1x7x5xf32>
    %101 = vector.broadcast %100 : vector<1x7x5xf32> to vector<8x7x5xf32>
    %102 = arith.addf %98, %101 : vector<8x7x5xf32>
    %cst_34 = arith.constant dense<0xFF800000> : vector<8x5xf32>
    %103 = vector.multi_reduction <maximumf>, %102, %cst_34 [1] : vector<8x7x5xf32> to vector<8x5xf32>
    %104 = vector.shape_cast %103 : vector<8x5xf32> to vector<8x1x5xf32>
    %105 = vector.broadcast %104 : vector<8x1x5xf32> to vector<8x7x5xf32>
    %106 = arith.subf %102, %105 : vector<8x7x5xf32>
    %107 = math.exp %106 : vector<8x7x5xf32>
    %cst_35 = arith.constant dense<0.000000e+00> : vector<8x5xf32>
    %108 = vector.multi_reduction <add>, %107, %cst_35 [1] : vector<8x7x5xf32> to vector<8x5xf32>
    %109 = vector.shape_cast %108 : vector<8x5xf32> to vector<8x1x5xf32>
    %110 = vector.broadcast %109 : vector<8x1x5xf32> to vector<8x7x5xf32>
    %111 = arith.divf %107, %110 : vector<8x7x5xf32>
    %112 = vector.shape_cast %65 : vector<8x5xf32> to vector<8x1x5xf32>
    %113 = vector.broadcast %112 : vector<8x1x5xf32> to vector<8x7x5xf32>
    %114 = arith.mulf %111, %113 : vector<8x7x5xf32>
    %cst_36 = arith.constant dense<0.000000e+00> : vector<8x7xf32>
    %115 = vector.multi_reduction <add>, %114, %cst_36 [2] : vector<8x7x5xf32> to vector<8x7xf32>
    %c0_37 = arith.constant 0 : index
    %c8 = arith.constant 8 : index
    %116 = vector.load %arg8[%c0_37, %c8] : memref<8x128xf32, #tpu.memory_space<vmem>>, vector<8x7xf32>
    tpu.vector_store %arg8[%c0_37, %c8], %115 {strides = array<i32>} : memref<8x128xf32, #tpu.memory_space<vmem>>, vector<8x7xf32>,
    %117 = vector.extract_strided_slice %111 {offsets = [0, 0, 0], sizes = [8, 1, 5], strides = [1, 1, 1]} : vector<8x7x5xf32> to vector<8x1x5xf32>
    %118 = vector.shape_cast %117 : vector<8x1x5xf32> to vector<8x5xf32>
    %c0_38 = arith.constant 0 : index
    %c30 = arith.constant 30 : index
    %119 = vector.load %arg8[%c0_38, %c30] : memref<8x128xf32, #tpu.memory_space<vmem>>, vector<8x5xf32>
    tpu.vector_store %arg8[%c0_38, %c30], %118 {strides = array<i32>} : memref<8x128xf32, #tpu.memory_space<vmem>>, vector<8x5xf32>,
    %120 = vector.extract_strided_slice %111 {offsets = [0, 1, 0], sizes = [8, 1, 5], strides = [1, 1, 1]} : vector<8x7x5xf32> to vector<8x1x5xf32>
    %121 = vector.shape_cast %120 : vector<8x1x5xf32> to vector<8x5xf32>
    %c0_39 = arith.constant 0 : index
    %c35 = arith.constant 35 : index
    %122 = vector.load %arg8[%c0_39, %c35] : memref<8x128xf32, #tpu.memory_space<vmem>>, vector<8x5xf32>
    tpu.vector_store %arg8[%c0_39, %c35], %121 {strides = array<i32>} : memref<8x128xf32, #tpu.memory_space<vmem>>, vector<8x5xf32>,
    %123 = vector.extract_strided_slice %111 {offsets = [0, 2, 0], sizes = [8, 1, 5], strides = [1, 1, 1]} : vector<8x7x5xf32> to vector<8x1x5xf32>
    %124 = vector.shape_cast %123 : vector<8x1x5xf32> to vector<8x5xf32>
    %c0_40 = arith.constant 0 : index
    %c40 = arith.constant 40 : index
    %125 = vector.load %arg8[%c0_40, %c40] : memref<8x128xf32, #tpu.memory_space<vmem>>, vector<8x5xf32>
    tpu.vector_store %arg8[%c0_40, %c40], %124 {strides = array<i32>} : memref<8x128xf32, #tpu.memory_space<vmem>>, vector<8x5xf32>,
    %126 = vector.extract_strided_slice %111 {offsets = [0, 3, 0], sizes = [8, 1, 5], strides = [1, 1, 1]} : vector<8x7x5xf32> to vector<8x1x5xf32>
    %127 = vector.shape_cast %126 : vector<8x1x5xf32> to vector<8x5xf32>
    %c0_41 = arith.constant 0 : index
    %c45 = arith.constant 45 : index
    %128 = vector.load %arg8[%c0_41, %c45] : memref<8x128xf32, #tpu.memory_space<vmem>>, vector<8x5xf32>
    tpu.vector_store %arg8[%c0_41, %c45], %127 {strides = array<i32>} : memref<8x128xf32, #tpu.memory_space<vmem>>, vector<8x5xf32>,
    %129 = vector.extract_strided_slice %111 {offsets = [0, 4, 0], sizes = [8, 1, 5], strides = [1, 1, 1]} : vector<8x7x5xf32> to vector<8x1x5xf32>
    %130 = vector.shape_cast %129 : vector<8x1x5xf32> to vector<8x5xf32>
    %c0_42 = arith.constant 0 : index
    %c50 = arith.constant 50 : index
    %131 = vector.load %arg8[%c0_42, %c50] : memref<8x128xf32, #tpu.memory_space<vmem>>, vector<8x5xf32>
    tpu.vector_store %arg8[%c0_42, %c50], %130 {strides = array<i32>} : memref<8x128xf32, #tpu.memory_space<vmem>>, vector<8x5xf32>,
    %132 = vector.extract_strided_slice %111 {offsets = [0, 5, 0], sizes = [8, 1, 5], strides = [1, 1, 1]} : vector<8x7x5xf32> to vector<8x1x5xf32>
    %133 = vector.shape_cast %132 : vector<8x1x5xf32> to vector<8x5xf32>
    %c0_43 = arith.constant 0 : index
    %c55 = arith.constant 55 : index
    %134 = vector.load %arg8[%c0_43, %c55] : memref<8x128xf32, #tpu.memory_space<vmem>>, vector<8x5xf32>
    tpu.vector_store %arg8[%c0_43, %c55], %133 {strides = array<i32>} : memref<8x128xf32, #tpu.memory_space<vmem>>, vector<8x5xf32>,
    %135 = vector.extract_strided_slice %111 {offsets = [0, 6, 0], sizes = [8, 1, 5], strides = [1, 1, 1]} : vector<8x7x5xf32> to vector<8x1x5xf32>
    %136 = vector.shape_cast %135 : vector<8x1x5xf32> to vector<8x5xf32>
    %c0_44 = arith.constant 0 : index
    %c60 = arith.constant 60 : index
    %137 = vector.load %arg8[%c0_44, %c60] : memref<8x128xf32, #tpu.memory_space<vmem>>, vector<8x5xf32>
    tpu.vector_store %arg8[%c0_44, %c60], %136 {strides = array<i32>} : memref<8x128xf32, #tpu.memory_space<vmem>>, vector<8x5xf32>,
    %cst_45 = arith.constant 0.000000e+00 : f32
    %138 = vector.broadcast %cst_45 : f32 to vector<8x63xf32>
    %c0_46 = arith.constant 0 : index
    %c65 = arith.constant 65 : index
    %139 = vector.load %arg8[%c0_46, %c65] : memref<8x128xf32, #tpu.memory_space<vmem>>, vector<8x63xf32>
    tpu.vector_store %arg8[%c0_46, %c65], %138 {strides = array<i32>} : memref<8x128xf32, #tpu.memory_space<vmem>>, vector<8x63xf32>,
    return
  }
  func.func @transform_0(%arg0: i32) -> (i32, i32, i32) {
    %c0_i32 = arith.constant 0 : i32
    %c0_i32_0 = arith.constant 0 : i32
    %c0_i32_1 = arith.constant 0 : i32
    return %arg0, %c0_i32, %c0_i32_0 : i32, i32, i32
  }
  func.func @transform_1(%arg0: i32) -> (i32, i32) {
    %c0_i32 = arith.constant 0 : i32
    %c0_i32_0 = arith.constant 0 : i32
    %c0_i32_1 = arith.constant 0 : i32
    return %c0_i32, %c0_i32_0 : i32, i32
  }
  func.func @transform_2(%arg0: i32) -> (i32, i32) {
    %c0_i32 = arith.constant 0 : i32
    %c0_i32_0 = arith.constant 0 : i32
    %c0_i32_1 = arith.constant 0 : i32
    return %c0_i32, %c0_i32_0 : i32, i32
  }
  func.func @transform_3(%arg0: i32) -> (i32, i32) {
    %c0_i32 = arith.constant 0 : i32
    %c0_i32_0 = arith.constant 0 : i32
    %c0_i32_1 = arith.constant 0 : i32
    return %c0_i32, %c0_i32_0 : i32, i32
  }
  func.func @transform_4(%arg0: i32) -> (i32, i32) {
    %c0_i32 = arith.constant 0 : i32
    %c0_i32_0 = arith.constant 0 : i32
    %c0_i32_1 = arith.constant 0 : i32
    return %c0_i32, %c0_i32_0 : i32, i32
  }
  func.func @transform_5(%arg0: i32) -> (i32, i32) {
    %c0_i32 = arith.constant 0 : i32
    %c0_i32_0 = arith.constant 0 : i32
    %c0_i32_1 = arith.constant 0 : i32
    return %c0_i32, %c0_i32_0 : i32, i32
  }
  func.func @transform_6(%arg0: i32) -> (i32, i32) {
    %c0_i32 = arith.constant 0 : i32
    %c0_i32_0 = arith.constant 0 : i32
    %c0_i32_1 = arith.constant 0 : i32
    return %c0_i32, %c0_i32_0 : i32, i32
  }
  func.func @transform_7(%arg0: i32) -> (i32, i32) {
    %c0_i32 = arith.constant 0 : i32
    %c0_i32_0 = arith.constant 0 : i32
    return %arg0, %c0_i32 : i32, i32
  }
}

module attributes {stable_mosaic.version = 11 : i64} {
  func.func @kernel(%arg0: i32, %arg1: memref<8x64x16xbf16, #tpu.memory_space<vmem>>, %arg2: memref<64x24xf32, #tpu.memory_space<vmem>>, %arg3: memref<1x24xf32, #tpu.memory_space<vmem>>, %arg4: memref<24x1152xf32, #tpu.memory_space<vmem>>, %arg5: memref<1x1152xf32, #tpu.memory_space<vmem>>, %arg6: memref<5x3xf32, #tpu.memory_space<vmem>>, %arg7: memref<7x5xf32, #tpu.memory_space<vmem>>, %arg8: memref<8x128xf32, #tpu.memory_space<vmem>>) attributes {dimension_semantics = [#tpu.dimension_semantics<parallel>], iteration_bounds = array<i64: 2>, scalar_prefetch = 0 : i64, scratch_operands = 0 : i64, tpu.core_type = #tpu.core_type<tc>, window_params = [{transform_indices = @transform_0, window_bounds = array<i64: 8, 64, 16>}, {pipeline_mode = #tpu.pipeline_mode<synchronous>, transform_indices = @transform_1, window_bounds = array<i64: 64, 24>}, {pipeline_mode = #tpu.pipeline_mode<synchronous>, transform_indices = @transform_2, window_bounds = array<i64: 1, 24>}, {pipeline_mode = #tpu.pipeline_mode<synchronous>, transform_indices = @transform_3, window_bounds = array<i64: 24, 1152>}, {pipeline_mode = #tpu.pipeline_mode<synchronous>, transform_indices = @transform_4, window_bounds = array<i64: 1, 1152>}, {pipeline_mode = #tpu.pipeline_mode<synchronous>, transform_indices = @transform_5, window_bounds = array<i64: 5, 3>}, {pipeline_mode = #tpu.pipeline_mode<synchronous>, transform_indices = @transform_6, window_bounds = array<i64: 7, 5>}, {transform_indices = @transform_7, window_bounds = array<i64: 8, 128>}]} {
    %c0 = arith.constant 0 : index
    %c0_0 = arith.constant 0 : index
    %c0_1 = arith.constant 0 : index
    %0 = vector.load %arg1[%c0, %c0_0, %c0_1] : memref<8x64x16xbf16, #tpu.memory_space<vmem>>, vector<8x64x16xbf16>
    %1 = arith.extf %0 : vector<8x64x16xbf16> to vector<8x64x16xf32>
    %cst = arith.constant dense<0.000000e+00> : vector<8x64xf32>
    %2 = vector.multi_reduction <add>, %1, %cst [2] : vector<8x64x16xf32> to vector<8x64xf32>
    %c0_2 = arith.constant 0 : index
    %c0_3 = arith.constant 0 : index
    %3 = vector.load %arg2[%c0_2, %c0_3] : memref<64x24xf32, #tpu.memory_space<vmem>>, vector<64x24xf32>
    %cst_4 = arith.constant dense<0.000000e+00> : vector<8x24xf32>
    %4 = tpu.matmul %2, %3, %cst_4 {dimension_numbers = #tpu.dot_dimension_numbers<[1], [0], [0], [1], [0, 0, 1, 1], [], []>} : vector<8x64xf32>, vector<64x24xf32>, vector<8x24xf32> -> vector<8x24xf32>
    %c0_5 = arith.constant 0 : index
    %c0_6 = arith.constant 0 : index
    %5 = vector.load %arg3[%c0_5, %c0_6] : memref<1x24xf32, #tpu.memory_space<vmem>>, vector<1x24xf32>
    %6 = vector.broadcast %5 : vector<1x24xf32> to vector<8x24xf32>
    %7 = arith.addf %4, %6 : vector<8x24xf32>
    %cst_7 = arith.constant 0.000000e+00 : f32
    %8 = vector.broadcast %cst_7 : f32 to vector<8x24xf32>
    %9 = arith.cmpf ogt, %7, %8 : vector<8x24xf32>
    %cst_8 = arith.constant 0.000000e+00 : f32
    %10 = vector.broadcast %cst_8 : f32 to vector<8x24xf32>
    %11 = arith.minimumf %7, %10 : vector<8x24xf32>
    %12 = math.exp %11 : vector<8x24xf32>
    %cst_9 = arith.constant 1.000000e+00 : f32
    %13 = vector.broadcast %cst_9 : f32 to vector<8x24xf32>
    %14 = arith.subf %12, %13 : vector<8x24xf32>
    %15 = arith.select %9, %7, %14 : vector<8x24xi1>, vector<8x24xf32>
    %c0_10 = arith.constant 0 : index
    %c0_11 = arith.constant 0 : index
    %16 = vector.load %arg4[%c0_10, %c0_11] : memref<24x1152xf32, #tpu.memory_space<vmem>>, vector<24x1152xf32>
    %cst_12 = arith.constant dense<0.000000e+00> : vector<8x1152xf32>
    %17 = tpu.matmul %15, %16, %cst_12 {dimension_numbers = #tpu.dot_dimension_numbers<[1], [0], [0], [1], [0, 0, 1, 1], [], []>} : vector<8x24xf32>, vector<24x1152xf32>, vector<8x1152xf32> -> vector<8x1152xf32>
    %c0_13 = arith.constant 0 : index
    %c0_14 = arith.constant 0 : index
    %18 = vector.load %arg5[%c0_13, %c0_14] : memref<1x1152xf32, #tpu.memory_space<vmem>>, vector<1x1152xf32>
    %19 = vector.broadcast %18 : vector<1x1152xf32> to vector<8x1152xf32>
    %20 = arith.addf %17, %19 : vector<8x1152xf32>
    %21 = vector.extract_strided_slice %20 {offsets = [0, 0], sizes = [8, 3], strides = [1, 1]} : vector<8x1152xf32> to vector<8x3xf32>
    %cst_15 = arith.constant dense<0xFF800000> : vector<8xf32>
    %22 = vector.multi_reduction <maximumf>, %21, %cst_15 [1] : vector<8x3xf32> to vector<8xf32>
    %23 = vector.shape_cast %22 : vector<8xf32> to vector<8x1xf32>
    %24 = vector.broadcast %23 : vector<8x1xf32> to vector<8x3xf32>
    %25 = arith.subf %21, %24 : vector<8x3xf32>
    %26 = math.exp %25 : vector<8x3xf32>
    %cst_16 = arith.constant dense<0.000000e+00> : vector<8xf32>
    %27 = vector.multi_reduction <add>, %26, %cst_16 [1] : vector<8x3xf32> to vector<8xf32>
    %28 = vector.shape_cast %27 : vector<8xf32> to vector<8x1xf32>
    %29 = vector.broadcast %28 : vector<8x1xf32> to vector<8x3xf32>
    %30 = arith.divf %26, %29 : vector<8x3xf32>
    %c0_17 = arith.constant 0 : index
    %c0_18 = arith.constant 0 : index
    %31 = vector.load %arg8[%c0_17, %c0_18] : memref<8x128xf32, #tpu.memory_space<vmem>>, vector<8x3xf32>
    tpu.vector_store %arg8[%c0_17, %c0_18], %30 {strides = array<i32>} : memref<8x128xf32, #tpu.memory_space<vmem>>, vector<8x3xf32>,
    %cst_19 = arith.constant 0.000000e+00 : f32
    %32 = vector.broadcast %cst_19 : f32 to vector<8x5x3xf32>
    %33 = vector.extract_strided_slice %20 {offsets = [0, 128], sizes = [8, 3], strides = [1, 1]} : vector<8x1152xf32> to vector<8x3xf32>
    %34 = vector.extract_strided_slice %20 {offsets = [0, 384], sizes = [8, 5], strides = [1, 1]} : vector<8x1152xf32> to vector<8x5xf32>
    %35 = vector.shape_cast %34 : vector<8x5xf32> to vector<8x5x1xf32>
    %36 = vector.shape_cast %33 : vector<8x3xf32> to vector<8x1x3xf32>
    %37 = vector.broadcast %35 : vector<8x5x1xf32> to vector<8x5x3xf32>
    %38 = vector.broadcast %36 : vector<8x1x3xf32> to vector<8x5x3xf32>
    %39 = arith.mulf %37, %38 : vector<8x5x3xf32>
    %40 = arith.addf %32, %39 : vector<8x5x3xf32>
    %41 = vector.extract_strided_slice %20 {offsets = [0, 256], sizes = [8, 3], strides = [1, 1]} : vector<8x1152xf32> to vector<8x3xf32>
    %42 = vector.extract_strided_slice %20 {offsets = [0, 512], sizes = [8, 5], strides = [1, 1]} : vector<8x1152xf32> to vector<8x5xf32>
    %43 = vector.shape_cast %42 : vector<8x5xf32> to vector<8x5x1xf32>
    %44 = vector.shape_cast %41 : vector<8x3xf32> to vector<8x1x3xf32>
    %45 = vector.broadcast %43 : vector<8x5x1xf32> to vector<8x5x3xf32>
    %46 = vector.broadcast %44 : vector<8x1x3xf32> to vector<8x5x3xf32>
    %47 = arith.mulf %45, %46 : vector<8x5x3xf32>
    %48 = arith.addf %40, %47 : vector<8x5x3xf32>
    %c0_20 = arith.constant 0 : index
    %c0_21 = arith.constant 0 : index
    %49 = vector.load %arg6[%c0_20, %c0_21] : memref<5x3xf32, #tpu.memory_space<vmem>>, vector<5x3xf32>
    %50 = vector.shape_cast %49 : vector<5x3xf32> to vector<1x5x3xf32>
    %51 = vector.broadcast %50 : vector<1x5x3xf32> to vector<8x5x3xf32>
    %52 = arith.addf %48, %51 : vector<8x5x3xf32>
    %cst_22 = arith.constant dense<0xFF800000> : vector<8x3xf32>
    %53 = vector.multi_reduction <maximumf>, %52, %cst_22 [1] : vector<8x5x3xf32> to vector<8x3xf32>
    %54 = vector.shape_cast %53 : vector<8x3xf32> to vector<8x1x3xf32>
    %55 = vector.broadcast %54 : vector<8x1x3xf32> to vector<8x5x3xf32>
    %56 = arith.subf %52, %55 : vector<8x5x3xf32>
    %57 = math.exp %56 : vector<8x5x3xf32>
    %cst_23 = arith.constant dense<0.000000e+00> : vector<8x3xf32>
    %58 = vector.multi_reduction <add>, %57, %cst_23 [1] : vector<8x5x3xf32> to vector<8x3xf32>
    %59 = vector.shape_cast %58 : vector<8x3xf32> to vector<8x1x3xf32>
    %60 = vector.broadcast %59 : vector<8x1x3xf32> to vector<8x5x3xf32>
    %61 = arith.divf %57, %60 : vector<8x5x3xf32>
    %62 = vector.shape_cast %30 : vector<8x3xf32> to vector<8x1x3xf32>
    %63 = vector.broadcast %62 : vector<8x1x3xf32> to vector<8x5x3xf32>
    %64 = arith.mulf %61, %63 : vector<8x5x3xf32>
    %cst_24 = arith.constant dense<0.000000e+00> : vector<8x5xf32>
    %65 = vector.multi_reduction <add>, %64, %cst_24 [2] : vector<8x5x3xf32> to vector<8x5xf32>
    %c0_25 = arith.constant 0 : index
    %c3 = arith.constant 3 : index
    %66 = vector.load %arg8[%c0_25, %c3] : memref<8x128xf32, #tpu.memory_space<vmem>>, vector<8x5xf32>
    tpu.vector_store %arg8[%c0_25, %c3], %65 {strides = array<i32>} : memref<8x128xf32, #tpu.memory_space<vmem>>, vector<8x5xf32>,
    %67 = vector.extract_strided_slice %61 {offsets = [0, 0, 0], sizes = [8, 1, 3], strides = [1, 1, 1]} : vector<8x5x3xf32> to vector<8x1x3xf32>
    %68 = vector.shape_cast %67 : vector<8x1x3xf32> to vector<8x3xf32>
    %c0_26 = arith.constant 0 : index
    %c15 = arith.constant 15 : index
    %69 = vector.load %arg8[%c0_26, %c15] : memref<8x128xf32, #tpu.memory_space<vmem>>, vector<8x3xf32>
    tpu.vector_store %arg8[%c0_26, %c15], %68 {strides = array<i32>} : memref<8x128xf32, #tpu.memory_space<vmem>>, vector<8x3xf32>,
    %70 = vector.extract_strided_slice %61 {offsets = [0, 1, 0], sizes = [8, 1, 3], strides = [1, 1, 1]} : vector<8x5x3xf32> to vector<8x1x3xf32>
    %71 = vector.shape_cast %70 : vector<8x1x3xf32> to vector<8x3xf32>
    %c0_27 = arith.constant 0 : index
    %c18 = arith.constant 18 : index
    %72 = vector.load %arg8[%c0_27, %c18] : memref<8x128xf32, #tpu.memory_space<vmem>>, vector<8x3xf32>
    tpu.vector_store %arg8[%c0_27, %c18], %71 {strides = array<i32>} : memref<8x128xf32, #tpu.memory_space<vmem>>, vector<8x3xf32>,
    %73 = vector.extract_strided_slice %61 {offsets = [0, 2, 0], sizes = [8, 1, 3], strides = [1, 1, 1]} : vector<8x5x3xf32> to vector<8x1x3xf32>
    %74 = vector.shape_cast %73 : vector<8x1x3xf32> to vector<8x3xf32>
    %c0_28 = arith.constant 0 : index
    %c21 = arith.constant 21 : index
    %75 = vector.load %arg8[%c0_28, %c21] : memref<8x128xf32, #tpu.memory_space<vmem>>, vector<8x3xf32>
    tpu.vector_store %arg8[%c0_28, %c21], %74 {strides = array<i32>} : memref<8x128xf32, #tpu.memory_space<vmem>>, vector<8x3xf32>,
    %76 = vector.extract_strided_slice %61 {offsets = [0, 3, 0], sizes = [8, 1, 3], strides = [1, 1, 1]} : vector<8x5x3xf32> to vector<8x1x3xf32>
    %77 = vector.shape_cast %76 : vector<8x1x3xf32> to vector<8x3xf32>
    %c0_29 = arith.constant 0 : index
    %c24 = arith.constant 24 : index
    %78 = vector.load %arg8[%c0_29, %c24] : memref<8x128xf32, #tpu.memory_space<vmem>>, vector<8x3xf32>
    tpu.vector_store %arg8[%c0_29, %c24], %77 {strides = array<i32>} : memref<8x128xf32, #tpu.memory_space<vmem>>, vector<8x3xf32>,
    %79 = vector.extract_strided_slice %61 {offsets = [0, 4, 0], sizes = [8, 1, 3], strides = [1, 1, 1]} : vector<8x5x3xf32> to vector<8x1x3xf32>
    %80 = vector.shape_cast %79 : vector<8x1x3xf32> to vector<8x3xf32>
    %c0_30 = arith.constant 0 : index
    %c27 = arith.constant 27 : index
    %81 = vector.load %arg8[%c0_30, %c27] : memref<8x128xf32, #tpu.memory_space<vmem>>, vector<8x3xf32>
    tpu.vector_store %arg8[%c0_30, %c27], %80 {strides = array<i32>} : memref<8x128xf32, #tpu.memory_space<vmem>>, vector<8x3xf32>,
    %cst_31 = arith.constant 0.000000e+00 : f32
    %82 = vector.broadcast %cst_31 : f32 to vector<8x7x5xf32>
    %83 = vector.extract_strided_slice %20 {offsets = [0, 640], sizes = [8, 5], strides = [1, 1]} : vector<8x1152xf32> to vector<8x5xf32>
    %84 = vector.extract_strided_slice %20 {offsets = [0, 896], sizes = [8, 7], strides = [1, 1]} : vector<8x1152xf32> to vector<8x7xf32>
    %85 = vector.shape_cast %84 : vector<8x7xf32> to vector<8x7x1xf32>
    %86 = vector.shape_cast %83 : vector<8x5xf32> to vector<8x1x5xf32>
    %87 = vector.broadcast %85 : vector<8x7x1xf32> to vector<8x7x5xf32>
    %88 = vector.broadcast %86 : vector<8x1x5xf32> to vector<8x7x5xf32>
    %89 = arith.mulf %87, %88 : vector<8x7x5xf32>
    %90 = arith.addf %82, %89 : vector<8x7x5xf32>
    %91 = vector.extract_strided_slice %20 {offsets = [0, 768], sizes = [8, 5], strides = [1, 1]} : vector<8x1152xf32> to vector<8x5xf32>
    %92 = vector.extract_strided_slice %20 {offsets = [0, 1024], sizes = [8, 7], strides = [1, 1]} : vector<8x1152xf32> to vector<8x7xf32>
    %93 = vector.shape_cast %92 : vector<8x7xf32> to vector<8x7x1xf32>
    %94 = vector.shape_cast %91 : vector<8x5xf32> to vector<8x1x5xf32>
    %95 = vector.broadcast %93 : vector<8x7x1xf32> to vector<8x7x5xf32>
    %96 = vector.broadcast %94 : vector<8x1x5xf32> to vector<8x7x5xf32>
    %97 = arith.mulf %95, %96 : vector<8x7x5xf32>
    %98 = arith.addf %90, %97 : vector<8x7x5xf32>
    %c0_32 = arith.constant 0 : index
    %c0_33 = arith.constant 0 : index
    %99 = vector.load %arg7[%c0_32, %c0_33] : memref<7x5xf32, #tpu.memory_space<vmem>>, vector<7x5xf32>
    %100 = vector.shape_cast %99 : vector<7x5xf32> to vector<1x7x5xf32>
    %101 = vector.broadcast %100 : vector<1x7x5xf32> to vector<8x7x5xf32>
    %102 = arith.addf %98, %101 : vector<8x7x5xf32>
    %cst_34 = arith.constant dense<0xFF800000> : vector<8x5xf32>
    %103 = vector.multi_reduction <maximumf>, %102, %cst_34 [1] : vector<8x7x5xf32> to vector<8x5xf32>
    %104 = vector.shape_cast %103 : vector<8x5xf32> to vector<8x1x5xf32>
    %105 = vector.broadcast %104 : vector<8x1x5xf32> to vector<8x7x5xf32>
    %106 = arith.subf %102, %105 : vector<8x7x5xf32>
    %107 = math.exp %106 : vector<8x7x5xf32>
    %cst_35 = arith.constant dense<0.000000e+00> : vector<8x5xf32>
    %108 = vector.multi_reduction <add>, %107, %cst_35 [1] : vector<8x7x5xf32> to vector<8x5xf32>
    %109 = vector.shape_cast %108 : vector<8x5xf32> to vector<8x1x5xf32>
    %110 = vector.broadcast %109 : vector<8x1x5xf32> to vector<8x7x5xf32>
    %111 = arith.divf %107, %110 : vector<8x7x5xf32>
    %112 = vector.shape_cast %65 : vector<8x5xf32> to vector<8x1x5xf32>
    %113 = vector.broadcast %112 : vector<8x1x5xf32> to vector<8x7x5xf32>
    %114 = arith.mulf %111, %113 : vector<8x7x5xf32>
    %cst_36 = arith.constant dense<0.000000e+00> : vector<8x7xf32>
    %115 = vector.multi_reduction <add>, %114, %cst_36 [2] : vector<8x7x5xf32> to vector<8x7xf32>
    %c0_37 = arith.constant 0 : index
    %c8 = arith.constant 8 : index
    %116 = vector.load %arg8[%c0_37, %c8] : memref<8x128xf32, #tpu.memory_space<vmem>>, vector<8x7xf32>
    tpu.vector_store %arg8[%c0_37, %c8], %115 {strides = array<i32>} : memref<8x128xf32, #tpu.memory_space<vmem>>, vector<8x7xf32>,
    %117 = vector.extract_strided_slice %111 {offsets = [0, 0, 0], sizes = [8, 1, 5], strides = [1, 1, 1]} : vector<8x7x5xf32> to vector<8x1x5xf32>
    %118 = vector.shape_cast %117 : vector<8x1x5xf32> to vector<8x5xf32>
    %c0_38 = arith.constant 0 : index
    %c30 = arith.constant 30 : index
    %119 = vector.load %arg8[%c0_38, %c30] : memref<8x128xf32, #tpu.memory_space<vmem>>, vector<8x5xf32>
    tpu.vector_store %arg8[%c0_38, %c30], %118 {strides = array<i32>} : memref<8x128xf32, #tpu.memory_space<vmem>>, vector<8x5xf32>,
    %120 = vector.extract_strided_slice %111 {offsets = [0, 1, 0], sizes = [8, 1, 5], strides = [1, 1, 1]} : vector<8x7x5xf32> to vector<8x1x5xf32>
    %121 = vector.shape_cast %120 : vector<8x1x5xf32> to vector<8x5xf32>
    %c0_39 = arith.constant 0 : index
    %c35 = arith.constant 35 : index
    %122 = vector.load %arg8[%c0_39, %c35] : memref<8x128xf32, #tpu.memory_space<vmem>>, vector<8x5xf32>
    tpu.vector_store %arg8[%c0_39, %c35], %121 {strides = array<i32>} : memref<8x128xf32, #tpu.memory_space<vmem>>, vector<8x5xf32>,
    %123 = vector.extract_strided_slice %111 {offsets = [0, 2, 0], sizes = [8, 1, 5], strides = [1, 1, 1]} : vector<8x7x5xf32> to vector<8x1x5xf32>
    %124 = vector.shape_cast %123 : vector<8x1x5xf32> to vector<8x5xf32>
    %c0_40 = arith.constant 0 : index
    %c40 = arith.constant 40 : index
    %125 = vector.load %arg8[%c0_40, %c40] : memref<8x128xf32, #tpu.memory_space<vmem>>, vector<8x5xf32>
    tpu.vector_store %arg8[%c0_40, %c40], %124 {strides = array<i32>} : memref<8x128xf32, #tpu.memory_space<vmem>>, vector<8x5xf32>,
    %126 = vector.extract_strided_slice %111 {offsets = [0, 3, 0], sizes = [8, 1, 5], strides = [1, 1, 1]} : vector<8x7x5xf32> to vector<8x1x5xf32>
    %127 = vector.shape_cast %126 : vector<8x1x5xf32> to vector<8x5xf32>
    %c0_41 = arith.constant 0 : index
    %c45 = arith.constant 45 : index
    %128 = vector.load %arg8[%c0_41, %c45] : memref<8x128xf32, #tpu.memory_space<vmem>>, vector<8x5xf32>
    tpu.vector_store %arg8[%c0_41, %c45], %127 {strides = array<i32>} : memref<8x128xf32, #tpu.memory_space<vmem>>, vector<8x5xf32>,
    %129 = vector.extract_strided_slice %111 {offsets = [0, 4, 0], sizes = [8, 1, 5], strides = [1, 1, 1]} : vector<8x7x5xf32> to vector<8x1x5xf32>
    %130 = vector.shape_cast %129 : vector<8x1x5xf32> to vector<8x5xf32>
    %c0_42 = arith.constant 0 : index
    %c50 = arith.constant 50 : index
    %131 = vector.load %arg8[%c0_42, %c50] : memref<8x128xf32, #tpu.memory_space<vmem>>, vector<8x5xf32>
    tpu.vector_store %arg8[%c0_42, %c50], %130 {strides = array<i32>} : memref<8x128xf32, #tpu.memory_space<vmem>>, vector<8x5xf32>,
    %132 = vector.extract_strided_slice %111 {offsets = [0, 5, 0], sizes = [8, 1, 5], strides = [1, 1, 1]} : vector<8x7x5xf32> to vector<8x1x5xf32>
    %133 = vector.shape_cast %132 : vector<8x1x5xf32> to vector<8x5xf32>
    %c0_43 = arith.constant 0 : index
    %c55 = arith.constant 55 : index
    %134 = vector.load %arg8[%c0_43, %c55] : memref<8x128xf32, #tpu.memory_space<vmem>>, vector<8x5xf32>
    tpu.vector_store %arg8[%c0_43, %c55], %133 {strides = array<i32>} : memref<8x128xf32, #tpu.memory_space<vmem>>, vector<8x5xf32>,
    %135 = vector.extract_strided_slice %111 {offsets = [0, 6, 0], sizes = [8, 1, 5], strides = [1, 1, 1]} : vector<8x7x5xf32> to vector<8x1x5xf32>
    %136 = vector.shape_cast %135 : vector<8x1x5xf32> to vector<8x5xf32>
    %c0_44 = arith.constant 0 : index
    %c60 = arith.constant 60 : index
    %137 = vector.load %arg8[%c0_44, %c60] : memref<8x128xf32, #tpu.memory_space<vmem>>, vector<8x5xf32>
    tpu.vector_store %arg8[%c0_44, %c60], %136 {strides = array<i32>} : memref<8x128xf32, #tpu.memory_space<vmem>>, vector<8x5xf32>,
    %cst_45 = arith.constant 0.000000e+00 : f32
    %138 = vector.broadcast %cst_45 : f32 to vector<8x63xf32>
    %c0_46 = arith.constant 0 : index
    %c65 = arith.constant 65 : index
    %139 = vector.load %arg8[%c0_46, %c65] : memref<8x128xf32, #tpu.memory_space<vmem>>, vector<8x63xf32>
    tpu.vector_store %arg8[%c0_46, %c65], %138 {strides = array<i32>} : memref<8x128xf32, #tpu.memory_space<vmem>>, vector<8x63xf32>,
    return
  }
  func.func @transform_0(%arg0: i32) -> (i32, i32, i32) {
    %c0_i32 = arith.constant 0 : i32
    %c0_i32_0 = arith.constant 0 : i32
    %c0_i32_1 = arith.constant 0 : i32
    return %arg0, %c0_i32, %c0_i32_0 : i32, i32, i32
  }
  func.func @transform_1(%arg0: i32) -> (i32, i32) {
    %c0_i32 = arith.constant 0 : i32
    %c0_i32_0 = arith.constant 0 : i32
    %c0_i32_1 = arith.constant 0 : i32
    return %c0_i32, %c0_i32_0 : i32, i32
  }
  func.func @transform_2(%arg0: i32) -> (i32, i32) {
    %c0_i32 = arith.constant 0 : i32
    %c0_i32_0 = arith.constant 0 : i32
    %c0_i32_1 = arith.constant 0 : i32
    return %c0_i32, %c0_i32_0 : i32, i32
  }
  func.func @transform_3(%arg0: i32) -> (i32, i32) {
    %c0_i32 = arith.constant 0 : i32
    %c0_i32_0 = arith.constant 0 : i32
    %c0_i32_1 = arith.constant 0 : i32
    return %c0_i32, %c0_i32_0 : i32, i32
  }
  func.func @transform_4(%arg0: i32) -> (i32, i32) {
    %c0_i32 = arith.constant 0 : i32
    %c0_i32_0 = arith.constant 0 : i32
    %c0_i32_1 = arith.constant 0 : i32
    return %c0_i32, %c0_i32_0 : i32, i32
  }
  func.func @transform_5(%arg0: i32) -> (i32, i32) {
    %c0_i32 = arith.constant 0 : i32
    %c0_i32_0 = arith.constant 0 : i32
    %c0_i32_1 = arith.constant 0 : i32
    return %c0_i32, %c0_i32_0 : i32, i32
  }
  func.func @transform_6(%arg0: i32) -> (i32, i32) {
    %c0_i32 = arith.constant 0 : i32
    %c0_i32_0 = arith.constant 0 : i32
    %c0_i32_1 = arith.constant 0 : i32
    return %c0_i32, %c0_i32_0 : i32, i32
  }
  func.func @transform_7(%arg0: i32) -> (i32, i32) {
    %c0_i32 = arith.constant 0 : i32
    %c0_i32_0 = arith.constant 0 : i32
    return %arg0, %c0_i32 : i32, i32
  }
}

</mosaic_0001>

<llo_original>
// kernel: resnet_transition_forward.1
$region0: #{resnet_transition_forward.1}
  #allocation0 [shape = 'u32[]', space=smem, size = 0x4, offset = 0x4, fixed_abs, tag = 'smem constant byte address 0x4 - core index']
  #allocation1 [shape = 'u32[72,128]{1,0:T(1,128)}', space=vmem, size = 0x9000, scoped, tag = 'internal scratch']
  %s0 = inlined_call_operand.vmem [shape: bf16[16,64,16], index: 0, kind: input, shape index: {}]
  %s1 = inlined_call_operand.vmem [shape: f32[64,24], index: 1, kind: input, shape index: {}]
  %s2 = inlined_call_operand.vmem [shape: f32[1,24], index: 2, kind: input, shape index: {}]
  %s3 = inlined_call_operand.vmem [shape: f32[24,1152], index: 3, kind: input, shape index: {}]
  %s4 = inlined_call_operand.vmem [shape: f32[1,1152], index: 4, kind: input, shape index: {}]
  %s5 = inlined_call_operand.vmem [shape: f32[5,3], index: 5, kind: input, shape index: {}]
  %s6 = inlined_call_operand.vmem [shape: f32[7,5], index: 6, kind: input, shape index: {}]
  %s7 = inlined_call_operand.vmem [shape: f32[16,128], index: 7, kind: output, shape index: {}]
  %s8 = sld [smem:[#allocation0]]
  $region61: #{resnet_transition_forward.1} parent=0
    _
  %s10 = ssub.s32 1, %s8
  %s11 = scalar_select 0, %s10, %s8
  loop: start=0, step=1, limit=4
  $region2: #{resnet_transition_forward.1} parent=0 // loop_pre_header
    _
  $region3: #{resnet_transition_forward.1} parent=0 // loop_header
    %s13 = sphi 0, %s17
    %p14 = scmp.ge.s32.totalorder %s13, 4
    %s23 = sphi 0, %s25
    %s26 = sphi 0, %s23
    %s27 = sphi 0, %s26
    %s43 = sphi 0, %s27
    %s47 = sphi 0, %s47
    %s49 = sphi 0, %s47
    %s50 = sphi 0, %s49
    %s64 = sphi 0, %s50
    %s68 = sphi 0, %s68
    %s70 = sphi 0, %s68
    %s71 = sphi 0, %s70
    %s85 = sphi 0, %s71
    %s89 = sphi 0, %s89
    %s91 = sphi 0, %s89
    %s92 = sphi 0, %s91
    %s106 = sphi 0, %s92
    %s110 = sphi 0, %s110
    %s112 = sphi 0, %s110
    %s113 = sphi 0, %s112
    %s127 = sphi 0, %s113
    %s131 = sphi 0, %s131
    %s133 = sphi 0, %s131
    %s134 = sphi 0, %s133
    %s148 = sphi 0, %s134
    %s152 = sphi 0, %s152
    %s154 = sphi 0, %s152
    %s155 = sphi 0, %s154
    %s169 = sphi 0, %s155
    %s175 = sphi 0, %s177
    %s178 = sphi 0, %s175
    %s179 = sphi 0, %s178
    %s195 = sphi 0, %s179
  $region4: #{resnet_transition_forward.1} parent=0 // loop_header_branch
    %16 = sbr.rel (%p14) target = $region8
  $region5: #{resnet_transition_forward.1} parent=0 // loop_body
    %s18 = ssub.s32 %s13, 1
    %s19 = ssub.s32 %s13, 2
    %s20 = sadd.s32 %s13, 1
    %s21 = ssub.s32 %s13, %s20
    %p22 = scmp.eq.s32.totalorder %s21, 0
    %s24 = sadd.s32 %s23, 1
    %s25 = scalar_select %p22, %s23, %s24
    %p28 = pneg %p22
    %p29 = scmp.eq.s32.totalorder %s13, 1
    %p30 = por %p28, %p29
    %p31 = scmp.ne.s32.totalorder %s23, %s26
    %p32 = scmp.eq.s32.totalorder %s13, 0
    %p33 = por %p31, %p32
    %p34 = scmp.ne.s32.totalorder %s23, %s26
    %p35 = scmp.eq.s32.totalorder %s18, 1
    %p36 = por %p34, %p35
    %p37 = scmp.ne.s32.totalorder %s26, %s27
    %p38 = scmp.eq.s32.totalorder %s18, 0
    %p39 = por %p37, %p38
    %p40 = scmp.ne.s32.totalorder %s26, %s27
    %p41 = scmp.eq.s32.totalorder %s19, 1
    %p42 = por %p40, %p41
    %p44 = scmp.ne.s32.totalorder %s27, %s43
    %p45 = scmp.eq.s32.totalorder %s19, 0
    %p46 = por %p44, %p45
    %s48 = sadd.s32 %s47, 1
    %p51 = scmp.eq.s32.totalorder %s13, 1
    %p52 = scmp.ne.s32.totalorder %s47, %s49
    %p53 = scmp.eq.s32.totalorder %s13, 0
    %p54 = por %p52, %p53
    %p55 = scmp.ne.s32.totalorder %s47, %s49
    %p56 = scmp.eq.s32.totalorder %s18, 1
    %p57 = por %p55, %p56
    %p58 = scmp.ne.s32.totalorder %s49, %s50
    %p59 = scmp.eq.s32.totalorder %s18, 0
    %p60 = por %p58, %p59
    %p61 = scmp.ne.s32.totalorder %s49, %s50
    %p62 = scmp.eq.s32.totalorder %s19, 1
    %p63 = por %p61, %p62
    %p65 = scmp.ne.s32.totalorder %s50, %s64
    %p66 = scmp.eq.s32.totalorder %s19, 0
    %p67 = por %p65, %p66
    %s69 = sadd.s32 %s68, 1
    %p72 = scmp.eq.s32.totalorder %s13, 1
    %p73 = scmp.ne.s32.totalorder %s68, %s70
    %p74 = scmp.eq.s32.totalorder %s13, 0
    %p75 = por %p73, %p74
    %p76 = scmp.ne.s32.totalorder %s68, %s70
    %p77 = scmp.eq.s32.totalorder %s18, 1
    %p78 = por %p76, %p77
    %p79 = scmp.ne.s32.totalorder %s70, %s71
    %p80 = scmp.eq.s32.totalorder %s18, 0
    %p81 = por %p79, %p80
    %p82 = scmp.ne.s32.totalorder %s70, %s71
    %p83 = scmp.eq.s32.totalorder %s19, 1
    %p84 = por %p82, %p83
    %p86 = scmp.ne.s32.totalorder %s71, %s85
    %p87 = scmp.eq.s32.totalorder %s19, 0
    %p88 = por %p86, %p87
    %s90 = sadd.s32 %s89, 1
    %p93 = scmp.eq.s32.totalorder %s13, 1
    %p94 = scmp.ne.s32.totalorder %s89, %s91
    %p95 = scmp.eq.s32.totalorder %s13, 0
    %p96 = por %p94, %p95
    %p97 = scmp.ne.s32.totalorder %s89, %s91
    %p98 = scmp.eq.s32.totalorder %s18, 1
    %p99 = por %p97, %p98
    %p100 = scmp.ne.s32.totalorder %s91, %s92
    %p101 = scmp.eq.s32.totalorder %s18, 0
    %p102 = por %p100, %p101
    %p103 = scmp.ne.s32.totalorder %s91, %s92
    %p104 = scmp.eq.s32.totalorder %s19, 1
    %p105 = por %p103, %p104
    %p107 = scmp.ne.s32.totalorder %s92, %s106
    %p108 = scmp.eq.s32.totalorder %s19, 0
    %p109 = por %p107, %p108
    %s111 = sadd.s32 %s110, 1
    %p114 = scmp.eq.s32.totalorder %s13, 1
    %p115 = scmp.ne.s32.totalorder %s110, %s112
    %p116 = scmp.eq.s32.totalorder %s13, 0
    %p117 = por %p115, %p116
    %p118 = scmp.ne.s32.totalorder %s110, %s112
    %p119 = scmp.eq.s32.totalorder %s18, 1
    %p120 = por %p118, %p119
    %p121 = scmp.ne.s32.totalorder %s112, %s113
    %p122 = scmp.eq.s32.totalorder %s18, 0
    %p123 = por %p121, %p122
    %p124 = scmp.ne.s32.totalorder %s112, %s113
    %p125 = scmp.eq.s32.totalorder %s19, 1
    %p126 = por %p124, %p125
    %p128 = scmp.ne.s32.totalorder %s113, %s127
    %p129 = scmp.eq.s32.totalorder %s19, 0
    %p130 = por %p128, %p129
    %s132 = sadd.s32 %s131, 1
    %p135 = scmp.eq.s32.totalorder %s13, 1
    %p136 = scmp.ne.s32.totalorder %s131, %s133
    %p137 = scmp.eq.s32.totalorder %s13, 0
    %p138 = por %p136, %p137
    %p139 = scmp.ne.s32.totalorder %s131, %s133
    %p140 = scmp.eq.s32.totalorder %s18, 1
    %p141 = por %p139, %p140
    %p142 = scmp.ne.s32.totalorder %s133, %s134
    %p143 = scmp.eq.s32.totalorder %s18, 0
    %p144 = por %p142, %p143
    %p145 = scmp.ne.s32.totalorder %s133, %s134
    %p146 = scmp.eq.s32.totalorder %s19, 1
    %p147 = por %p145, %p146
    %p149 = scmp.ne.s32.totalorder %s134, %s148
    %p150 = scmp.eq.s32.totalorder %s19, 0
    %p151 = por %p149, %p150
    %s153 = sadd.s32 %s152, 1
    %p156 = scmp.eq.s32.totalorder %s13, 1
    %p157 = scmp.ne.s32.totalorder %s152, %s154
    %p158 = scmp.eq.s32.totalorder %s13, 0
    %p159 = por %p157, %p158
    %p160 = scmp.ne.s32.totalorder %s152, %s154
    %p161 = scmp.eq.s32.totalorder %s18, 1
    %p162 = por %p160, %p161
    %p163 = scmp.ne.s32.totalorder %s154, %s155
    %p164 = scmp.eq.s32.totalorder %s18, 0
    %p165 = por %p163, %p164
    %p166 = scmp.ne.s32.totalorder %s154, %s155
    %p167 = scmp.eq.s32.totalorder %s19, 1
    %p168 = por %p166, %p167
    %p170 = scmp.ne.s32.totalorder %s155, %s169
    %p171 = scmp.eq.s32.totalorder %s19, 0
    %p172 = por %p170, %p171
    %s173 = ssub.s32 %s13, %s20
    %p174 = scmp.eq.s32.totalorder %s173, 0
    %s176 = sadd.s32 %s175, 1
    %s177 = scalar_select %p174, %s175, %s176
    %p180 = pneg %p174
    %p181 = scmp.eq.s32.totalorder %s13, 1
    %p182 = por %p180, %p181
    %p183 = scmp.ne.s32.totalorder %s175, %s178
    %p184 = scmp.eq.s32.totalorder %s13, 0
    %p185 = por %p183, %p184
    %p186 = scmp.ne.s32.totalorder %s175, %s178
    %p187 = scmp.eq.s32.totalorder %s18, 1
    %p188 = por %p186, %p187
    %p189 = scmp.ne.s32.totalorder %s178, %s179
    %p190 = scmp.eq.s32.totalorder %s18, 0
    %p191 = por %p189, %p190
    %p192 = scmp.ne.s32.totalorder %s178, %s179
    %p193 = scmp.eq.s32.totalorder %s19, 1
    %p194 = por %p192, %p193
    %p196 = scmp.ne.s32.totalorder %s179, %s195
    %p197 = scmp.eq.s32.totalorder %s19, 0
    %p198 = por %p196, %p197
    %p199 = scmp.le.s32.totalorder 1, %s13
    %p200 = scmp.lt.s32.totalorder %s13, 3
    %p201 = pnand %p199, %p200
    %p202 = pneg %p201
    // Predicated region
    $region9: #{resnet_transition_forward.1} parent=5 // pred_check
      _
    $region10: #{resnet_transition_forward.1} parent=5 // pred_check_branch
      %204 = sbr.rel (%p201) target = $region12
    $region11: #{resnet_transition_forward.1} parent=5 // pred_region
      %s205 = ssub.s32 %s13, 1
      // Predicated region
      $region13: #{resnet_transition_forward.1} parent=11 // pred_check
        %p206 = pneg %p60
      $region14: #{resnet_transition_forward.1} parent=11 // pred_check_branch
        %208 = sbr.rel (%p206) target = $region16
      $region15: #{resnet_transition_forward.1} parent=11 // pred_region
        _
      $region16: #{resnet_transition_forward.1} parent=11 // pred_fallthru
        _
      // Predicated region
      $region17: #{resnet_transition_forward.1} parent=11 // pred_check
        %p209 = pneg %p81
      $region18: #{resnet_transition_forward.1} parent=11 // pred_check_branch
        %211 = sbr.rel (%p209) target = $region20
      $region19: #{resnet_transition_forward.1} parent=11 // pred_region
        _
      $region20: #{resnet_transition_forward.1} parent=11 // pred_fallthru
        _
      // Predicated region
      $region21: #{resnet_transition_forward.1} parent=11 // pred_check
        %p212 = pneg %p102
      $region22: #{resnet_transition_forward.1} parent=11 // pred_check_branch
        %214 = sbr.rel (%p212) target = $region24
      $region23: #{resnet_transition_forward.1} parent=11 // pred_region
        _
      $region24: #{resnet_transition_forward.1} parent=11 // pred_fallthru
        _
      // Predicated region
      $region25: #{resnet_transition_forward.1} parent=11 // pred_check
        %p215 = pneg %p123
      $region26: #{resnet_transition_forward.1} parent=11 // pred_check_branch
        %217 = sbr.rel (%p215) target = $region28
      $region27: #{resnet_transition_forward.1} parent=11 // pred_region
        _
      $region28: #{resnet_transition_forward.1} parent=11 // pred_fallthru
        _
      // Predicated region
      $region29: #{resnet_transition_forward.1} parent=11 // pred_check
        %p218 = pneg %p144
      $region30: #{resnet_transition_forward.1} parent=11 // pred_check_branch
        %220 = sbr.rel (%p218) target = $region32
      $region31: #{resnet_transition_forward.1} parent=11 // pred_region
        _
      $region32: #{resnet_transition_forward.1} parent=11 // pred_fallthru
        _
      // Predicated region
      $region33: #{resnet_transition_forward.1} parent=11 // pred_check
        %p221 = pneg %p165
      $region34: #{resnet_transition_forward.1} parent=11 // pred_check_branch
        %223 = sbr.rel (%p221) target = $region36
      $region35: #{resnet_transition_forward.1} parent=11 // pred_region
        _
      $region36: #{resnet_transition_forward.1} parent=11 // pred_fallthru
        _
    $region12: #{resnet_transition_forward.1} parent=5 // pred_fallthru
      _
    %p224 = scmp.lt.s32.totalorder %s13, 2
    // Predicated region
    $region37: #{resnet_transition_forward.1} parent=5 // pred_check
      %p225 = pneg %p224
    $region38: #{resnet_transition_forward.1} parent=5 // pred_check_branch
      %227 = sbr.rel (%p225) target = $region40
    $region39: #{resnet_transition_forward.1} parent=5 // pred_region
      // Predicated region
      $region41: #{resnet_transition_forward.1} parent=39 // pred_check
        %p228 = pneg %p33
      $region42: #{resnet_transition_forward.1} parent=39 // pred_check_branch
        %230 = sbr.rel (%p228) target = $region44
      $region43: #{resnet_transition_forward.1} parent=39 // pred_region
        %s231 = smul.u32 8, %s13
        %p232 = scmp.lt.s32.totalorder %s231, 15
        %s233 = scalar_select %p232, %s231, 15
        %s234 = smul.addr %s233, 8
        %s235 = smul.addr %s234, 4
        %s236 = scalar_lea.vmem %s0, %s235
        %s237 = smul.u32 8, %s13
      $region44: #{resnet_transition_forward.1} parent=39 // pred_fallthru
        _
    $region40: #{resnet_transition_forward.1} parent=5 // pred_fallthru
      _
    %p238 = scmp.le.s32.totalorder 1, %s13
    %p239 = scmp.lt.s32.totalorder %s13, 3
    %p240 = pnand %p238, %p239
    %p241 = pneg %p240
    // Predicated region
    $region45: #{resnet_transition_forward.1} parent=5 // pred_check
      _
    $region46: #{resnet_transition_forward.1} parent=5 // pred_check_branch
      %243 = sbr.rel (%p240) target = $region48
    $region47: #{resnet_transition_forward.1} parent=5 // pred_region
      %s244 = ssub.s32 %s13, 1
      %s245 = smul.u32 8, %s18
      %p246 = scmp.lt.s32.totalorder %s245, 15
      %s247 = scalar_select %p246, %s245, 15
      %s248 = smul.addr %s247, 8
      %s249 = smul.addr %s248, 4
      %s250 = scalar_lea.vmem %s0, %s249
      %p251 = pneg %p39
      %p252 = pneg %p36
      %p253 = pneg %p60
      %p254 = pneg %p57
      %p255 = pneg %p81
      %p256 = pneg %p78
      %p257 = pneg %p102
      %p258 = pneg %p99
      %p259 = pneg %p123
      %p260 = pneg %p120
      %p261 = pneg %p144
      %p262 = pneg %p141
      %p263 = pneg %p165
      %p264 = pneg %p162
      %p265 = pneg %p191
      %p266 = pneg %p188
      %p267 = scmp.lt.s32.totalorder %s18, 1
      %s268 = scalar_select %p267, %s18, 1
      %s269 = smul.addr %s268, 8
      %s270 = scalar_lea.vmem %s7, %s269
      %s271 = smul.u32 8, %s18
      %p272 = scmp.lt.s32.totalorder %s271, 15
      %s273 = scalar_select %p272, %s271, 15
      %s274 = smul.addr %s273, 8
      %s275 = smul.addr %s274, 4
      %s276 = scalar_lea.vmem %s0, %s275
      %s277 = smul.u32 8, %s18
      %p278 = scmp.lt.s32.totalorder %s18, 1
      %s279 = scalar_select %p278, %s18, 1
      %s280 = smul.addr %s279, 8
      %s281 = scalar_lea.vmem %s7, %s280
      %v282 = vld [vmem:[%s276] sm:$0xf]
      %v283 = vld [vmem:[%s276 + $0x4] sm:$0xf]
      %v284 = vld [vmem:[%s276 + $0x8] sm:$0xf]
      %v285 = vld [vmem:[%s276 + $0xc] sm:$0xf]
      %v286 = vld [vmem:[%s276 + $0x10] sm:$0xf]
      %v287 = vld [vmem:[%s276 + $0x14] sm:$0xf]
      %v288 = vld [vmem:[%s276 + $0x18] sm:$0xf]
      %v289 = vld [vmem:[%s276 + $0x1c] sm:$0xf]
      %v290 = vld [vmem:[%s276 + $0x20] sm:$0xf]
      %v291 = vld [vmem:[%s276 + $0x24] sm:$0xf]
      %v292 = vld [vmem:[%s276 + $0x28] sm:$0xf]
      %v293 = vld [vmem:[%s276 + $0x2c] sm:$0xf]
      %v294 = vld [vmem:[%s276 + $0x30] sm:$0xf]
      %v295 = vld [vmem:[%s276 + $0x34] sm:$0xf]
      %v296 = vld [vmem:[%s276 + $0x38] sm:$0xf]
      %v297 = vld [vmem:[%s276 + $0x3c] sm:$0xf]
      %v298 = vld [vmem:[%s276 + $0x40] sm:$0xf]
      %v299 = vld [vmem:[%s276 + $0x44] sm:$0xf]
      %v300 = vld [vmem:[%s276 + $0x48] sm:$0xf]
      %v301 = vld [vmem:[%s276 + $0x4c] sm:$0xf]
      %v302 = vld [vmem:[%s276 + $0x50] sm:$0xf]
      %v303 = vld [vmem:[%s276 + $0x54] sm:$0xf]
      %v304 = vld [vmem:[%s276 + $0x58] sm:$0xf]
      %v305 = vld [vmem:[%s276 + $0x5c] sm:$0xf]
      %v306 = vld [vmem:[%s276 + $0x60] sm:$0xf]
      %v307 = vld [vmem:[%s276 + $0x64] sm:$0xf]
      %v308 = vld [vmem:[%s276 + $0x68] sm:$0xf]
      %v309 = vld [vmem:[%s276 + $0x6c] sm:$0xf]
      %v310 = vld [vmem:[%s276 + $0x70] sm:$0xf]
      %v311 = vld [vmem:[%s276 + $0x74] sm:$0xf]
      %v312 = vld [vmem:[%s276 + $0x78] sm:$0xf]
      %v313 = vld [vmem:[%s276 + $0x7c] sm:$0xf]
      %v314 = vld [vmem:[%s276 + $0x80] sm:$0xf]
      %v315 = vld [vmem:[%s276 + $0x84] sm:$0xf]
      %v316 = vld [vmem:[%s276 + $0x88] sm:$0xf]
      %v317 = vld [vmem:[%s276 + $0x8c] sm:$0xf]
      %v318 = vld [vmem:[%s276 + $0x90] sm:$0xf]
      %v319 = vld [vmem:[%s276 + $0x94] sm:$0xf]
      %v320 = vld [vmem:[%s276 + $0x98] sm:$0xf]
      %v321 = vld [vmem:[%s276 + $0x9c] sm:$0xf]
      %v322 = vld [vmem:[%s276 + $0xa0] sm:$0xf]
      %v323 = vld [vmem:[%s276 + $0xa4] sm:$0xf]
      %v324 = vld [vmem:[%s276 + $0xa8] sm:$0xf]
      %v325 = vld [vmem:[%s276 + $0xac] sm:$0xf]
      %v326 = vld [vmem:[%s276 + $0xb0] sm:$0xf]
      %v327 = vld [vmem:[%s276 + $0xb4] sm:$0xf]
      %v328 = vld [vmem:[%s276 + $0xb8] sm:$0xf]
      %v329 = vld [vmem:[%s276 + $0xbc] sm:$0xf]
      %v330 = vld [vmem:[%s276 + $0xc0] sm:$0xf]
      %v331 = vld [vmem:[%s276 + $0xc4] sm:$0xf]
      %v332 = vld [vmem:[%s276 + $0xc8] sm:$0xf]
      %v333 = vld [vmem:[%s276 + $0xcc] sm:$0xf]
      %v334 = vld [vmem:[%s276 + $0xd0] sm:$0xf]
      %v335 = vld [vmem:[%s276 + $0xd4] sm:$0xf]
      %v336 = vld [vmem:[%s276 + $0xd8] sm:$0xf]
      %v337 = vld [vmem:[%s276 + $0xdc] sm:$0xf]
      %v338 = vld [vmem:[%s276 + $0xe0] sm:$0xf]
      %v339 = vld [vmem:[%s276 + $0xe4] sm:$0xf]
      %v340 = vld [vmem:[%s276 + $0xe8] sm:$0xf]
      %v341 = vld [vmem:[%s276 + $0xec] sm:$0xf]
      %v342 = vld [vmem:[%s276 + $0xf0] sm:$0xf]
      %v343 = vld [vmem:[%s276 + $0xf4] sm:$0xf]
      %v344 = vld [vmem:[%s276 + $0xf8] sm:$0xf]
      %v345 = vld [vmem:[%s276 + $0xfc] sm:$0xf]
      %v346 = vunpack.c.l.bf16 %v282
      %v347 = vunpack.c.l.bf16 %v283
      %v348 = vunpack.c.l.bf16 %v284
      %v349 = vunpack.c.l.bf16 %v285
      %v350 = vunpack.c.l.bf16 %v286
      %v351 = vunpack.c.l.bf16 %v287
      %v352 = vunpack.c.l.bf16 %v288
      %v353 = vunpack.c.l.bf16 %v289
      %v354 = vunpack.c.l.bf16 %v290
      %v355 = vunpack.c.l.bf16 %v291
      %v356 = vunpack.c.l.bf16 %v292
      %v357 = vunpack.c.l.bf16 %v293
      %v358 = vunpack.c.l.bf16 %v294
      %v359 = vunpack.c.l.bf16 %v295
      %v360 = vunpack.c.l.bf16 %v296
      %v361 = vunpack.c.l.bf16 %v297
      %v362 = vunpack.c.l.bf16 %v298
      %v363 = vunpack.c.l.bf16 %v299
      %v364 = vunpack.c.l.bf16 %v300
      %v365 = vunpack.c.l.bf16 %v301
      %v366 = vunpack.c.l.bf16 %v302
      %v367 = vunpack.c.l.bf16 %v303
      %v368 = vunpack.c.l.bf16 %v304
      %v369 = vunpack.c.l.bf16 %v305
      %v370 = vunpack.c.l.bf16 %v306
      %v371 = vunpack.c.l.bf16 %v307
      %v372 = vunpack.c.l.bf16 %v308
      %v373 = vunpack.c.l.bf16 %v309
      %v374 = vunpack.c.l.bf16 %v310
      %v375 = vunpack.c.l.bf16 %v311
      %v376 = vunpack.c.l.bf16 %v312
      %v377 = vunpack.c.l.bf16 %v313
      %v378 = vunpack.c.l.bf16 %v314
      %v379 = vunpack.c.l.bf16 %v315
      %v380 = vunpack.c.l.bf16 %v316
      %v381 = vunpack.c.l.bf16 %v317
      %v382 = vunpack.c.l.bf16 %v318
      %v383 = vunpack.c.l.bf16 %v319
      %v384 = vunpack.c.l.bf16 %v320
      %v385 = vunpack.c.l.bf16 %v321
      %v386 = vunpack.c.l.bf16 %v322
      %v387 = vunpack.c.l.bf16 %v323
      %v388 = vunpack.c.l.bf16 %v324
      %v389 = vunpack.c.l.bf16 %v325
      %v390 = vunpack.c.l.bf16 %v326
      %v391 = vunpack.c.l.bf16 %v327
      %v392 = vunpack.c.l.bf16 %v328
      %v393 = vunpack.c.l.bf16 %v329
      %v394 = vunpack.c.l.bf16 %v330
      %v395 = vunpack.c.l.bf16 %v331
      %v396 = vunpack.c.l.bf16 %v332
      %v397 = vunpack.c.l.bf16 %v333
      %v398 = vunpack.c.l.bf16 %v334
      %v399 = vunpack.c.l.bf16 %v335
      %v400 = vunpack.c.l.bf16 %v336
      %v401 = vunpack.c.l.bf16 %v337
      %v402 = vunpack.c.l.bf16 %v338
      %v403 = vunpack.c.l.bf16 %v339
      %v404 = vunpack.c.l.bf16 %v340
      %v405 = vunpack.c.l.bf16 %v341
      %v406 = vunpack.c.l.bf16 %v342
      %v407 = vunpack.c.l.bf16 %v343
      %v408 = vunpack.c.l.bf16 %v344
      %v409 = vunpack.c.l.bf16 %v345
      %vm410 = vcmask 130048
      %v411 = vsel %vm410, %v346, 0.0
      %412 = vadd.xlane.f32.xlu0 %v411
      %v413 = vpop.xlane.xlu0 %412
      %v414 = vsel %vm410, %v347, 0.0
      %415 = vadd.xlane.f32.xlu0 %v414
      %v416 = vpop.xlane.xlu0 %415
      %v417 = vsel %vm410, %v348, 0.0
      %418 = vadd.xlane.f32.xlu0 %v417
      %v419 = vpop.xlane.xlu0 %418
      %v420 = vsel %vm410, %v349, 0.0
      %421 = vadd.xlane.f32.xlu0 %v420
      %v422 = vpop.xlane.xlu0 %421
      %v423 = vsel %vm410, %v350, 0.0
      %424 = vadd.xlane.f32.xlu0 %v423
      %v425 = vpop.xlane.xlu0 %424
      %v426 = vsel %vm410, %v351, 0.0
      %427 = vadd.xlane.f32.xlu0 %v426
      %v428 = vpop.xlane.xlu0 %427
      %v429 = vsel %vm410, %v352, 0.0
      %430 = vadd.xlane.f32.xlu0 %v429
      %v431 = vpop.xlane.xlu0 %430
      %v432 = vsel %vm410, %v353, 0.0
      %433 = vadd.xlane.f32.xlu0 %v432
      %v434 = vpop.xlane.xlu0 %433
      %v435 = vsel %vm410, %v354, 0.0
      %436 = vadd.xlane.f32.xlu0 %v435
      %v437 = vpop.xlane.xlu0 %436
      %v438 = vsel %vm410, %v355, 0.0
      %439 = vadd.xlane.f32.xlu0 %v438
      %v440 = vpop.xlane.xlu0 %439
      %v441 = vsel %vm410, %v356, 0.0
      %442 = vadd.xlane.f32.xlu0 %v441
      %v443 = vpop.xlane.xlu0 %442
      %v444 = vsel %vm410, %v357, 0.0
      %445 = vadd.xlane.f32.xlu0 %v444
      %v446 = vpop.xlane.xlu0 %445
      %v447 = vsel %vm410, %v358, 0.0
      %448 = vadd.xlane.f32.xlu0 %v447
      %v449 = vpop.xlane.xlu0 %448
      %v450 = vsel %vm410, %v359, 0.0
      %451 = vadd.xlane.f32.xlu0 %v450
      %v452 = vpop.xlane.xlu0 %451
      %v453 = vsel %vm410, %v360, 0.0
      %454 = vadd.xlane.f32.xlu0 %v453
      %v455 = vpop.xlane.xlu0 %454
      %v456 = vsel %vm410, %v361, 0.0
      %457 = vadd.xlane.f32.xlu0 %v456
      %v458 = vpop.xlane.xlu0 %457
      %v459 = vsel %vm410, %v362, 0.0
      %460 = vadd.xlane.f32.xlu0 %v459
      %v461 = vpop.xlane.xlu0 %460
      %v462 = vsel %vm410, %v363, 0.0
      %463 = vadd.xlane.f32.xlu0 %v462
      %v464 = vpop.xlane.xlu0 %463
      %v465 = vsel %vm410, %v364, 0.0
      %466 = vadd.xlane.f32.xlu0 %v465
      %v467 = vpop.xlane.xlu0 %466
      %v468 = vsel %vm410, %v365, 0.0
      %469 = vadd.xlane.f32.xlu0 %v468
      %v470 = vpop.xlane.xlu0 %469
      %v471 = vsel %vm410, %v366, 0.0
      %472 = vadd.xlane.f32.xlu0 %v471
      %v473 = vpop.xlane.xlu0 %472
      %v474 = vsel %vm410, %v367, 0.0
      %475 = vadd.xlane.f32.xlu0 %v474
      %v476 = vpop.xlane.xlu0 %475
      %v477 = vsel %vm410, %v368, 0.0
      %478 = vadd.xlane.f32.xlu0 %v477
      %v479 = vpop.xlane.xlu0 %478
      %v480 = vsel %vm410, %v369, 0.0
      %481 = vadd.xlane.f32.xlu0 %v480
      %v482 = vpop.xlane.xlu0 %481
      %v483 = vsel %vm410, %v370, 0.0
      %484 = vadd.xlane.f32.xlu0 %v483
      %v485 = vpop.xlane.xlu0 %484
      %v486 = vsel %vm410, %v371, 0.0
      %487 = vadd.xlane.f32.xlu0 %v486
      %v488 = vpop.xlane.xlu0 %487
      %v489 = vsel %vm410, %v372, 0.0
      %490 = vadd.xlane.f32.xlu0 %v489
      %v491 = vpop.xlane.xlu0 %490
      %v492 = vsel %vm410, %v373, 0.0
      %493 = vadd.xlane.f32.xlu0 %v492
      %v494 = vpop.xlane.xlu0 %493
      %v495 = vsel %vm410, %v374, 0.0
      %496 = vadd.xlane.f32.xlu0 %v495
      %v497 = vpop.xlane.xlu0 %496
      %v498 = vsel %vm410, %v375, 0.0
      %499 = vadd.xlane.f32.xlu0 %v498
      %v500 = vpop.xlane.xlu0 %499
      %v501 = vsel %vm410, %v376, 0.0
      %502 = vadd.xlane.f32.xlu0 %v501
      %v503 = vpop.xlane.xlu0 %502
      %v504 = vsel %vm410, %v377, 0.0
      %505 = vadd.xlane.f32.xlu0 %v504
      %v506 = vpop.xlane.xlu0 %505
      %v507 = vsel %vm410, %v378, 0.0
      %508 = vadd.xlane.f32.xlu0 %v507
      %v509 = vpop.xlane.xlu0 %508
      %v510 = vsel %vm410, %v379, 0.0
      %511 = vadd.xlane.f32.xlu0 %v510
      %v512 = vpop.xlane.xlu0 %511
      %v513 = vsel %vm410, %v380, 0.0
      %514 = vadd.xlane.f32.xlu0 %v513
      %v515 = vpop.xlane.xlu0 %514
      %v516 = vsel %vm410, %v381, 0.0
      %517 = vadd.xlane.f32.xlu0 %v516
      %v518 = vpop.xlane.xlu0 %517
      %v519 = vsel %vm410, %v382, 0.0
      %520 = vadd.xlane.f32.xlu0 %v519
      %v521 = vpop.xlane.xlu0 %520
      %v522 = vsel %vm410, %v383, 0.0
      %523 = vadd.xlane.f32.xlu0 %v522
      %v524 = vpop.xlane.xlu0 %523
      %v525 = vsel %vm410, %v384, 0.0
      %526 = vadd.xlane.f32.xlu0 %v525
      %v527 = vpop.xlane.xlu0 %526
      %v528 = vsel %vm410, %v385, 0.0
      %529 = vadd.xlane.f32.xlu0 %v528
      %v530 = vpop.xlane.xlu0 %529
      %v531 = vsel %vm410, %v386, 0.0
      %532 = vadd.xlane.f32.xlu0 %v531
      %v533 = vpop.xlane.xlu0 %532
      %v534 = vsel %vm410, %v387, 0.0
      %535 = vadd.xlane.f32.xlu0 %v534
      %v536 = vpop.xlane.xlu0 %535
      %v537 = vsel %vm410, %v388, 0.0
      %538 = vadd.xlane.f32.xlu0 %v537
      %v539 = vpop.xlane.xlu0 %538
      %v540 = vsel %vm410, %v389, 0.0
      %541 = vadd.xlane.f32.xlu0 %v540
      %v542 = vpop.xlane.xlu0 %541
      %v543 = vsel %vm410, %v390, 0.0
      %544 = vadd.xlane.f32.xlu0 %v543
      %v545 = vpop.xlane.xlu0 %544
      %v546 = vsel %vm410, %v391, 0.0
      %547 = vadd.xlane.f32.xlu0 %v546
      %v548 = vpop.xlane.xlu0 %547
      %v549 = vsel %vm410, %v392, 0.0
      %550 = vadd.xlane.f32.xlu0 %v549
      %v551 = vpop.xlane.xlu0 %550
      %v552 = vsel %vm410, %v393, 0.0
      %553 = vadd.xlane.f32.xlu0 %v552
      %v554 = vpop.xlane.xlu0 %553
      %v555 = vsel %vm410, %v394, 0.0
      %556 = vadd.xlane.f32.xlu0 %v555
      %v557 = vpop.xlane.xlu0 %556
      %v558 = vsel %vm410, %v395, 0.0
      %559 = vadd.xlane.f32.xlu0 %v558
      %v560 = vpop.xlane.xlu0 %559
      %v561 = vsel %vm410, %v396, 0.0
      %562 = vadd.xlane.f32.xlu0 %v561
      %v563 = vpop.xlane.xlu0 %562
      %v564 = vsel %vm410, %v397, 0.0
      %565 = vadd.xlane.f32.xlu0 %v564
      %v566 = vpop.xlane.xlu0 %565
      %v567 = vsel %vm410, %v398, 0.0
      %568 = vadd.xlane.f32.xlu0 %v567
      %v569 = vpop.xlane.xlu0 %568
      %v570 = vsel %vm410, %v399, 0.0
      %571 = vadd.xlane.f32.xlu0 %v570
      %v572 = vpop.xlane.xlu0 %571
      %v573 = vsel %vm410, %v400, 0.0
      %574 = vadd.xlane.f32.xlu0 %v573
      %v575 = vpop.xlane.xlu0 %574
      %v576 = vsel %vm410, %v401, 0.0
      %577 = vadd.xlane.f32.xlu0 %v576
      %v578 = vpop.xlane.xlu0 %577
      %v579 = vsel %vm410, %v402, 0.0
      %580 = vadd.xlane.f32.xlu0 %v579
      %v581 = vpop.xlane.xlu0 %580
      %v582 = vsel %vm410, %v403, 0.0
      %583 = vadd.xlane.f32.xlu0 %v582
      %v584 = vpop.xlane.xlu0 %583
      %v585 = vsel %vm410, %v404, 0.0
      %586 = vadd.xlane.f32.xlu0 %v585
      %v587 = vpop.xlane.xlu0 %586
      %v588 = vsel %vm410, %v405, 0.0
      %589 = vadd.xlane.f32.xlu0 %v588
      %v590 = vpop.xlane.xlu0 %589
      %v591 = vsel %vm410, %v406, 0.0
      %592 = vadd.xlane.f32.xlu0 %v591
      %v593 = vpop.xlane.xlu0 %592
      %v594 = vsel %vm410, %v407, 0.0
      %595 = vadd.xlane.f32.xlu0 %v594
      %v596 = vpop.xlane.xlu0 %595
      %v597 = vsel %vm410, %v408, 0.0
      %598 = vadd.xlane.f32.xlu0 %v597
      %v599 = vpop.xlane.xlu0 %598
      %v600 = vsel %vm410, %v409, 0.0
      %601 = vadd.xlane.f32.xlu0 %v600
      %v602 = vpop.xlane.xlu0 %601
      %v603 = vld [vmem:[%s1] sm:$0xff]
      %v604 = vld [vmem:[%s1 + $0x8] sm:$0xff]
      %v605 = vld [vmem:[%s1 + $0x10] sm:$0xff]
      %v606 = vld [vmem:[%s1 + $0x18] sm:$0xff]
      %v607 = vld [vmem:[%s1 + $0x20] sm:$0xff]
      %v608 = vld [vmem:[%s1 + $0x28] sm:$0xff]
      %v609 = vld [vmem:[%s1 + $0x30] sm:$0xff]
      %v610 = vld [vmem:[%s1 + $0x38] sm:$0xff]
      %v611 = vld [vmem:[%s2] sm:$0x1]
      %v613 = vperm.slane %v611, 0
      %v679 = vlaneseq
      %v680 = vand.u32 %v679, 127
      %v681 = vperm.slane %v413, %v680
      %v682 = vadd.s32 %v680, 4294967288
      %v683 = vperm.slane %v416, %v682
      %vm684 = vcmask 130112
      %v685 = vsel %vm684, %v683, %v681
      %v686 = vadd.s32 %v680, 4294967280
      %v687 = vperm.slane %v419, %v686
      %vm688 = vcmask 195712
      %v689 = vsel %vm688, %v687, %v685
      %v690 = vadd.s32 %v680, 4294967272
      %v691 = vperm.slane %v422, %v690
      %vm692 = vcmask 261312
      %v693 = vsel %vm692, %v691, %v689
      %v694 = vadd.s32 %v680, 4294967264
      %v695 = vperm.slane %v425, %v694
      %vm696 = vcmask 326912
      %v697 = vsel %vm696, %v695, %v693
      %v698 = vadd.s32 %v680, 4294967256
      %v699 = vperm.slane %v428, %v698
      %vm700 = vcmask 392512
      %v701 = vsel %vm700, %v699, %v697
      %v702 = vadd.s32 %v680, 4294967248
      %v703 = vperm.slane %v431, %v702
      %vm704 = vcmask 458112
      %v705 = vsel %vm704, %v703, %v701
      %v706 = vadd.s32 %v680, 4294967240
      %v707 = vperm.slane %v434, %v706
      %vm708 = vcmask 523712
      %v709 = vsel %vm708, %v707, %v705
      %v710 = vperm.slane %v437, %v680
      %v711 = vperm.slane %v440, %v682
      %v712 = vsel %vm684, %v711, %v710
      %v713 = vperm.slane %v443, %v686
      %v714 = vsel %vm688, %v713, %v712
      %v715 = vperm.slane %v446, %v690
      %v716 = vsel %vm692, %v715, %v714
      %v717 = vperm.slane %v449, %v694
      %v718 = vsel %vm696, %v717, %v716
      %v719 = vperm.slane %v452, %v698
      %v720 = vsel %vm700, %v719, %v718
      %v721 = vperm.slane %v455, %v702
      %v722 = vsel %vm704, %v721, %v720
      %v723 = vperm.slane %v458, %v706
      %v724 = vsel %vm708, %v723, %v722
      %v725 = vperm.slane %v461, %v680
      %v726 = vperm.slane %v464, %v682
      %v727 = vsel %vm684, %v726, %v725
      %v728 = vperm.slane %v467, %v686
      %v729 = vsel %vm688, %v728, %v727
      %v730 = vperm.slane %v470, %v690
      %v731 = vsel %vm692, %v730, %v729
      %v732 = vperm.slane %v473, %v694
      %v733 = vsel %vm696, %v732, %v731
      %v734 = vperm.slane %v476, %v698
      %v735 = vsel %vm700, %v734, %v733
      %v736 = vperm.slane %v479, %v702
      %v737 = vsel %vm704, %v736, %v735
      %v738 = vperm.slane %v482, %v706
      %v739 = vsel %vm708, %v738, %v737
      %v740 = vperm.slane %v485, %v680
      %v741 = vperm.slane %v488, %v682
      %v742 = vsel %vm684, %v741, %v740
      %v743 = vperm.slane %v491, %v686
      %v744 = vsel %vm688, %v743, %v742
      %v745 = vperm.slane %v494, %v690
      %v746 = vsel %vm692, %v745, %v744
      %v747 = vperm.slane %v497, %v694
      %v748 = vsel %vm696, %v747, %v746
      %v749 = vperm.slane %v500, %v698
      %v750 = vsel %vm700, %v749, %v748
      %v751 = vperm.slane %v503, %v702
      %v752 = vsel %vm704, %v751, %v750
      %v753 = vperm.slane %v506, %v706
      %v754 = vsel %vm708, %v753, %v752
      %v755 = vperm.slane %v509, %v680
      %v756 = vperm.slane %v512, %v682
      %v757 = vsel %vm684, %v756, %v755
      %v758 = vperm.slane %v515, %v686
      %v759 = vsel %vm688, %v758, %v757
      %v760 = vperm.slane %v518, %v690
      %v761 = vsel %vm692, %v760, %v759
      %v762 = vperm.slane %v521, %v694
      %v763 = vsel %vm696, %v762, %v761
      %v764 = vperm.slane %v524, %v698
      %v765 = vsel %vm700, %v764, %v763
      %v766 = vperm.slane %v527, %v702
      %v767 = vsel %vm704, %v766, %v765
      %v768 = vperm.slane %v530, %v706
      %v769 = vsel %vm708, %v768, %v767
      %v770 = vperm.slane %v533, %v680
      %v771 = vperm.slane %v536, %v682
      %v772 = vsel %vm684, %v771, %v770
      %v773 = vperm.slane %v539, %v686
      %v774 = vsel %vm688, %v773, %v772
      %v775 = vperm.slane %v542, %v690
      %v776 = vsel %vm692, %v775, %v774
      %v777 = vperm.slane %v545, %v694
      %v778 = vsel %vm696, %v777, %v776
      %v779 = vperm.slane %v548, %v698
      %v780 = vsel %vm700, %v779, %v778
      %v781 = vperm.slane %v551, %v702
      %v782 = vsel %vm704, %v781, %v780
      %v783 = vperm.slane %v554, %v706
      %v784 = vsel %vm708, %v783, %v782
      %v785 = vperm.slane %v557, %v680
      %v786 = vperm.slane %v560, %v682
      %v787 = vsel %vm684, %v786, %v785
      %v788 = vperm.slane %v563, %v686
      %v789 = vsel %vm688, %v788, %v787
      %v790 = vperm.slane %v566, %v690
      %v791 = vsel %vm692, %v790, %v789
      %v792 = vperm.slane %v569, %v694
      %v793 = vsel %vm696, %v792, %v791
      %v794 = vperm.slane %v572, %v698
      %v795 = vsel %vm700, %v794, %v793
      %v796 = vperm.slane %v575, %v702
      %v797 = vsel %vm704, %v796, %v795
      %v798 = vperm.slane %v578, %v706
      %v799 = vsel %vm708, %v798, %v797
      %v800 = vperm.slane %v581, %v680
      %v801 = vperm.slane %v584, %v682
      %v802 = vsel %vm684, %v801, %v800
      %v803 = vperm.slane %v587, %v686
      %v804 = vsel %vm688, %v803, %v802
      %v805 = vperm.slane %v590, %v690
      %v806 = vsel %vm692, %v805, %v804
      %v807 = vperm.slane %v593, %v694
      %v808 = vsel %vm696, %v807, %v806
      %v809 = vperm.slane %v596, %v698
      %v810 = vsel %vm700, %v809, %v808
      %v811 = vperm.slane %v599, %v702
      %v812 = vsel %vm704, %v811, %v810
      %v813 = vperm.slane %v602, %v706
      %v814 = vsel %vm708, %v813, %v812
      %vm815 = vcmask 1041409
      %v816 = vsel %vm815, %v724, %v709
      %vm817 = vcmask 1042434
      %v818 = vsel %vm817, %v739, %v816
      %vm819 = vcmask 1043459
      %v820 = vsel %vm819, %v754, %v818
      %vm821 = vcmask 1044484
      %v822 = vsel %vm821, %v769, %v820
      %vm823 = vcmask 1045509
      %v824 = vsel %vm823, %v784, %v822
      %vm825 = vcmask 1046534
      %v826 = vsel %vm825, %v799, %v824
      %vm827 = vcmask 1047559
      %v828 = vsel %vm827, %v814, %v826
      %vm829 = vcmask 523264
      %v830 = vsel %vm829, %v828, 0
      %832 = vmatpush.msra.mxu0 0.0
      %833 = vmatpush.msra.mxu0 0.0
      %834 = vmatpush.msra.mxu0 0.0
      %835 = vmatpush.msra.mxu0 0.0
      %836 = vmatpush.msra.mxu0 0.0
      %837 = vmatpush.msra.mxu0 0.0
      %838 = vmatpush.msra.mxu0 0.0
      %839 = vmatpush.msra.mxu0 0.0
      %840 = vmatpush.msra.mxu0 %v610
      %841 = vmatpush.msra.mxu0 %v609
      %842 = vmatpush.msra.mxu0 %v608
      %843 = vmatpush.msra.mxu0 %v607
      %844 = vmatpush.msra.mxu0 %v606
      %845 = vmatpush.msra.mxu0 %v605
      %846 = vmatpush.msra.mxu0 %v604
      %847 = vmatpush.msra.mxu0 %v603
      %848 = vmatmul.f32.gmra.mxu0 %v830
      %v849 = vpop.f32.mrf.mxu0
      %v850 = vadd.f32 %v613, %v849
      %851 = vdwg.mxu0
      %vm852 = vcmp.gt.f32.partialorder %v850, 0.0
      %v853 = vmin.f32 %v850, 0.0
      %v854 = vmul.f32 %v853, 1.442695
      %v855 = vpow.pop %v854
      %v856 = vsub.f32 %v855, 1.0
      %v857 = vsel %vm852, %v850, %v856
      %v858 = vld [vmem:[%s3] sm:$0xff]
      %v859 = vld [vmem:[%s3 + $0x8] sm:$0xff]
      %v860 = vld [vmem:[%s3 + $0x10] sm:$0xff]
      %v861 = vld [vmem:[%s3 + $0x18] sm:$0xff]
      %v862 = vld [vmem:[%s3 + $0x20] sm:$0xff]
      %v863 = vld [vmem:[%s3 + $0x28] sm:$0xff]
      %v864 = vld [vmem:[%s3 + $0x30] sm:$0xff]
      %v865 = vld [vmem:[%s3 + $0x38] sm:$0xff]
      %v866 = vld [vmem:[%s3 + $0x40] sm:$0xff]
      %v867 = vld [vmem:[%s3 + $0x48] sm:$0xff]
      %v868 = vld [vmem:[%s3 + $0x50] sm:$0xff]
      %v869 = vld [vmem:[%s3 + $0x58] sm:$0xff]
      %v870 = vld [vmem:[%s3 + $0x60] sm:$0xff]
      %v871 = vld [vmem:[%s3 + $0x68] sm:$0xff]
      %v872 = vld [vmem:[%s3 + $0x70] sm:$0xff]
      %v873 = vld [vmem:[%s3 + $0x78] sm:$0xff]
      %v874 = vld [vmem:[%s3 + $0x80] sm:$0xff]
      %v875 = vld [vmem:[%s3 + $0x88] sm:$0xff]
      %v876 = vld [vmem:[%s3 + $0x90] sm:$0xff]
      %v877 = vld [vmem:[%s3 + $0x98] sm:$0xff]
      %v878 = vld [vmem:[%s3 + $0xa0] sm:$0xff]
      %v879 = vld [vmem:[%s3 + $0xa8] sm:$0xff]
      %v880 = vld [vmem:[%s3 + $0xb0] sm:$0xff]
      %v881 = vld [vmem:[%s3 + $0xb8] sm:$0xff]
      %v882 = vld [vmem:[%s3 + $0xc0] sm:$0xff]
      %v883 = vld [vmem:[%s3 + $0xc8] sm:$0xff]
      %v884 = vld [vmem:[%s3 + $0xd0] sm:$0xff]
      %v885 = vld [vmem:[%s4] sm:$0xff]
      %v886 = vld [vmem:[%s4 + $0x8] sm:$0x1]
      %v889 = vperm.slane %v885, 0
      %v890 = vperm.slane %v885, 1
      %v891 = vperm.slane %v885, 2
      %v892 = vperm.slane %v885, 3
      %v893 = vperm.slane %v885, 4
      %v894 = vperm.slane %v885, 5
      %v895 = vperm.slane %v885, 6
      %v896 = vperm.slane %v885, 7
      %v897 = vperm.slane %v886, 0
      %vm907 = vcmask 195584
      %v909 = vsel %vm907, %v857, 0
      %911 = vmatpush.msra.mxu0 0.0
      %912 = vmatpush.msra.mxu0 0.0
      %913 = vmatpush.msra.mxu0 0.0
      %914 = vmatpush.msra.mxu0 0.0
      %915 = vmatpush.msra.mxu0 0.0
      %916 = vmatpush.msra.mxu0 0.0
      %917 = vmatpush.msra.mxu0 0.0
      %918 = vmatpush.msra.mxu0 0.0
      %919 = vmatpush.msra.mxu0 0.0
      %920 = vmatpush.msra.mxu0 0.0
      %921 = vmatpush.msra.mxu0 0.0
      %922 = vmatpush.msra.mxu0 0.0
      %923 = vmatpush.msra.mxu0 0.0
      %924 = vmatpush.msra.mxu0 %v876
      %925 = vmatpush.msra.mxu0 %v867
      %926 = vmatpush.msra.mxu0 %v858
      %927 = vmatmul.f32.gmra.mxu0 %v909
      %v928 = vpop.f32.mrf.mxu0
      %v929 = vadd.f32 %v889, %v928
      %930 = vdwg.mxu0
      %931 = vmatpush.msra.mxu0 0.0
      %932 = vmatpush.msra.mxu0 0.0
      %933 = vmatpush.msra.mxu0 0.0
      %934 = vmatpush.msra.mxu0 0.0
      %935 = vmatpush.msra.mxu0 0.0
      %936 = vmatpush.msra.mxu0 0.0
      %937 = vmatpush.msra.mxu0 0.0
      %938 = vmatpush.msra.mxu0 0.0
      %939 = vmatpush.msra.mxu0 0.0
      %940 = vmatpush.msra.mxu0 0.0
      %941 = vmatpush.msra.mxu0 0.0
      %942 = vmatpush.msra.mxu0 0.0
      %943 = vmatpush.msra.mxu0 0.0
      %944 = vmatpush.msra.mxu0 %v877
      %945 = vmatpush.msra.mxu0 %v868
      %946 = vmatpush.msra.mxu0 %v859
      %947 = vmatmul.f32.gmra.mxu0 %v909
      %v948 = vpop.f32.mrf.mxu0
      %v949 = vadd.f32 %v890, %v948
      %950 = vdwg.mxu0
      %951 = vmatpush.msra.mxu0 0.0
      %952 = vmatpush.msra.mxu0 0.0
      %953 = vmatpush.msra.mxu0 0.0
      %954 = vmatpush.msra.mxu0 0.0
      %955 = vmatpush.msra.mxu0 0.0
      %956 = vmatpush.msra.mxu0 0.0
      %957 = vmatpush.msra.mxu0 0.0
      %958 = vmatpush.msra.mxu0 0.0
      %959 = vmatpush.msra.mxu0 0.0
      %960 = vmatpush.msra.mxu0 0.0
      %961 = vmatpush.msra.mxu0 0.0
      %962 = vmatpush.msra.mxu0 0.0
      %963 = vmatpush.msra.mxu0 0.0
      %964 = vmatpush.msra.mxu0 %v878
      %965 = vmatpush.msra.mxu0 %v869
      %966 = vmatpush.msra.mxu0 %v860
      %967 = vmatmul.f32.gmra.mxu0 %v909
      %v968 = vpop.f32.mrf.mxu0
      %v969 = vadd.f32 %v891, %v968
      %970 = vdwg.mxu0
      %971 = vmatpush.msra.mxu0 0.0
      %972 = vmatpush.msra.mxu0 0.0
      %973 = vmatpush.msra.mxu0 0.0
      %974 = vmatpush.msra.mxu0 0.0
      %975 = vmatpush.msra.mxu0 0.0
      %976 = vmatpush.msra.mxu0 0.0
      %977 = vmatpush.msra.mxu0 0.0
      %978 = vmatpush.msra.mxu0 0.0
      %979 = vmatpush.msra.mxu0 0.0
      %980 = vmatpush.msra.mxu0 0.0
      %981 = vmatpush.msra.mxu0 0.0
      %982 = vmatpush.msra.mxu0 0.0
      %983 = vmatpush.msra.mxu0 0.0
      %984 = vmatpush.msra.mxu0 %v879
      %985 = vmatpush.msra.mxu0 %v870
      %986 = vmatpush.msra.mxu0 %v861
      %987 = vmatmul.f32.gmra.mxu0 %v909
      %v988 = vpop.f32.mrf.mxu0
      %v989 = vadd.f32 %v892, %v988
      %990 = vdwg.mxu0
      %991 = vmatpush.msra.mxu0 0.0
      %992 = vmatpush.msra.mxu0 0.0
      %993 = vmatpush.msra.mxu0 0.0
      %994 = vmatpush.msra.mxu0 0.0
      %995 = vmatpush.msra.mxu0 0.0
      %996 = vmatpush.msra.mxu0 0.0
      %997 = vmatpush.msra.mxu0 0.0
      %998 = vmatpush.msra.mxu0 0.0
      %999 = vmatpush.msra.mxu0 0.0
      %1000 = vmatpush.msra.mxu0 0.0
      %1001 = vmatpush.msra.mxu0 0.0
      %1002 = vmatpush.msra.mxu0 0.0
      %1003 = vmatpush.msra.mxu0 0.0
      %1004 = vmatpush.msra.mxu0 %v880
      %1005 = vmatpush.msra.mxu0 %v871
      %1006 = vmatpush.msra.mxu0 %v862
      %1007 = vmatmul.f32.gmra.mxu0 %v909
      %v1008 = vpop.f32.mrf.mxu0
      %v1009 = vadd.f32 %v893, %v1008
      %1010 = vdwg.mxu0
      %1011 = vmatpush.msra.mxu0 0.0
      %1012 = vmatpush.msra.mxu0 0.0
      %1013 = vmatpush.msra.mxu0 0.0
      %1014 = vmatpush.msra.mxu0 0.0
      %1015 = vmatpush.msra.mxu0 0.0
      %1016 = vmatpush.msra.mxu0 0.0
      %1017 = vmatpush.msra.mxu0 0.0
      %1018 = vmatpush.msra.mxu0 0.0
      %1019 = vmatpush.msra.mxu0 0.0
      %1020 = vmatpush.msra.mxu0 0.0
      %1021 = vmatpush.msra.mxu0 0.0
      %1022 = vmatpush.msra.mxu0 0.0
      %1023 = vmatpush.msra.mxu0 0.0
      %1024 = vmatpush.msra.mxu0 %v881
      %1025 = vmatpush.msra.mxu0 %v872
      %1026 = vmatpush.msra.mxu0 %v863
      %1027 = vmatmul.f32.gmra.mxu0 %v909
      %v1028 = vpop.f32.mrf.mxu0
      %v1029 = vadd.f32 %v894, %v1028
      %1030 = vdwg.mxu0
      %1031 = vmatpush.msra.mxu0 0.0
      %1032 = vmatpush.msra.mxu0 0.0
      %1033 = vmatpush.msra.mxu0 0.0
      %1034 = vmatpush.msra.mxu0 0.0
      %1035 = vmatpush.msra.mxu0 0.0
      %1036 = vmatpush.msra.mxu0 0.0
      %1037 = vmatpush.msra.mxu0 0.0
      %1038 = vmatpush.msra.mxu0 0.0
      %1039 = vmatpush.msra.mxu0 0.0
      %1040 = vmatpush.msra.mxu0 0.0
      %1041 = vmatpush.msra.mxu0 0.0
      %1042 = vmatpush.msra.mxu0 0.0
      %1043 = vmatpush.msra.mxu0 0.0
      %1044 = vmatpush.msra.mxu0 %v882
      %1045 = vmatpush.msra.mxu0 %v873
      %1046 = vmatpush.msra.mxu0 %v864
      %1047 = vmatmul.f32.gmra.mxu0 %v909
      %v1048 = vpop.f32.mrf.mxu0
      %v1049 = vadd.f32 %v895, %v1048
      %1050 = vdwg.mxu0
      %1051 = vmatpush.msra.mxu0 0.0
      %1052 = vmatpush.msra.mxu0 0.0
      %1053 = vmatpush.msra.mxu0 0.0
      %1054 = vmatpush.msra.mxu0 0.0
      %1055 = vmatpush.msra.mxu0 0.0
      %1056 = vmatpush.msra.mxu0 0.0
      %1057 = vmatpush.msra.mxu0 0.0
      %1058 = vmatpush.msra.mxu0 0.0
      %1059 = vmatpush.msra.mxu0 0.0
      %1060 = vmatpush.msra.mxu0 0.0
      %1061 = vmatpush.msra.mxu0 0.0
      %1062 = vmatpush.msra.mxu0 0.0
      %1063 = vmatpush.msra.mxu0 0.0
      %1064 = vmatpush.msra.mxu0 %v883
      %1065 = vmatpush.msra.mxu0 %v874
      %1066 = vmatpush.msra.mxu0 %v865
      %1067 = vmatmul.f32.gmra.mxu0 %v909
      %v1068 = vpop.f32.mrf.mxu0
      %v1069 = vadd.f32 %v896, %v1068
      %1070 = vdwg.mxu0
      %1071 = vmatpush.msra.mxu0 0.0
      %1072 = vmatpush.msra.mxu0 0.0
      %1073 = vmatpush.msra.mxu0 0.0
      %1074 = vmatpush.msra.mxu0 0.0
      %1075 = vmatpush.msra.mxu0 0.0
      %1076 = vmatpush.msra.mxu0 0.0
      %1077 = vmatpush.msra.mxu0 0.0
      %1078 = vmatpush.msra.mxu0 0.0
      %1079 = vmatpush.msra.mxu0 0.0
      %1080 = vmatpush.msra.mxu0 0.0
      %1081 = vmatpush.msra.mxu0 0.0
      %1082 = vmatpush.msra.mxu0 0.0
      %1083 = vmatpush.msra.mxu0 0.0
      %1084 = vmatpush.msra.mxu0 %v884
      %1085 = vmatpush.msra.mxu0 %v875
      %1086 = vmatpush.msra.mxu0 %v866
      %1087 = vmatmul.f32.gmra.mxu0 %v909
      %v1088 = vpop.f32.mrf.mxu0
      %v1089 = vadd.f32 %v897, %v1088
      %1090 = vdwg.mxu0
      %vm1091 = vcmask 23552
      %v1092 = vsel %vm1091, %v929, -inf
      %1093 = vmax.xlane.f32.xlu0 %v1092
      %v1094 = vpop.xlane.xlu0 %1093
      %v1095 = vsub.f32 %v929, %v1094
      %v1096 = vmul.f32 %v1095, 1.442695
      %v1097 = vpow.pop %v1096
      %v1098 = vsel %vm1091, %v1097, 0.0
      %1099 = vadd.xlane.f32.xlu0 %v1098
      %v1100 = vpop.xlane.xlu0 %1099
      %v1101 = vrcp.pop %v1100
      %v1102 = vmul.f32 %v1100, %v1101
      %v1103 = vsub.f32 1.0, %v1102
      %v1104 = vmul.f32 %v1101, %v1103
      %v1105 = vadd.f32 %v1101, %v1104
      %vm1106 = vweird.f32 %v1100
      %vm1107 = vweird.f32 %v1101
      %vm1108 = vmor %vm1106, %vm1107
      %v1109 = vsel %vm1108, %v1101, %v1105
      %v1110 = vand.u32 2147483647, %v1100
      %vm1111 = vcmp.eq.f32.partialorder %v1110, 8.507059e+37
      %v1112 = vand.u32 %v1100, 2147483648
      %v1113 = vor.u32 1.1754944e-38, %v1112
      %v1114 = vsel %vm1111, %v1113, %v1109
      %v1115 = vmul.f32 %v1097, %v1114
      %1116 = vst.msk [vmem:[%s281] sm:$0xff] %vm1091, %v1115
      %v1117 = vperm.slane %v989, 0
      %v1118 = vlaneseq
      %v1119 = vshrl.u32 %v1118, 7
      %1121 = vset.pattern.permute.xlu0 %v1119
      %1122 = vperm.xlu0 %1121, %v1117
      %v1123 = vpop.permute.xlu0 %1122
      %v1124 = vperm.slane %v989, 1
      %v1125 = vlaneseq
      %v1126 = vshrl.u32 %v1125, 7
      %1128 = vset.pattern.permute.xlu0 %v1126
      %1129 = vperm.xlu0 %1128, %v1124
      %v1130 = vpop.permute.xlu0 %1129
      %v1131 = vperm.slane %v989, 2
      %v1132 = vlaneseq
      %v1133 = vshrl.u32 %v1132, 7
      %1135 = vset.pattern.permute.xlu0 %v1133
      %1136 = vperm.xlu0 %1135, %v1131
      %v1137 = vpop.permute.xlu0 %1136
      %v1138 = vperm.slane %v989, 3
      %v1139 = vlaneseq
      %v1140 = vshrl.u32 %v1139, 7
      %1142 = vset.pattern.permute.xlu0 %v1140
      %1143 = vperm.xlu0 %1142, %v1138
      %v1144 = vpop.permute.xlu0 %1143
      %v1145 = vperm.slane %v989, 4
      %v1146 = vlaneseq
      %v1147 = vshrl.u32 %v1146, 7
      %1149 = vset.pattern.permute.xlu0 %v1147
      %1150 = vperm.xlu0 %1149, %v1145
      %v1151 = vpop.permute.xlu0 %1150
      %v1152 = vperm.slane %v989, 5
      %v1153 = vlaneseq
      %v1154 = vshrl.u32 %v1153, 7
      %1156 = vset.pattern.permute.xlu0 %v1154
      %1157 = vperm.xlu0 %1156, %v1152
      %v1158 = vpop.permute.xlu0 %1157
      %v1159 = vperm.slane %v989, 6
      %v1160 = vlaneseq
      %v1161 = vshrl.u32 %v1160, 7
      %1163 = vset.pattern.permute.xlu0 %v1161
      %1164 = vperm.xlu0 %1163, %v1159
      %v1165 = vpop.permute.xlu0 %1164
      %v1166 = vperm.slane %v989, 7
      %v1167 = vlaneseq
      %v1168 = vshrl.u32 %v1167, 7
      %1170 = vset.pattern.permute.xlu0 %v1168
      %1171 = vperm.xlu0 %1170, %v1166
      %v1172 = vpop.permute.xlu0 %1171
      %v1174 = vrot.slane %v949, 1
      %v1175 = vrot.slane %v949, 2
      %v1176 = vrot.slane %v949, 3
      %v1177 = vrot.slane %v949, 4
      %v1178 = vrot.slane %v949, 5
      %v1179 = vrot.slane %v949, 6
      %v1180 = vrot.slane %v949, 7
      %v1181 = vperm.slane %v949, 0
      %v1182 = vperm.slane %v1174, 0
      %v1183 = vperm.slane %v1175, 0
      %v1184 = vperm.slane %v1176, 0
      %v1185 = vperm.slane %v1177, 0
      %v1186 = vperm.slane %v1178, 0
      %v1187 = vperm.slane %v1179, 0
      %v1188 = vperm.slane %v1180, 0
      %v1197 = vmul.f32 %v1123, %v1181
      %v1198 = vmul.f32 %v1130, %v1182
      %v1199 = vmul.f32 %v1137, %v1183
      %v1200 = vmul.f32 %v1144, %v1184
      %v1201 = vmul.f32 %v1151, %v1185
      %v1202 = vmul.f32 %v1158, %v1186
      %v1203 = vmul.f32 %v1165, %v1187
      %v1204 = vmul.f32 %v1172, %v1188
      %v1205 = vadd.f32 %v1197, 0.0
      %v1206 = vadd.f32 %v1198, 0.0
      %v1207 = vadd.f32 %v1199, 0.0
      %v1208 = vadd.f32 %v1200, 0.0
      %v1209 = vadd.f32 %v1201, 0.0
      %v1210 = vadd.f32 %v1202, 0.0
      %v1211 = vadd.f32 %v1203, 0.0
      %v1212 = vadd.f32 %v1204, 0.0
      %v1213 = vperm.slane %v1009, 0
      %v1214 = vlaneseq
      %v1215 = vshrl.u32 %v1214, 7
      %1217 = vset.pattern.permute.xlu0 %v1215
      %1218 = vperm.xlu0 %1217, %v1213
      %v1219 = vpop.permute.xlu0 %1218
      %v1220 = vperm.slane %v1009, 1
      %v1221 = vlaneseq
      %v1222 = vshrl.u32 %v1221, 7
      %1224 = vset.pattern.permute.xlu0 %v1222
      %1225 = vperm.xlu0 %1224, %v1220
      %v1226 = vpop.permute.xlu0 %1225
      %v1227 = vperm.slane %v1009, 2
      %v1228 = vlaneseq
      %v1229 = vshrl.u32 %v1228, 7
      %1231 = vset.pattern.permute.xlu0 %v1229
      %1232 = vperm.xlu0 %1231, %v1227
      %v1233 = vpop.permute.xlu0 %1232
      %v1234 = vperm.slane %v1009, 3
      %v1235 = vlaneseq
      %v1236 = vshrl.u32 %v1235, 7
      %1238 = vset.pattern.permute.xlu0 %v1236
      %1239 = vperm.xlu0 %1238, %v1234
      %v1240 = vpop.permute.xlu0 %1239
      %v1241 = vperm.slane %v1009, 4
      %v1242 = vlaneseq
      %v1243 = vshrl.u32 %v1242, 7
      %1245 = vset.pattern.permute.xlu0 %v1243
      %1246 = vperm.xlu0 %1245, %v1241
      %v1247 = vpop.permute.xlu0 %1246
      %v1248 = vperm.slane %v1009, 5
      %v1249 = vlaneseq
      %v1250 = vshrl.u32 %v1249, 7
      %1252 = vset.pattern.permute.xlu0 %v1250
      %1253 = vperm.xlu0 %1252, %v1248
      %v1254 = vpop.permute.xlu0 %1253
      %v1255 = vperm.slane %v1009, 6
      %v1256 = vlaneseq
      %v1257 = vshrl.u32 %v1256, 7
      %1259 = vset.pattern.permute.xlu0 %v1257
      %1260 = vperm.xlu0 %1259, %v1255
      %v1261 = vpop.permute.xlu0 %1260
      %v1262 = vperm.slane %v1009, 7
      %v1263 = vlaneseq
      %v1264 = vshrl.u32 %v1263, 7
      %1266 = vset.pattern.permute.xlu0 %v1264
      %1267 = vperm.xlu0 %1266, %v1262
      %v1268 = vpop.permute.xlu0 %1267
      %v1270 = vrot.slane %v969, 1
      %v1271 = vrot.slane %v969, 2
      %v1272 = vrot.slane %v969, 3
      %v1273 = vrot.slane %v969, 4
      %v1274 = vrot.slane %v969, 5
      %v1275 = vrot.slane %v969, 6
      %v1276 = vrot.slane %v969, 7
      %v1277 = vperm.slane %v969, 0
      %v1278 = vperm.slane %v1270, 0
      %v1279 = vperm.slane %v1271, 0
      %v1280 = vperm.slane %v1272, 0
      %v1281 = vperm.slane %v1273, 0
      %v1282 = vperm.slane %v1274, 0
      %v1283 = vperm.slane %v1275, 0
      %v1284 = vperm.slane %v1276, 0
      %v1293 = vmul.f32 %v1219, %v1277
      %v1294 = vmul.f32 %v1226, %v1278
      %v1295 = vmul.f32 %v1233, %v1279
      %v1296 = vmul.f32 %v1240, %v1280
      %v1297 = vmul.f32 %v1247, %v1281
      %v1298 = vmul.f32 %v1254, %v1282
      %v1299 = vmul.f32 %v1261, %v1283
      %v1300 = vmul.f32 %v1268, %v1284
      %v1301 = vadd.f32 %v1205, %v1293
      %v1302 = vadd.f32 %v1206, %v1294
      %v1303 = vadd.f32 %v1207, %v1295
      %v1304 = vadd.f32 %v1208, %v1296
      %v1305 = vadd.f32 %v1209, %v1297
      %v1306 = vadd.f32 %v1210, %v1298
      %v1307 = vadd.f32 %v1211, %v1299
      %v1308 = vadd.f32 %v1212, %v1300
      %v1309 = vld [vmem:[%s5] sm:$0x1f]
      %v1310 = vadd.f32 %v1301, %v1309
      %v1311 = vadd.f32 %v1302, %v1309
      %v1312 = vadd.f32 %v1303, %v1309
      %v1313 = vadd.f32 %v1304, %v1309
      %v1314 = vadd.f32 %v1305, %v1309
      %v1315 = vadd.f32 %v1306, %v1309
      %v1316 = vadd.f32 %v1307, %v1309
      %v1317 = vadd.f32 %v1308, %v1309
      %vm1318 = vcmask 20480
      %v1319 = vsel %vm1318, %v1310, -inf
      %v1320 = vrot.slane %v1319, 4
      %v1321 = vmax.f32 %v1319, %v1320
      %v1322 = vrot.slane %v1321, 2
      %v1323 = vmax.f32 %v1321, %v1322
      %v1324 = vrot.slane %v1323, 1
      %v1325 = vmax.f32 %v1323, %v1324
      %v1326 = vsel %vm1318, %v1311, -inf
      %v1327 = vrot.slane %v1326, 4
      %v1328 = vmax.f32 %v1326, %v1327
      %v1329 = vrot.slane %v1328, 2
      %v1330 = vmax.f32 %v1328, %v1329
      %v1331 = vrot.slane %v1330, 1
      %v1332 = vmax.f32 %v1330, %v1331
      %v1333 = vsel %vm1318, %v1312, -inf
      %v1334 = vrot.slane %v1333, 4
      %v1335 = vmax.f32 %v1333, %v1334
      %v1336 = vrot.slane %v1335, 2
      %v1337 = vmax.f32 %v1335, %v1336
      %v1338 = vrot.slane %v1337, 1
      %v1339 = vmax.f32 %v1337, %v1338
      %v1340 = vsel %vm1318, %v1313, -inf
      %v1341 = vrot.slane %v1340, 4
      %v1342 = vmax.f32 %v1340, %v1341
      %v1343 = vrot.slane %v1342, 2
      %v1344 = vmax.f32 %v1342, %v1343
      %v1345 = vrot.slane %v1344, 1
      %v1346 = vmax.f32 %v1344, %v1345
      %v1347 = vsel %vm1318, %v1314, -inf
      %v1348 = vrot.slane %v1347, 4
      %v1349 = vmax.f32 %v1347, %v1348
      %v1350 = vrot.slane %v1349, 2
      %v1351 = vmax.f32 %v1349, %v1350
      %v1352 = vrot.slane %v1351, 1
      %v1353 = vmax.f32 %v1351, %v1352
      %v1354 = vsel %vm1318, %v1315, -inf
      %v1355 = vrot.slane %v1354, 4
      %v1356 = vmax.f32 %v1354, %v1355
      %v1357 = vrot.slane %v1356, 2
      %v1358 = vmax.f32 %v1356, %v1357
      %v1359 = vrot.slane %v1358, 1
      %v1360 = vmax.f32 %v1358, %v1359
      %v1361 = vsel %vm1318, %v1316, -inf
      %v1362 = vrot.slane %v1361, 4
      %v1363 = vmax.f32 %v1361, %v1362
      %v1364 = vrot.slane %v1363, 2
      %v1365 = vmax.f32 %v1363, %v1364
      %v1366 = vrot.slane %v1365, 1
      %v1367 = vmax.f32 %v1365, %v1366
      %v1368 = vsel %vm1318, %v1317, -inf
      %v1369 = vrot.slane %v1368, 4
      %v1370 = vmax.f32 %v1368, %v1369
      %v1371 = vrot.slane %v1370, 2
      %v1372 = vmax.f32 %v1370, %v1371
      %v1373 = vrot.slane %v1372, 1
      %v1374 = vmax.f32 %v1372, %v1373
      %v1375 = vsub.f32 %v1310, %v1325
      %v1376 = vsub.f32 %v1311, %v1332
      %v1377 = vsub.f32 %v1312, %v1339
      %v1378 = vsub.f32 %v1313, %v1346
      %v1379 = vsub.f32 %v1314, %v1353
      %v1380 = vsub.f32 %v1315, %v1360
      %v1381 = vsub.f32 %v1316, %v1367
      %v1382 = vsub.f32 %v1317, %v1374
      %v1383 = vmul.f32 %v1375, 1.442695
      %v1384 = vpow.pop %v1383
      %v1385 = vmul.f32 %v1376, 1.442695
      %v1386 = vpow.pop %v1385
      %v1387 = vmul.f32 %v1377, 1.442695
      %v1388 = vpow.pop %v1387
      %v1389 = vmul.f32 %v1378, 1.442695
      %v1390 = vpow.pop %v1389
      %v1391 = vmul.f32 %v1379, 1.442695
      %v1392 = vpow.pop %v1391
      %v1393 = vmul.f32 %v1380, 1.442695
      %v1394 = vpow.pop %v1393
      %v1395 = vmul.f32 %v1381, 1.442695
      %v1396 = vpow.pop %v1395
      %v1397 = vmul.f32 %v1382, 1.442695
      %v1398 = vpow.pop %v1397
      %v1399 = vsel %vm1318, %v1384, 0.0
      %v1400 = vrot.slane %v1399, 4
      %v1401 = vadd.f32 %v1399, %v1400
      %v1402 = vrot.slane %v1401, 2
      %v1403 = vadd.f32 %v1401, %v1402
      %v1404 = vrot.slane %v1403, 1
      %v1405 = vadd.f32 %v1403, %v1404
      %v1406 = vsel %vm1318, %v1386, 0.0
      %v1407 = vrot.slane %v1406, 4
      %v1408 = vadd.f32 %v1406, %v1407
      %v1409 = vrot.slane %v1408, 2
      %v1410 = vadd.f32 %v1408, %v1409
      %v1411 = vrot.slane %v1410, 1
      %v1412 = vadd.f32 %v1410, %v1411
      %v1413 = vsel %vm1318, %v1388, 0.0
      %v1414 = vrot.slane %v1413, 4
      %v1415 = vadd.f32 %v1413, %v1414
      %v1416 = vrot.slane %v1415, 2
      %v1417 = vadd.f32 %v1415, %v1416
      %v1418 = vrot.slane %v1417, 1
      %v1419 = vadd.f32 %v1417, %v1418
      %v1420 = vsel %vm1318, %v1390, 0.0
      %v1421 = vrot.slane %v1420, 4
      %v1422 = vadd.f32 %v1420, %v1421
      %v1423 = vrot.slane %v1422, 2
      %v1424 = vadd.f32 %v1422, %v1423
      %v1425 = vrot.slane %v1424, 1
      %v1426 = vadd.f32 %v1424, %v1425
      %v1427 = vsel %vm1318, %v1392, 0.0
      %v1428 = vrot.slane %v1427, 4
      %v1429 = vadd.f32 %v1427, %v1428
      %v1430 = vrot.slane %v1429, 2
      %v1431 = vadd.f32 %v1429, %v1430
      %v1432 = vrot.slane %v1431, 1
      %v1433 = vadd.f32 %v1431, %v1432
      %v1434 = vsel %vm1318, %v1394, 0.0
      %v1435 = vrot.slane %v1434, 4
      %v1436 = vadd.f32 %v1434, %v1435
      %v1437 = vrot.slane %v1436, 2
      %v1438 = vadd.f32 %v1436, %v1437
      %v1439 = vrot.slane %v1438, 1
      %v1440 = vadd.f32 %v1438, %v1439
      %v1441 = vsel %vm1318, %v1396, 0.0
      %v1442 = vrot.slane %v1441, 4
      %v1443 = vadd.f32 %v1441, %v1442
      %v1444 = vrot.slane %v1443, 2
      %v1445 = vadd.f32 %v1443, %v1444
      %v1446 = vrot.slane %v1445, 1
      %v1447 = vadd.f32 %v1445, %v1446
      %v1448 = vsel %vm1318, %v1398, 0.0
      %v1449 = vrot.slane %v1448, 4
      %v1450 = vadd.f32 %v1448, %v1449
      %v1451 = vrot.slane %v1450, 2
      %v1452 = vadd.f32 %v1450, %v1451
      %v1453 = vrot.slane %v1452, 1
      %v1454 = vadd.f32 %v1452, %v1453
      %v1455 = vrcp.pop %v1405
      %v1456 = vmul.f32 %v1405, %v1455
      %v1457 = vsub.f32 1.0, %v1456
      %v1458 = vmul.f32 %v1455, %v1457
      %v1459 = vadd.f32 %v1455, %v1458
      %vm1460 = vweird.f32 %v1405
      %vm1461 = vweird.f32 %v1455
      %vm1462 = vmor %vm1460, %vm1461
      %v1463 = vsel %vm1462, %v1455, %v1459
      %v1464 = vand.u32 2147483647, %v1405
      %vm1465 = vcmp.eq.f32.partialorder %v1464, 8.507059e+37
      %v1466 = vand.u32 %v1405, 2147483648
      %v1467 = vor.u32 1.1754944e-38, %v1466
      %v1468 = vsel %vm1465, %v1467, %v1463
      %v1469 = vmul.f32 %v1384, %v1468
      %v1470 = vrcp.pop %v1412
      %v1471 = vmul.f32 %v1412, %v1470
      %v1472 = vsub.f32 1.0, %v1471
      %v1473 = vmul.f32 %v1470, %v1472
      %v1474 = vadd.f32 %v1470, %v1473
      %vm1475 = vweird.f32 %v1412
      %vm1476 = vweird.f32 %v1470
      %vm1477 = vmor %vm1475, %vm1476
      %v1478 = vsel %vm1477, %v1470, %v1474
      %v1479 = vand.u32 2147483647, %v1412
      %vm1480 = vcmp.eq.f32.partialorder %v1479, 8.507059e+37
      %v1481 = vand.u32 %v1412, 2147483648
      %v1482 = vor.u32 1.1754944e-38, %v1481
      %v1483 = vsel %vm1480, %v1482, %v1478
      %v1484 = vmul.f32 %v1386, %v1483
      %v1485 = vrcp.pop %v1419
      %v1486 = vmul.f32 %v1419, %v1485
      %v1487 = vsub.f32 1.0, %v1486
      %v1488 = vmul.f32 %v1485, %v1487
      %v1489 = vadd.f32 %v1485, %v1488
      %vm1490 = vweird.f32 %v1419
      %vm1491 = vweird.f32 %v1485
      %vm1492 = vmor %vm1490, %vm1491
      %v1493 = vsel %vm1492, %v1485, %v1489
      %v1494 = vand.u32 2147483647, %v1419
      %vm1495 = vcmp.eq.f32.partialorder %v1494, 8.507059e+37
      %v1496 = vand.u32 %v1419, 2147483648
      %v1497 = vor.u32 1.1754944e-38, %v1496
      %v1498 = vsel %vm1495, %v1497, %v1493
      %v1499 = vmul.f32 %v1388, %v1498
      %v1500 = vrcp.pop %v1426
      %v1501 = vmul.f32 %v1426, %v1500
      %v1502 = vsub.f32 1.0, %v1501
      %v1503 = vmul.f32 %v1500, %v1502
      %v1504 = vadd.f32 %v1500, %v1503
      %vm1505 = vweird.f32 %v1426
      %vm1506 = vweird.f32 %v1500
      %vm1507 = vmor %vm1505, %vm1506
      %v1508 = vsel %vm1507, %v1500, %v1504
      %v1509 = vand.u32 2147483647, %v1426
      %vm1510 = vcmp.eq.f32.partialorder %v1509, 8.507059e+37
      %v1511 = vand.u32 %v1426, 2147483648
      %v1512 = vor.u32 1.1754944e-38, %v1511
      %v1513 = vsel %vm1510, %v1512, %v1508
      %v1514 = vmul.f32 %v1390, %v1513
      %v1515 = vrcp.pop %v1433
      %v1516 = vmul.f32 %v1433, %v1515
      %v1517 = vsub.f32 1.0, %v1516
      %v1518 = vmul.f32 %v1515, %v1517
      %v1519 = vadd.f32 %v1515, %v1518
      %vm1520 = vweird.f32 %v1433
      %vm1521 = vweird.f32 %v1515
      %vm1522 = vmor %vm1520, %vm1521
      %v1523 = vsel %vm1522, %v1515, %v1519
      %v1524 = vand.u32 2147483647, %v1433
      %vm1525 = vcmp.eq.f32.partialorder %v1524, 8.507059e+37
      %v1526 = vand.u32 %v1433, 2147483648
      %v1527 = vor.u32 1.1754944e-38, %v1526
      %v1528 = vsel %vm1525, %v1527, %v1523
      %v1529 = vmul.f32 %v1392, %v1528
      %v1530 = vrcp.pop %v1440
      %v1531 = vmul.f32 %v1440, %v1530
      %v1532 = vsub.f32 1.0, %v1531
      %v1533 = vmul.f32 %v1530, %v1532
      %v1534 = vadd.f32 %v1530, %v1533
      %vm1535 = vweird.f32 %v1440
      %vm1536 = vweird.f32 %v1530
      %vm1537 = vmor %vm1535, %vm1536
      %v1538 = vsel %vm1537, %v1530, %v1534
      %v1539 = vand.u32 2147483647, %v1440
      %vm1540 = vcmp.eq.f32.partialorder %v1539, 8.507059e+37
      %v1541 = vand.u32 %v1440, 2147483648
      %v1542 = vor.u32 1.1754944e-38, %v1541
      %v1543 = vsel %vm1540, %v1542, %v1538
      %v1544 = vmul.f32 %v1394, %v1543
      %v1545 = vrcp.pop %v1447
      %v1546 = vmul.f32 %v1447, %v1545
      %v1547 = vsub.f32 1.0, %v1546
      %v1548 = vmul.f32 %v1545, %v1547
      %v1549 = vadd.f32 %v1545, %v1548
      %vm1550 = vweird.f32 %v1447
      %vm1551 = vweird.f32 %v1545
      %vm1552 = vmor %vm1550, %vm1551
      %v1553 = vsel %vm1552, %v1545, %v1549
      %v1554 = vand.u32 2147483647, %v1447
      %vm1555 = vcmp.eq.f32.partialorder %v1554, 8.507059e+37
      %v1556 = vand.u32 %v1447, 2147483648
      %v1557 = vor.u32 1.1754944e-38, %v1556
      %v1558 = vsel %vm1555, %v1557, %v1553
      %v1559 = vmul.f32 %v1396, %v1558
      %v1560 = vrcp.pop %v1454
      %v1561 = vmul.f32 %v1454, %v1560
      %v1562 = vsub.f32 1.0, %v1561
      %v1563 = vmul.f32 %v1560, %v1562
      %v1564 = vadd.f32 %v1560, %v1563
      %vm1565 = vweird.f32 %v1454
      %vm1566 = vweird.f32 %v1560
      %vm1567 = vmor %vm1565, %vm1566
      %v1568 = vsel %vm1567, %v1560, %v1564
      %v1569 = vand.u32 2147483647, %v1454
      %vm1570 = vcmp.eq.f32.partialorder %v1569, 8.507059e+37
      %v1571 = vand.u32 %v1454, 2147483648
      %v1572 = vor.u32 1.1754944e-38, %v1571
      %v1573 = vsel %vm1570, %v1572, %v1568
      %v1574 = vmul.f32 %v1398, %v1573
      %v1576 = vrot.slane %v1115, 1
      %v1577 = vrot.slane %v1115, 2
      %v1578 = vrot.slane %v1115, 3
      %v1579 = vrot.slane %v1115, 4
      %v1580 = vrot.slane %v1115, 5
      %v1581 = vrot.slane %v1115, 6
      %v1582 = vrot.slane %v1115, 7
      %v1583 = vperm.slane %v1115, 0
      %v1584 = vperm.slane %v1576, 0
      %v1585 = vperm.slane %v1577, 0
      %v1586 = vperm.slane %v1578, 0
      %v1587 = vperm.slane %v1579, 0
      %v1588 = vperm.slane %v1580, 0
      %v1589 = vperm.slane %v1581, 0
      %v1590 = vperm.slane %v1582, 0
      %v1599 = vmul.f32 %v1469, %v1583
      %v1600 = vmul.f32 %v1484, %v1584
      %v1601 = vmul.f32 %v1499, %v1585
      %v1602 = vmul.f32 %v1514, %v1586
      %v1603 = vmul.f32 %v1529, %v1587
      %v1604 = vmul.f32 %v1544, %v1588
      %v1605 = vmul.f32 %v1559, %v1589
      %v1606 = vmul.f32 %v1574, %v1590
      %v1607 = vsel %vm1318, %v1599, 0.0
      %1608 = vadd.xlane.f32.xlu0 %v1607
      %v1609 = vpop.xlane.xlu0 %1608
      %v1610 = vsel %vm1318, %v1600, 0.0
      %1611 = vadd.xlane.f32.xlu0 %v1610
      %v1612 = vpop.xlane.xlu0 %1611
      %v1613 = vsel %vm1318, %v1601, 0.0
      %1614 = vadd.xlane.f32.xlu0 %v1613
      %v1615 = vpop.xlane.xlu0 %1614
      %v1616 = vsel %vm1318, %v1602, 0.0
      %1617 = vadd.xlane.f32.xlu0 %v1616
      %v1618 = vpop.xlane.xlu0 %1617
      %v1619 = vsel %vm1318, %v1603, 0.0
      %1620 = vadd.xlane.f32.xlu0 %v1619
      %v1621 = vpop.xlane.xlu0 %1620
      %v1622 = vsel %vm1318, %v1604, 0.0
      %1623 = vadd.xlane.f32.xlu0 %v1622
      %v1624 = vpop.xlane.xlu0 %1623
      %v1625 = vsel %vm1318, %v1605, 0.0
      %1626 = vadd.xlane.f32.xlu0 %v1625
      %v1627 = vpop.xlane.xlu0 %1626
      %v1628 = vsel %vm1318, %v1606, 0.0
      %1629 = vadd.xlane.f32.xlu0 %v1628
      %v1630 = vpop.xlane.xlu0 %1629
      %v1639 = vadd.s32 %v680, 4294967293
      %v1640 = vperm.slane %v1609, %v1639
      %v1641 = vperm.slane %v1612, %v1639
      %v1642 = vperm.slane %v1615, %v1639
      %v1643 = vperm.slane %v1618, %v1639
      %v1644 = vperm.slane %v1621, %v1639
      %v1645 = vperm.slane %v1624, %v1639
      %v1646 = vperm.slane %v1627, %v1639
      %v1647 = vperm.slane %v1630, %v1639
      %v1648 = vsel %vm815, %v1641, %v1640
      %v1649 = vsel %vm817, %v1642, %v1648
      %v1650 = vsel %vm819, %v1643, %v1649
      %v1651 = vsel %vm821, %v1644, %v1650
      %v1652 = vsel %vm823, %v1645, %v1651
      %v1653 = vsel %vm825, %v1646, %v1652
      %v1654 = vsel %vm827, %v1647, %v1653
      %vm1656 = vcmask 64536
      %1657 = vst.msk [vmem:[%s281] sm:$0xff] %vm1656, %v1654
      %v1666 = vrot.slane %v1484, 7
      %v1667 = vsel %vm815, %v1666, %v1469
      %v1668 = vrot.slane %v1499, 6
      %v1669 = vsel %vm817, %v1668, %v1667
      %v1670 = vrot.slane %v1514, 5
      %v1671 = vsel %vm819, %v1670, %v1669
      %v1672 = vrot.slane %v1529, 4
      %v1673 = vsel %vm821, %v1672, %v1671
      %v1674 = vrot.slane %v1544, 3
      %v1675 = vsel %vm823, %v1674, %v1673
      %v1676 = vrot.slane %v1559, 2
      %v1677 = vsel %vm825, %v1676, %v1675
      %v1678 = vrot.slane %v1574, 1
      %v1679 = vsel %vm827, %v1678, %v1677
      %1680 = vrot.lane.b32.xlu0 %v1679, 15
      %v1681 = vpop.permute.xlu0 %1680
      %vm1683 = vcmask 146552
      %1684 = vst.msk [vmem:[%s281] sm:$0xff] %vm1683, %v1681
      %v1685 = vsel %vm817, %v1666, %v1469
      %v1686 = vsel %vm819, %v1668, %v1685
      %v1687 = vsel %vm821, %v1670, %v1686
      %v1688 = vsel %vm823, %v1672, %v1687
      %v1689 = vsel %vm825, %v1674, %v1688
      %v1690 = vsel %vm827, %v1676, %v1689
      %1691 = vrot.lane.b32.xlu0 %v1690, 18
      %v1692 = vpop.permute.xlu0 %1691
      %1693 = vrot.lane.b32.xlu0 %v1678, 18
      %v1694 = vpop.permute.xlu0 %1693
      %vm1697 = vcmask 171153
      %1698 = vst.msk [vmem:[%s281 - $0x1] sm:$0xfe] %vm1697, %v1692
      %vm1699 = vcmask 163984
      %1700 = vst.msk [vmem:[%s281 + $0x7] sm:$0x1] %vm1699, %v1694
      %v1701 = vsel %vm819, %v1666, %v1469
      %v1702 = vsel %vm821, %v1668, %v1701
      %v1703 = vsel %vm823, %v1670, %v1702
      %v1704 = vsel %vm825, %v1672, %v1703
      %v1705 = vsel %vm827, %v1674, %v1704
      %v1706 = vsel %vm815, %v1678, %v1676
      %1707 = vrot.lane.b32.xlu0 %v1705, 21
      %v1708 = vpop.permute.xlu0 %1707
      %1709 = vrot.lane.b32.xlu0 %v1706, 21
      %v1710 = vpop.permute.xlu0 %1709
      %vm1713 = vcmask 195754
      %1714 = vst.msk [vmem:[%s281 - $0x2] sm:$0xfc] %vm1713, %v1708
      %vm1715 = vcmask 189608
      %1716 = vst.msk [vmem:[%s281 + $0x6] sm:$0x3] %vm1715, %v1710
      %v1717 = vsel %vm821, %v1666, %v1469
      %v1718 = vsel %vm823, %v1668, %v1717
      %v1719 = vsel %vm825, %v1670, %v1718
      %v1720 = vsel %vm827, %v1672, %v1719
      %v1721 = vsel %vm815, %v1676, %v1674
      %v1722 = vsel %vm817, %v1678, %v1721
      %1723 = vrot.lane.b32.xlu0 %v1720, 24
      %v1724 = vpop.permute.xlu0 %1723
      %1725 = vrot.lane.b32.xlu0 %v1722, 24
      %v1726 = vpop.permute.xlu0 %1725
      %vm1729 = vcmask 220355
      %1730 = vst.msk [vmem:[%s281 - $0x3] sm:$0xf8] %vm1729, %v1724
      %vm1731 = vcmask 215232
      %1732 = vst.msk [vmem:[%s281 + $0x5] sm:$0x7] %vm1731, %v1726
      %v1733 = vsel %vm823, %v1666, %v1469
      %v1734 = vsel %vm825, %v1668, %v1733
      %v1735 = vsel %vm827, %v1670, %v1734
      %v1736 = vsel %vm815, %v1674, %v1672
      %v1737 = vsel %vm817, %v1676, %v1736
      %v1738 = vsel %vm819, %v1678, %v1737
      %1739 = vrot.lane.b32.xlu0 %v1735, 27
      %v1740 = vpop.permute.xlu0 %1739
      %1741 = vrot.lane.b32.xlu0 %v1738, 27
      %v1742 = vpop.permute.xlu0 %1741
      %vm1745 = vcmask 244956
      %1746 = vst.msk [vmem:[%s281 - $0x4] sm:$0xf0] %vm1745, %v1740
      %vm1747 = vcmask 240856
      %1748 = vst.msk [vmem:[%s281 + $0x4] sm:$0xf] %vm1747, %v1742
      %v1749 = vperm.slane %v1069, 0
      %v1750 = vlaneseq
      %v1751 = vshrl.u32 %v1750, 7
      %1753 = vset.pattern.permute.xlu0 %v1751
      %1754 = vperm.xlu0 %1753, %v1749
      %v1755 = vpop.permute.xlu0 %1754
      %v1756 = vperm.slane %v1069, 1
      %v1757 = vlaneseq
      %v1758 = vshrl.u32 %v1757, 7
      %1760 = vset.pattern.permute.xlu0 %v1758
      %1761 = vperm.xlu0 %1760, %v1756
      %v1762 = vpop.permute.xlu0 %1761
      %v1763 = vperm.slane %v1069, 2
      %v1764 = vlaneseq
      %v1765 = vshrl.u32 %v1764, 7
      %1767 = vset.pattern.permute.xlu0 %v1765
      %1768 = vperm.xlu0 %1767, %v1763
      %v1769 = vpop.permute.xlu0 %1768
      %v1770 = vperm.slane %v1069, 3
      %v1771 = vlaneseq
      %v1772 = vshrl.u32 %v1771, 7
      %1774 = vset.pattern.permute.xlu0 %v1772
      %1775 = vperm.xlu0 %1774, %v1770
      %v1776 = vpop.permute.xlu0 %1775
      %v1777 = vperm.slane %v1069, 4
      %v1778 = vlaneseq
      %v1779 = vshrl.u32 %v1778, 7
      %1781 = vset.pattern.permute.xlu0 %v1779
      %1782 = vperm.xlu0 %1781, %v1777
      %v1783 = vpop.permute.xlu0 %1782
      %v1784 = vperm.slane %v1069, 5
      %v1785 = vlaneseq
      %v1786 = vshrl.u32 %v1785, 7
      %1788 = vset.pattern.permute.xlu0 %v1786
      %1789 = vperm.xlu0 %1788, %v1784
      %v1790 = vpop.permute.xlu0 %1789
      %v1791 = vperm.slane %v1069, 6
      %v1792 = vlaneseq
      %v1793 = vshrl.u32 %v1792, 7
      %1795 = vset.pattern.permute.xlu0 %v1793
      %1796 = vperm.xlu0 %1795, %v1791
      %v1797 = vpop.permute.xlu0 %1796
      %v1798 = vperm.slane %v1069, 7
      %v1799 = vlaneseq
      %v1800 = vshrl.u32 %v1799, 7
      %1802 = vset.pattern.permute.xlu0 %v1800
      %1803 = vperm.xlu0 %1802, %v1798
      %v1804 = vpop.permute.xlu0 %1803
      %v1806 = vrot.slane %v1029, 1
      %v1807 = vrot.slane %v1029, 2
      %v1808 = vrot.slane %v1029, 3
      %v1809 = vrot.slane %v1029, 4
      %v1810 = vrot.slane %v1029, 5
      %v1811 = vrot.slane %v1029, 6
      %v1812 = vrot.slane %v1029, 7
      %v1813 = vperm.slane %v1029, 0
      %v1814 = vperm.slane %v1806, 0
      %v1815 = vperm.slane %v1807, 0
      %v1816 = vperm.slane %v1808, 0
      %v1817 = vperm.slane %v1809, 0
      %v1818 = vperm.slane %v1810, 0
      %v1819 = vperm.slane %v1811, 0
      %v1820 = vperm.slane %v1812, 0
      %v1829 = vmul.f32 %v1755, %v1813
      %v1830 = vmul.f32 %v1762, %v1814
      %v1831 = vmul.f32 %v1769, %v1815
      %v1832 = vmul.f32 %v1776, %v1816
      %v1833 = vmul.f32 %v1783, %v1817
      %v1834 = vmul.f32 %v1790, %v1818
      %v1835 = vmul.f32 %v1797, %v1819
      %v1836 = vmul.f32 %v1804, %v1820
      %v1837 = vadd.f32 %v1829, 0.0
      %v1838 = vadd.f32 %v1830, 0.0
      %v1839 = vadd.f32 %v1831, 0.0
      %v1840 = vadd.f32 %v1832, 0.0
      %v1841 = vadd.f32 %v1833, 0.0
      %v1842 = vadd.f32 %v1834, 0.0
      %v1843 = vadd.f32 %v1835, 0.0
      %v1844 = vadd.f32 %v1836, 0.0
      %v1845 = vperm.slane %v1089, 0
      %v1846 = vlaneseq
      %v1847 = vshrl.u32 %v1846, 7
      %1849 = vset.pattern.permute.xlu0 %v1847
      %1850 = vperm.xlu0 %1849, %v1845
      %v1851 = vpop.permute.xlu0 %1850
      %v1852 = vperm.slane %v1089, 1
      %v1853 = vlaneseq
      %v1854 = vshrl.u32 %v1853, 7
      %1856 = vset.pattern.permute.xlu0 %v1854
      %1857 = vperm.xlu0 %1856, %v1852
      %v1858 = vpop.permute.xlu0 %1857
      %v1859 = vperm.slane %v1089, 2
      %v1860 = vlaneseq
      %v1861 = vshrl.u32 %v1860, 7
      %1863 = vset.pattern.permute.xlu0 %v1861
      %1864 = vperm.xlu0 %1863, %v1859
      %v1865 = vpop.permute.xlu0 %1864
      %v1866 = vperm.slane %v1089, 3
      %v1867 = vlaneseq
      %v1868 = vshrl.u32 %v1867, 7
      %1870 = vset.pattern.permute.xlu0 %v1868
      %1871 = vperm.xlu0 %1870, %v1866
      %v1872 = vpop.permute.xlu0 %1871
      %v1873 = vperm.slane %v1089, 4
      %v1874 = vlaneseq
      %v1875 = vshrl.u32 %v1874, 7
      %1877 = vset.pattern.permute.xlu0 %v1875
      %1878 = vperm.xlu0 %1877, %v1873
      %v1879 = vpop.permute.xlu0 %1878
      %v1880 = vperm.slane %v1089, 5
      %v1881 = vlaneseq
      %v1882 = vshrl.u32 %v1881, 7
      %1884 = vset.pattern.permute.xlu0 %v1882
      %1885 = vperm.xlu0 %1884, %v1880
      %v1886 = vpop.permute.xlu0 %1885
      %v1887 = vperm.slane %v1089, 6
      %v1888 = vlaneseq
      %v1889 = vshrl.u32 %v1888, 7
      %1891 = vset.pattern.permute.xlu0 %v1889
      %1892 = vperm.xlu0 %1891, %v1887
      %v1893 = vpop.permute.xlu0 %1892
      %v1894 = vperm.slane %v1089, 7
      %v1895 = vlaneseq
      %v1896 = vshrl.u32 %v1895, 7
      %1898 = vset.pattern.permute.xlu0 %v1896
      %1899 = vperm.xlu0 %1898, %v1894
      %v1900 = vpop.permute.xlu0 %1899
      %v1902 = vrot.slane %v1049, 1
      %v1903 = vrot.slane %v1049, 2
      %v1904 = vrot.slane %v1049, 3
      %v1905 = vrot.slane %v1049, 4
      %v1906 = vrot.slane %v1049, 5
      %v1907 = vrot.slane %v1049, 6
      %v1908 = vrot.slane %v1049, 7
      %v1909 = vperm.slane %v1049, 0
      %v1910 = vperm.slane %v1902, 0
      %v1911 = vperm.slane %v1903, 0
      %v1912 = vperm.slane %v1904, 0
      %v1913 = vperm.slane %v1905, 0
      %v1914 = vperm.slane %v1906, 0
      %v1915 = vperm.slane %v1907, 0
      %v1916 = vperm.slane %v1908, 0
      %v1925 = vmul.f32 %v1851, %v1909
      %v1926 = vmul.f32 %v1858, %v1910
      %v1927 = vmul.f32 %v1865, %v1911
      %v1928 = vmul.f32 %v1872, %v1912
      %v1929 = vmul.f32 %v1879, %v1913
      %v1930 = vmul.f32 %v1886, %v1914
      %v1931 = vmul.f32 %v1893, %v1915
      %v1932 = vmul.f32 %v1900, %v1916
      %v1933 = vadd.f32 %v1837, %v1925
      %v1934 = vadd.f32 %v1838, %v1926
      %v1935 = vadd.f32 %v1839, %v1927
      %v1936 = vadd.f32 %v1840, %v1928
      %v1937 = vadd.f32 %v1841, %v1929
      %v1938 = vadd.f32 %v1842, %v1930
      %v1939 = vadd.f32 %v1843, %v1931
      %v1940 = vadd.f32 %v1844, %v1932
      %v1941 = vld [vmem:[%s6] sm:$0x7f]
      %v1942 = vadd.f32 %v1933, %v1941
      %v1943 = vadd.f32 %v1934, %v1941
      %v1944 = vadd.f32 %v1935, %v1941
      %v1945 = vadd.f32 %v1936, %v1941
      %v1946 = vadd.f32 %v1937, %v1941
      %v1947 = vadd.f32 %v1938, %v1941
      %v1948 = vadd.f32 %v1939, %v1941
      %v1949 = vadd.f32 %v1940, %v1941
      %vm1950 = vcmask 38912
      %v1951 = vsel %vm1950, %v1942, -inf
      %v1952 = vrot.slane %v1951, 4
      %v1953 = vmax.f32 %v1951, %v1952
      %v1954 = vrot.slane %v1953, 2
      %v1955 = vmax.f32 %v1953, %v1954
      %v1956 = vrot.slane %v1955, 1
      %v1957 = vmax.f32 %v1955, %v1956
      %v1958 = vsel %vm1950, %v1943, -inf
      %v1959 = vrot.slane %v1958, 4
      %v1960 = vmax.f32 %v1958, %v1959
      %v1961 = vrot.slane %v1960, 2
      %v1962 = vmax.f32 %v1960, %v1961
      %v1963 = vrot.slane %v1962, 1
      %v1964 = vmax.f32 %v1962, %v1963
      %v1965 = vsel %vm1950, %v1944, -inf
      %v1966 = vrot.slane %v1965, 4
      %v1967 = vmax.f32 %v1965, %v1966
      %v1968 = vrot.slane %v1967, 2
      %v1969 = vmax.f32 %v1967, %v1968
      %v1970 = vrot.slane %v1969, 1
      %v1971 = vmax.f32 %v1969, %v1970
      %v1972 = vsel %vm1950, %v1945, -inf
      %v1973 = vrot.slane %v1972, 4
      %v1974 = vmax.f32 %v1972, %v1973
      %v1975 = vrot.slane %v1974, 2
      %v1976 = vmax.f32 %v1974, %v1975
      %v1977 = vrot.slane %v1976, 1
      %v1978 = vmax.f32 %v1976, %v1977
      %v1979 = vsel %vm1950, %v1946, -inf
      %v1980 = vrot.slane %v1979, 4
      %v1981 = vmax.f32 %v1979, %v1980
      %v1982 = vrot.slane %v1981, 2
      %v1983 = vmax.f32 %v1981, %v1982
      %v1984 = vrot.slane %v1983, 1
      %v1985 = vmax.f32 %v1983, %v1984
      %v1986 = vsel %vm1950, %v1947, -inf
      %v1987 = vrot.slane %v1986, 4
      %v1988 = vmax.f32 %v1986, %v1987
      %v1989 = vrot.slane %v1988, 2
      %v1990 = vmax.f32 %v1988, %v1989
      %v1991 = vrot.slane %v1990, 1
      %v1992 = vmax.f32 %v1990, %v1991
      %v1993 = vsel %vm1950, %v1948, -inf
      %v1994 = vrot.slane %v1993, 4
      %v1995 = vmax.f32 %v1993, %v1994
      %v1996 = vrot.slane %v1995, 2
      %v1997 = vmax.f32 %v1995, %v1996
      %v1998 = vrot.slane %v1997, 1
      %v1999 = vmax.f32 %v1997, %v1998
      %v2000 = vsel %vm1950, %v1949, -inf
      %v2001 = vrot.slane %v2000, 4
      %v2002 = vmax.f32 %v2000, %v2001
      %v2003 = vrot.slane %v2002, 2
      %v2004 = vmax.f32 %v2002, %v2003
      %v2005 = vrot.slane %v2004, 1
      %v2006 = vmax.f32 %v2004, %v2005
      %v2007 = vsub.f32 %v1942, %v1957
      %v2008 = vsub.f32 %v1943, %v1964
      %v2009 = vsub.f32 %v1944, %v1971
      %v2010 = vsub.f32 %v1945, %v1978
      %v2011 = vsub.f32 %v1946, %v1985
      %v2012 = vsub.f32 %v1947, %v1992
      %v2013 = vsub.f32 %v1948, %v1999
      %v2014 = vsub.f32 %v1949, %v2006
      %v2015 = vmul.f32 %v2007, 1.442695
      %v2016 = vpow.pop %v2015
      %v2017 = vmul.f32 %v2008, 1.442695
      %v2018 = vpow.pop %v2017
      %v2019 = vmul.f32 %v2009, 1.442695
      %v2020 = vpow.pop %v2019
      %v2021 = vmul.f32 %v2010, 1.442695
      %v2022 = vpow.pop %v2021
      %v2023 = vmul.f32 %v2011, 1.442695
      %v2024 = vpow.pop %v2023
      %v2025 = vmul.f32 %v2012, 1.442695
      %v2026 = vpow.pop %v2025
      %v2027 = vmul.f32 %v2013, 1.442695
      %v2028 = vpow.pop %v2027
      %v2029 = vmul.f32 %v2014, 1.442695
      %v2030 = vpow.pop %v2029
      %v2031 = vsel %vm1950, %v2016, 0.0
      %v2032 = vrot.slane %v2031, 4
      %v2033 = vadd.f32 %v2031, %v2032
      %v2034 = vrot.slane %v2033, 2
      %v2035 = vadd.f32 %v2033, %v2034
      %v2036 = vrot.slane %v2035, 1
      %v2037 = vadd.f32 %v2035, %v2036
      %v2038 = vsel %vm1950, %v2018, 0.0
      %v2039 = vrot.slane %v2038, 4
      %v2040 = vadd.f32 %v2038, %v2039
      %v2041 = vrot.slane %v2040, 2
      %v2042 = vadd.f32 %v2040, %v2041
      %v2043 = vrot.slane %v2042, 1
      %v2044 = vadd.f32 %v2042, %v2043
      %v2045 = vsel %vm1950, %v2020, 0.0
      %v2046 = vrot.slane %v2045, 4
      %v2047 = vadd.f32 %v2045, %v2046
      %v2048 = vrot.slane %v2047, 2
      %v2049 = vadd.f32 %v2047, %v2048
      %v2050 = vrot.slane %v2049, 1
      %v2051 = vadd.f32 %v2049, %v2050
      %v2052 = vsel %vm1950, %v2022, 0.0
      %v2053 = vrot.slane %v2052, 4
      %v2054 = vadd.f32 %v2052, %v2053
      %v2055 = vrot.slane %v2054, 2
      %v2056 = vadd.f32 %v2054, %v2055
      %v2057 = vrot.slane %v2056, 1
      %v2058 = vadd.f32 %v2056, %v2057
      %v2059 = vsel %vm1950, %v2024, 0.0
      %v2060 = vrot.slane %v2059, 4
      %v2061 = vadd.f32 %v2059, %v2060
      %v2062 = vrot.slane %v2061, 2
      %v2063 = vadd.f32 %v2061, %v2062
      %v2064 = vrot.slane %v2063, 1
      %v2065 = vadd.f32 %v2063, %v2064
      %v2066 = vsel %vm1950, %v2026, 0.0
      %v2067 = vrot.slane %v2066, 4
      %v2068 = vadd.f32 %v2066, %v2067
      %v2069 = vrot.slane %v2068, 2
      %v2070 = vadd.f32 %v2068, %v2069
      %v2071 = vrot.slane %v2070, 1
      %v2072 = vadd.f32 %v2070, %v2071
      %v2073 = vsel %vm1950, %v2028, 0.0
      %v2074 = vrot.slane %v2073, 4
      %v2075 = vadd.f32 %v2073, %v2074
      %v2076 = vrot.slane %v2075, 2
      %v2077 = vadd.f32 %v2075, %v2076
      %v2078 = vrot.slane %v2077, 1
      %v2079 = vadd.f32 %v2077, %v2078
      %v2080 = vsel %vm1950, %v2030, 0.0
      %v2081 = vrot.slane %v2080, 4
      %v2082 = vadd.f32 %v2080, %v2081
      %v2083 = vrot.slane %v2082, 2
      %v2084 = vadd.f32 %v2082, %v2083
      %v2085 = vrot.slane %v2084, 1
      %v2086 = vadd.f32 %v2084, %v2085
      %v2087 = vrcp.pop %v2037
      %v2088 = vmul.f32 %v2037, %v2087
      %v2089 = vsub.f32 1.0, %v2088
      %v2090 = vmul.f32 %v2087, %v2089
      %v2091 = vadd.f32 %v2087, %v2090
      %vm2092 = vweird.f32 %v2037
      %vm2093 = vweird.f32 %v2087
      %vm2094 = vmor %vm2092, %vm2093
      %v2095 = vsel %vm2094, %v2087, %v2091
      %v2096 = vand.u32 2147483647, %v2037
      %vm2097 = vcmp.eq.f32.partialorder %v2096, 8.507059e+37
      %v2098 = vand.u32 %v2037, 2147483648
      %v2099 = vor.u32 1.1754944e-38, %v2098
      %v2100 = vsel %vm2097, %v2099, %v2095
      %v2101 = vmul.f32 %v2016, %v2100
      %v2102 = vrcp.pop %v2044
      %v2103 = vmul.f32 %v2044, %v2102
      %v2104 = vsub.f32 1.0, %v2103
      %v2105 = vmul.f32 %v2102, %v2104
      %v2106 = vadd.f32 %v2102, %v2105
      %vm2107 = vweird.f32 %v2044
      %vm2108 = vweird.f32 %v2102
      %vm2109 = vmor %vm2107, %vm2108
      %v2110 = vsel %vm2109, %v2102, %v2106
      %v2111 = vand.u32 2147483647, %v2044
      %vm2112 = vcmp.eq.f32.partialorder %v2111, 8.507059e+37
      %v2113 = vand.u32 %v2044, 2147483648
      %v2114 = vor.u32 1.1754944e-38, %v2113
      %v2115 = vsel %vm2112, %v2114, %v2110
      %v2116 = vmul.f32 %v2018, %v2115
      %v2117 = vrcp.pop %v2051
      %v2118 = vmul.f32 %v2051, %v2117
      %v2119 = vsub.f32 1.0, %v2118
      %v2120 = vmul.f32 %v2117, %v2119
      %v2121 = vadd.f32 %v2117, %v2120
      %vm2122 = vweird.f32 %v2051
      %vm2123 = vweird.f32 %v2117
      %vm2124 = vmor %vm2122, %vm2123
      %v2125 = vsel %vm2124, %v2117, %v2121
      %v2126 = vand.u32 2147483647, %v2051
      %vm2127 = vcmp.eq.f32.partialorder %v2126, 8.507059e+37
      %v2128 = vand.u32 %v2051, 2147483648
      %v2129 = vor.u32 1.1754944e-38, %v2128
      %v2130 = vsel %vm2127, %v2129, %v2125
      %v2131 = vmul.f32 %v2020, %v2130
      %v2132 = vrcp.pop %v2058
      %v2133 = vmul.f32 %v2058, %v2132
      %v2134 = vsub.f32 1.0, %v2133
      %v2135 = vmul.f32 %v2132, %v2134
      %v2136 = vadd.f32 %v2132, %v2135
      %vm2137 = vweird.f32 %v2058
      %vm2138 = vweird.f32 %v2132
      %vm2139 = vmor %vm2137, %vm2138
      %v2140 = vsel %vm2139, %v2132, %v2136
      %v2141 = vand.u32 2147483647, %v2058
      %vm2142 = vcmp.eq.f32.partialorder %v2141, 8.507059e+37
      %v2143 = vand.u32 %v2058, 2147483648
      %v2144 = vor.u32 1.1754944e-38, %v2143
      %v2145 = vsel %vm2142, %v2144, %v2140
      %v2146 = vmul.f32 %v2022, %v2145
      %v2147 = vrcp.pop %v2065
      %v2148 = vmul.f32 %v2065, %v2147
      %v2149 = vsub.f32 1.0, %v2148
      %v2150 = vmul.f32 %v2147, %v2149
      %v2151 = vadd.f32 %v2147, %v2150
      %vm2152 = vweird.f32 %v2065
      %vm2153 = vweird.f32 %v2147
      %vm2154 = vmor %vm2152, %vm2153
      %v2155 = vsel %vm2154, %v2147, %v2151
      %v2156 = vand.u32 2147483647, %v2065
      %vm2157 = vcmp.eq.f32.partialorder %v2156, 8.507059e+37
      %v2158 = vand.u32 %v2065, 2147483648
      %v2159 = vor.u32 1.1754944e-38, %v2158
      %v2160 = vsel %vm2157, %v2159, %v2155
      %v2161 = vmul.f32 %v2024, %v2160
      %v2162 = vrcp.pop %v2072
      %v2163 = vmul.f32 %v2072, %v2162
      %v2164 = vsub.f32 1.0, %v2163
      %v2165 = vmul.f32 %v2162, %v2164
      %v2166 = vadd.f32 %v2162, %v2165
      %vm2167 = vweird.f32 %v2072
      %vm2168 = vweird.f32 %v2162
      %vm2169 = vmor %vm2167, %vm2168
      %v2170 = vsel %vm2169, %v2162, %v2166
      %v2171 = vand.u32 2147483647, %v2072
      %vm2172 = vcmp.eq.f32.partialorder %v2171, 8.507059e+37
      %v2173 = vand.u32 %v2072, 2147483648
      %v2174 = vor.u32 1.1754944e-38, %v2173
      %v2175 = vsel %vm2172, %v2174, %v2170
      %v2176 = vmul.f32 %v2026, %v2175
      %v2177 = vrcp.pop %v2079
      %v2178 = vmul.f32 %v2079, %v2177
      %v2179 = vsub.f32 1.0, %v2178
      %v2180 = vmul.f32 %v2177, %v2179
      %v2181 = vadd.f32 %v2177, %v2180
      %vm2182 = vweird.f32 %v2079
      %vm2183 = vweird.f32 %v2177
      %vm2184 = vmor %vm2182, %vm2183
      %v2185 = vsel %vm2184, %v2177, %v2181
      %v2186 = vand.u32 2147483647, %v2079
      %vm2187 = vcmp.eq.f32.partialorder %v2186, 8.507059e+37
      %v2188 = vand.u32 %v2079, 2147483648
      %v2189 = vor.u32 1.1754944e-38, %v2188
      %v2190 = vsel %vm2187, %v2189, %v2185
      %v2191 = vmul.f32 %v2028, %v2190
      %v2192 = vrcp.pop %v2086
      %v2193 = vmul.f32 %v2086, %v2192
      %v2194 = vsub.f32 1.0, %v2193
      %v2195 = vmul.f32 %v2192, %v2194
      %v2196 = vadd.f32 %v2192, %v2195
      %vm2197 = vweird.f32 %v2086
      %vm2198 = vweird.f32 %v2192
      %vm2199 = vmor %vm2197, %vm2198
      %v2200 = vsel %vm2199, %v2192, %v2196
      %v2201 = vand.u32 2147483647, %v2086
      %vm2202 = vcmp.eq.f32.partialorder %v2201, 8.507059e+37
      %v2203 = vand.u32 %v2086, 2147483648
      %v2204 = vor.u32 1.1754944e-38, %v2203
      %v2205 = vsel %vm2202, %v2204, %v2200
      %v2206 = vmul.f32 %v2030, %v2205
      %v2207 = vperm.slane %v1609, %v680
      %v2208 = vperm.slane %v1612, %v680
      %v2209 = vperm.slane %v1615, %v680
      %v2210 = vperm.slane %v1618, %v680
      %v2211 = vperm.slane %v1621, %v680
      %v2212 = vperm.slane %v1624, %v680
      %v2213 = vperm.slane %v1627, %v680
      %v2214 = vperm.slane %v1630, %v680
      %v2215 = vsel %vm817, %v2207, %v2207
      %v2216 = vsel %vm819, %v2207, %v2215
      %v2217 = vsel %vm821, %v2207, %v2216
      %v2218 = vsel %vm823, %v2207, %v2217
      %v2219 = vsel %vm825, %v2207, %v2218
      %v2220 = vsel %vm817, %v2208, %v2208
      %v2221 = vsel %vm819, %v2208, %v2220
      %v2222 = vsel %vm821, %v2208, %v2221
      %v2223 = vsel %vm823, %v2208, %v2222
      %v2224 = vsel %vm825, %v2208, %v2223
      %v2225 = vsel %vm817, %v2209, %v2209
      %v2226 = vsel %vm819, %v2209, %v2225
      %v2227 = vsel %vm821, %v2209, %v2226
      %v2228 = vsel %vm823, %v2209, %v2227
      %v2229 = vsel %vm825, %v2209, %v2228
      %v2230 = vsel %vm817, %v2210, %v2210
      %v2231 = vsel %vm819, %v2210, %v2230
      %v2232 = vsel %vm821, %v2210, %v2231
      %v2233 = vsel %vm823, %v2210, %v2232
      %v2234 = vsel %vm825, %v2210, %v2233
      %v2235 = vsel %vm817, %v2211, %v2211
      %v2236 = vsel %vm819, %v2211, %v2235
      %v2237 = vsel %vm821, %v2211, %v2236
      %v2238 = vsel %vm823, %v2211, %v2237
      %v2239 = vsel %vm825, %v2211, %v2238
      %v2240 = vsel %vm817, %v2212, %v2212
      %v2241 = vsel %vm819, %v2212, %v2240
      %v2242 = vsel %vm821, %v2212, %v2241
      %v2243 = vsel %vm823, %v2212, %v2242
      %v2244 = vsel %vm825, %v2212, %v2243
      %v2245 = vsel %vm817, %v2213, %v2213
      %v2246 = vsel %vm819, %v2213, %v2245
      %v2247 = vsel %vm821, %v2213, %v2246
      %v2248 = vsel %vm823, %v2213, %v2247
      %v2249 = vsel %vm825, %v2213, %v2248
      %v2250 = vsel %vm817, %v2214, %v2214
      %v2251 = vsel %vm819, %v2214, %v2250
      %v2252 = vsel %vm821, %v2214, %v2251
      %v2253 = vsel %vm823, %v2214, %v2252
      %v2254 = vsel %vm825, %v2214, %v2253
      %v2263 = vmul.f32 %v2101, %v2219
      %v2264 = vmul.f32 %v2116, %v2224
      %v2265 = vmul.f32 %v2131, %v2229
      %v2266 = vmul.f32 %v2146, %v2234
      %v2267 = vmul.f32 %v2161, %v2239
      %v2268 = vmul.f32 %v2176, %v2244
      %v2269 = vmul.f32 %v2191, %v2249
      %v2270 = vmul.f32 %v2206, %v2254
      %v2271 = vsel %vm1950, %v2263, 0.0
      %2272 = vadd.xlane.f32.xlu0 %v2271
      %v2273 = vpop.xlane.xlu0 %2272
      %v2274 = vsel %vm1950, %v2264, 0.0
      %2275 = vadd.xlane.f32.xlu0 %v2274
      %v2276 = vpop.xlane.xlu0 %2275
      %v2277 = vsel %vm1950, %v2265, 0.0
      %2278 = vadd.xlane.f32.xlu0 %v2277
      %v2279 = vpop.xlane.xlu0 %2278
      %v2280 = vsel %vm1950, %v2266, 0.0
      %2281 = vadd.xlane.f32.xlu0 %v2280
      %v2282 = vpop.xlane.xlu0 %2281
      %v2283 = vsel %vm1950, %v2267, 0.0
      %2284 = vadd.xlane.f32.xlu0 %v2283
      %v2285 = vpop.xlane.xlu0 %2284
      %v2286 = vsel %vm1950, %v2268, 0.0
      %2287 = vadd.xlane.f32.xlu0 %v2286
      %v2288 = vpop.xlane.xlu0 %2287
      %v2289 = vsel %vm1950, %v2269, 0.0
      %2290 = vadd.xlane.f32.xlu0 %v2289
      %v2291 = vpop.xlane.xlu0 %2290
      %v2292 = vsel %vm1950, %v2270, 0.0
      %2293 = vadd.xlane.f32.xlu0 %v2292
      %v2294 = vpop.xlane.xlu0 %2293
      %v2303 = vperm.slane %v2273, %v682
      %v2304 = vperm.slane %v2276, %v682
      %v2305 = vperm.slane %v2279, %v682
      %v2306 = vperm.slane %v2282, %v682
      %v2307 = vperm.slane %v2285, %v682
      %v2308 = vperm.slane %v2288, %v682
      %v2309 = vperm.slane %v2291, %v682
      %v2310 = vperm.slane %v2294, %v682
      %v2311 = vsel %vm815, %v2304, %v2303
      %v2312 = vsel %vm817, %v2305, %v2311
      %v2313 = vsel %vm819, %v2306, %v2312
      %v2314 = vsel %vm821, %v2307, %v2313
      %v2315 = vsel %vm823, %v2308, %v2314
      %v2316 = vsel %vm825, %v2309, %v2315
      %v2317 = vsel %vm827, %v2310, %v2316
      %vm2319 = vcmask 121920
      %2320 = vst.msk [vmem:[%s281] sm:$0xff] %vm2319, %v2317
      %v2329 = vrot.slane %v2116, 7
      %v2330 = vsel %vm815, %v2329, %v2101
      %v2331 = vrot.slane %v2131, 6
      %v2332 = vsel %vm817, %v2331, %v2330
      %v2333 = vrot.slane %v2146, 5
      %v2334 = vsel %vm819, %v2333, %v2332
      %v2335 = vrot.slane %v2161, 4
      %v2336 = vsel %vm821, %v2335, %v2334
      %v2337 = vrot.slane %v2176, 3
      %v2338 = vsel %vm823, %v2337, %v2336
      %v2339 = vrot.slane %v2191, 2
      %v2340 = vsel %vm825, %v2339, %v2338
      %v2341 = vrot.slane %v2206, 1
      %v2342 = vsel %vm827, %v2341, %v2340
      %2343 = vrot.lane.b32.xlu0 %v2342, 30
      %v2344 = vpop.permute.xlu0 %2343
      %vm2346 = vcmask 285936
      %2347 = vst.msk [vmem:[%s281] sm:$0xff] %vm2346, %v2344
      %v2348 = vsel %vm817, %v2329, %v2101
      %v2349 = vsel %vm819, %v2331, %v2348
      %v2350 = vsel %vm821, %v2333, %v2349
      %v2351 = vsel %vm823, %v2335, %v2350
      %v2352 = vsel %vm825, %v2337, %v2351
      %v2353 = vsel %vm827, %v2339, %v2352
      %2354 = vrot.lane.b32.xlu0 %v2353, 35
      %v2355 = vpop.permute.xlu0 %2354
      %2356 = vrot.lane.b32.xlu0 %v2341, 35
      %v2357 = vpop.permute.xlu0 %2356
      %vm2360 = vcmask 326937
      %2361 = vst.msk [vmem:[%s281 - $0x1] sm:$0xfe] %vm2360, %v2355
      %vm2362 = vcmask 319768
      %2363 = vst.msk [vmem:[%s281 + $0x7] sm:$0x1] %vm2362, %v2357
      %v2364 = vsel %vm819, %v2329, %v2101
      %v2365 = vsel %vm821, %v2331, %v2364
      %v2366 = vsel %vm823, %v2333, %v2365
      %v2367 = vsel %vm825, %v2335, %v2366
      %v2368 = vsel %vm827, %v2337, %v2367
      %v2369 = vsel %vm815, %v2341, %v2339
      %2370 = vrot.lane.b32.xlu0 %v2368, 40
      %v2371 = vpop.permute.xlu0 %2370
      %2372 = vrot.lane.b32.xlu0 %v2369, 40
      %v2373 = vpop.permute.xlu0 %2372
      %vm2376 = vcmask 367938
      %2377 = vst.msk [vmem:[%s281 - $0x2] sm:$0xfc] %vm2376, %v2371
      %vm2378 = vcmask 361792
      %2379 = vst.msk [vmem:[%s281 + $0x6] sm:$0x3] %vm2378, %v2373
      %v2380 = vsel %vm821, %v2329, %v2101
      %v2381 = vsel %vm823, %v2331, %v2380
      %v2382 = vsel %vm825, %v2333, %v2381
      %v2383 = vsel %vm827, %v2335, %v2382
      %v2384 = vsel %vm815, %v2339, %v2337
      %v2385 = vsel %vm817, %v2341, %v2384
      %2386 = vrot.lane.b32.xlu0 %v2383, 45
      %v2387 = vpop.permute.xlu0 %2386
      %2388 = vrot.lane.b32.xlu0 %v2385, 45
      %v2389 = vpop.permute.xlu0 %2388
      %vm2392 = vcmask 408939
      %2393 = vst.msk [vmem:[%s281 - $0x3] sm:$0xf8] %vm2392, %v2387
      %vm2394 = vcmask 403816
      %2395 = vst.msk [vmem:[%s281 + $0x5] sm:$0x7] %vm2394, %v2389
      %v2396 = vsel %vm823, %v2329, %v2101
      %v2397 = vsel %vm825, %v2331, %v2396
      %v2398 = vsel %vm827, %v2333, %v2397
      %v2399 = vsel %vm815, %v2337, %v2335
      %v2400 = vsel %vm817, %v2339, %v2399
      %v2401 = vsel %vm819, %v2341, %v2400
      %2402 = vrot.lane.b32.xlu0 %v2398, 50
      %v2403 = vpop.permute.xlu0 %2402
      %2404 = vrot.lane.b32.xlu0 %v2401, 50
      %v2405 = vpop.permute.xlu0 %2404
      %vm2408 = vcmask 449940
      %2409 = vst.msk [vmem:[%s281 - $0x4] sm:$0xf0] %vm2408, %v2403
      %vm2410 = vcmask 445840
      %2411 = vst.msk [vmem:[%s281 + $0x4] sm:$0xf] %vm2410, %v2405
      %v2412 = vsel %vm825, %v2329, %v2101
      %v2413 = vsel %vm827, %v2331, %v2412
      %v2414 = vsel %vm815, %v2335, %v2333
      %v2415 = vsel %vm817, %v2337, %v2414
      %v2416 = vsel %vm819, %v2339, %v2415
      %v2417 = vsel %vm821, %v2341, %v2416
      %2418 = vrot.lane.b32.xlu0 %v2413, 55
      %v2419 = vpop.permute.xlu0 %2418
      %2420 = vrot.lane.b32.xlu0 %v2417, 55
      %v2421 = vpop.permute.xlu0 %2420
      %vm2424 = vcmask 490941
      %2425 = vst.msk [vmem:[%s281 - $0x5] sm:$0xe0] %vm2424, %v2419
      %vm2426 = vcmask 487864
      %2427 = vst.msk [vmem:[%s281 + $0x3] sm:$0x1f] %vm2426, %v2421
      %v2428 = vsel %vm827, %v2329, %v2101
      %v2429 = vsel %vm815, %v2333, %v2331
      %v2430 = vsel %vm817, %v2335, %v2429
      %v2431 = vsel %vm819, %v2337, %v2430
      %v2432 = vsel %vm821, %v2339, %v2431
      %v2433 = vsel %vm823, %v2341, %v2432
      %2434 = vrot.lane.b32.xlu0 %v2428, 60
      %v2435 = vpop.permute.xlu0 %2434
      %2436 = vrot.lane.b32.xlu0 %v2433, 60
      %v2437 = vpop.permute.xlu0 %2436
      %vm2440 = vcmask 531942
      %2441 = vst.msk [vmem:[%s281 - $0x6] sm:$0xc0] %vm2440, %v2435
      %vm2442 = vcmask 529888
      %2443 = vst.msk [vmem:[%s281 + $0x2] sm:$0x3f] %vm2442, %v2437
      %vm2444 = vcmask 1048072
      %2445 = vst.msk [vmem:[%s281] sm:$0xff] %vm2444, 0.0
      %p2446 = scmp.lt.s32.totalorder %s18, 1
      %s2447 = scalar_select %p2446, %s18, 1
      %s2448 = smul.addr %s2447, 8
      %s2449 = scalar_lea.vmem %s7, %s2448
      // Predicated region
      $region49: #{resnet_transition_forward.1} parent=47 // pred_check
        %p2450 = pneg %p188
      $region50: #{resnet_transition_forward.1} parent=47 // pred_check_branch
        %2452 = sbr.rel (%p2450) target = $region52
      $region51: #{resnet_transition_forward.1} parent=47 // pred_region
        _
      $region52: #{resnet_transition_forward.1} parent=47 // pred_fallthru
        _
    $region48: #{resnet_transition_forward.1} parent=5 // pred_fallthru
      _
    %p2453 = scmp.le.s32.totalorder 2, %s13
    // Predicated region
    $region53: #{resnet_transition_forward.1} parent=5 // pred_check
      %p2454 = pneg %p2453
    $region54: #{resnet_transition_forward.1} parent=5 // pred_check_branch
      %2456 = sbr.rel (%p2454) target = $region56
    $region55: #{resnet_transition_forward.1} parent=5 // pred_region
      %s2457 = ssub.s32 %s13, 2
      // Predicated region
      $region57: #{resnet_transition_forward.1} parent=55 // pred_check
        %p2458 = pneg %p194
      $region58: #{resnet_transition_forward.1} parent=55 // pred_check_branch
        %2460 = sbr.rel (%p2458) target = $region60
      $region59: #{resnet_transition_forward.1} parent=55 // pred_region
        %p2461 = scmp.lt.s32.totalorder %s19, 1
        %s2462 = scalar_select %p2461, %s19, 1
        %s2463 = smul.addr %s2462, 8
        %s2464 = scalar_lea.vmem %s7, %s2463
      $region60: #{resnet_transition_forward.1} parent=55 // pred_fallthru
        _
    $region56: #{resnet_transition_forward.1} parent=5 // pred_fallthru
      _
  $region6: #{resnet_transition_forward.1} parent=0 // loop_footer
    %s17 = sadd.s32 1, %s13
  $region7: #{resnet_transition_forward.1} parent=0 // loop_footer_branch
    %12 = sbr.rel target = $region3
  $region8: #{resnet_transition_forward.1} parent=0 // loop_exit
    _

// kernel: resnet_transition_forward.1
$region0: #{resnet_transition_forward.1}
  #allocation0 [shape = 'u32[]', space=smem, size = 0x4, offset = 0x4, fixed_abs, tag = 'smem constant byte address 0x4 - core index']
  #allocation1 [shape = 'u32[72,128]{1,0:T(1,128)}', space=vmem, size = 0x9000, scoped, tag = 'internal scratch']
  %s0 = inlined_call_operand.vmem [shape: bf16[16,64,16], index: 0, kind: input, shape index: {}]
  %s1 = inlined_call_operand.vmem [shape: f32[64,24], index: 1, kind: input, shape index: {}]
  %s2 = inlined_call_operand.vmem [shape: f32[1,24], index: 2, kind: input, shape index: {}]
  %s3 = inlined_call_operand.vmem [shape: f32[24,1152], index: 3, kind: input, shape index: {}]
  %s4 = inlined_call_operand.vmem [shape: f32[1,1152], index: 4, kind: input, shape index: {}]
  %s5 = inlined_call_operand.vmem [shape: f32[5,3], index: 5, kind: input, shape index: {}]
  %s6 = inlined_call_operand.vmem [shape: f32[7,5], index: 6, kind: input, shape index: {}]
  %s7 = inlined_call_operand.vmem [shape: f32[16,128], index: 7, kind: output, shape index: {}]
  %s8 = sld [smem:[#allocation0]]
  $region61: #{resnet_transition_forward.1} parent=0
    _
  %s10 = ssub.s32 1, %s8
  %s11 = scalar_select 0, %s10, %s8
  loop: start=0, step=1, limit=4
  $region2: #{resnet_transition_forward.1} parent=0 // loop_pre_header
    _
  $region3: #{resnet_transition_forward.1} parent=0 // loop_header
    %s13 = sphi 0, %s17
    %p14 = scmp.ge.s32.totalorder %s13, 4
    %s23 = sphi 0, %s25
    %s26 = sphi 0, %s23
    %s27 = sphi 0, %s26
    %s43 = sphi 0, %s27
    %s47 = sphi 0, %s47
    %s49 = sphi 0, %s47
    %s50 = sphi 0, %s49
    %s64 = sphi 0, %s50
    %s68 = sphi 0, %s68
    %s70 = sphi 0, %s68
    %s71 = sphi 0, %s70
    %s85 = sphi 0, %s71
    %s89 = sphi 0, %s89
    %s91 = sphi 0, %s89
    %s92 = sphi 0, %s91
    %s106 = sphi 0, %s92
    %s110 = sphi 0, %s110
    %s112 = sphi 0, %s110
    %s113 = sphi 0, %s112
    %s127 = sphi 0, %s113
    %s131 = sphi 0, %s131
    %s133 = sphi 0, %s131
    %s134 = sphi 0, %s133
    %s148 = sphi 0, %s134
    %s152 = sphi 0, %s152
    %s154 = sphi 0, %s152
    %s155 = sphi 0, %s154
    %s169 = sphi 0, %s155
    %s175 = sphi 0, %s177
    %s178 = sphi 0, %s175
    %s179 = sphi 0, %s178
    %s195 = sphi 0, %s179
  $region4: #{resnet_transition_forward.1} parent=0 // loop_header_branch
    %16 = sbr.rel (%p14) target = $region8
  $region5: #{resnet_transition_forward.1} parent=0 // loop_body
    %s18 = ssub.s32 %s13, 1
    %s19 = ssub.s32 %s13, 2
    %s20 = sadd.s32 %s13, 1
    %s21 = ssub.s32 %s13, %s20
    %p22 = scmp.eq.s32.totalorder %s21, 0
    %s24 = sadd.s32 %s23, 1
    %s25 = scalar_select %p22, %s23, %s24
    %p28 = pneg %p22
    %p29 = scmp.eq.s32.totalorder %s13, 1
    %p30 = por %p28, %p29
    %p31 = scmp.ne.s32.totalorder %s23, %s26
    %p32 = scmp.eq.s32.totalorder %s13, 0
    %p33 = por %p31, %p32
    %p34 = scmp.ne.s32.totalorder %s23, %s26
    %p35 = scmp.eq.s32.totalorder %s18, 1
    %p36 = por %p34, %p35
    %p37 = scmp.ne.s32.totalorder %s26, %s27
    %p38 = scmp.eq.s32.totalorder %s18, 0
    %p39 = por %p37, %p38
    %p40 = scmp.ne.s32.totalorder %s26, %s27
    %p41 = scmp.eq.s32.totalorder %s19, 1
    %p42 = por %p40, %p41
    %p44 = scmp.ne.s32.totalorder %s27, %s43
    %p45 = scmp.eq.s32.totalorder %s19, 0
    %p46 = por %p44, %p45
    %s48 = sadd.s32 %s47, 1
    %p51 = scmp.eq.s32.totalorder %s13, 1
    %p52 = scmp.ne.s32.totalorder %s47, %s49
    %p53 = scmp.eq.s32.totalorder %s13, 0
    %p54 = por %p52, %p53
    %p55 = scmp.ne.s32.totalorder %s47, %s49
    %p56 = scmp.eq.s32.totalorder %s18, 1
    %p57 = por %p55, %p56
    %p58 = scmp.ne.s32.totalorder %s49, %s50
    %p59 = scmp.eq.s32.totalorder %s18, 0
    %p60 = por %p58, %p59
    %p61 = scmp.ne.s32.totalorder %s49, %s50
    %p62 = scmp.eq.s32.totalorder %s19, 1
    %p63 = por %p61, %p62
    %p65 = scmp.ne.s32.totalorder %s50, %s64
    %p66 = scmp.eq.s32.totalorder %s19, 0
    %p67 = por %p65, %p66
    %s69 = sadd.s32 %s68, 1
    %p72 = scmp.eq.s32.totalorder %s13, 1
    %p73 = scmp.ne.s32.totalorder %s68, %s70
    %p74 = scmp.eq.s32.totalorder %s13, 0
    %p75 = por %p73, %p74
    %p76 = scmp.ne.s32.totalorder %s68, %s70
    %p77 = scmp.eq.s32.totalorder %s18, 1
    %p78 = por %p76, %p77
    %p79 = scmp.ne.s32.totalorder %s70, %s71
    %p80 = scmp.eq.s32.totalorder %s18, 0
    %p81 = por %p79, %p80
    %p82 = scmp.ne.s32.totalorder %s70, %s71
    %p83 = scmp.eq.s32.totalorder %s19, 1
    %p84 = por %p82, %p83
    %p86 = scmp.ne.s32.totalorder %s71, %s85
    %p87 = scmp.eq.s32.totalorder %s19, 0
    %p88 = por %p86, %p87
    %s90 = sadd.s32 %s89, 1
    %p93 = scmp.eq.s32.totalorder %s13, 1
    %p94 = scmp.ne.s32.totalorder %s89, %s91
    %p95 = scmp.eq.s32.totalorder %s13, 0
    %p96 = por %p94, %p95
    %p97 = scmp.ne.s32.totalorder %s89, %s91
    %p98 = scmp.eq.s32.totalorder %s18, 1
    %p99 = por %p97, %p98
    %p100 = scmp.ne.s32.totalorder %s91, %s92
    %p101 = scmp.eq.s32.totalorder %s18, 0
    %p102 = por %p100, %p101
    %p103 = scmp.ne.s32.totalorder %s91, %s92
    %p104 = scmp.eq.s32.totalorder %s19, 1
    %p105 = por %p103, %p104
    %p107 = scmp.ne.s32.totalorder %s92, %s106
    %p108 = scmp.eq.s32.totalorder %s19, 0
    %p109 = por %p107, %p108
    %s111 = sadd.s32 %s110, 1
    %p114 = scmp.eq.s32.totalorder %s13, 1
    %p115 = scmp.ne.s32.totalorder %s110, %s112
    %p116 = scmp.eq.s32.totalorder %s13, 0
    %p117 = por %p115, %p116
    %p118 = scmp.ne.s32.totalorder %s110, %s112
    %p119 = scmp.eq.s32.totalorder %s18, 1
    %p120 = por %p118, %p119
    %p121 = scmp.ne.s32.totalorder %s112, %s113
    %p122 = scmp.eq.s32.totalorder %s18, 0
    %p123 = por %p121, %p122
    %p124 = scmp.ne.s32.totalorder %s112, %s113
    %p125 = scmp.eq.s32.totalorder %s19, 1
    %p126 = por %p124, %p125
    %p128 = scmp.ne.s32.totalorder %s113, %s127
    %p129 = scmp.eq.s32.totalorder %s19, 0
    %p130 = por %p128, %p129
    %s132 = sadd.s32 %s131, 1
    %p135 = scmp.eq.s32.totalorder %s13, 1
    %p136 = scmp.ne.s32.totalorder %s131, %s133
    %p137 = scmp.eq.s32.totalorder %s13, 0
    %p138 = por %p136, %p137
    %p139 = scmp.ne.s32.totalorder %s131, %s133
    %p140 = scmp.eq.s32.totalorder %s18, 1
    %p141 = por %p139, %p140
    %p142 = scmp.ne.s32.totalorder %s133, %s134
    %p143 = scmp.eq.s32.totalorder %s18, 0
    %p144 = por %p142, %p143
    %p145 = scmp.ne.s32.totalorder %s133, %s134
    %p146 = scmp.eq.s32.totalorder %s19, 1
    %p147 = por %p145, %p146
    %p149 = scmp.ne.s32.totalorder %s134, %s148
    %p150 = scmp.eq.s32.totalorder %s19, 0
    %p151 = por %p149, %p150
    %s153 = sadd.s32 %s152, 1
    %p156 = scmp.eq.s32.totalorder %s13, 1
    %p157 = scmp.ne.s32.totalorder %s152, %s154
    %p158 = scmp.eq.s32.totalorder %s13, 0
    %p159 = por %p157, %p158
    %p160 = scmp.ne.s32.totalorder %s152, %s154
    %p161 = scmp.eq.s32.totalorder %s18, 1
    %p162 = por %p160, %p161
    %p163 = scmp.ne.s32.totalorder %s154, %s155
    %p164 = scmp.eq.s32.totalorder %s18, 0
    %p165 = por %p163, %p164
    %p166 = scmp.ne.s32.totalorder %s154, %s155
    %p167 = scmp.eq.s32.totalorder %s19, 1
    %p168 = por %p166, %p167
    %p170 = scmp.ne.s32.totalorder %s155, %s169
    %p171 = scmp.eq.s32.totalorder %s19, 0
    %p172 = por %p170, %p171
    %s173 = ssub.s32 %s13, %s20
    %p174 = scmp.eq.s32.totalorder %s173, 0
    %s176 = sadd.s32 %s175, 1
    %s177 = scalar_select %p174, %s175, %s176
    %p180 = pneg %p174
    %p181 = scmp.eq.s32.totalorder %s13, 1
    %p182 = por %p180, %p181
    %p183 = scmp.ne.s32.totalorder %s175, %s178
    %p184 = scmp.eq.s32.totalorder %s13, 0
    %p185 = por %p183, %p184
    %p186 = scmp.ne.s32.totalorder %s175, %s178
    %p187 = scmp.eq.s32.totalorder %s18, 1
    %p188 = por %p186, %p187
    %p189 = scmp.ne.s32.totalorder %s178, %s179
    %p190 = scmp.eq.s32.totalorder %s18, 0
    %p191 = por %p189, %p190
    %p192 = scmp.ne.s32.totalorder %s178, %s179
    %p193 = scmp.eq.s32.totalorder %s19, 1
    %p194 = por %p192, %p193
    %p196 = scmp.ne.s32.totalorder %s179, %s195
    %p197 = scmp.eq.s32.totalorder %s19, 0
    %p198 = por %p196, %p197
    %p199 = scmp.le.s32.totalorder 1, %s13
    %p200 = scmp.lt.s32.totalorder %s13, 3
    %p201 = pnand %p199, %p200
    %p202 = pneg %p201
    // Predicated region
    $region9: #{resnet_transition_forward.1} parent=5 // pred_check
      _
    $region10: #{resnet_transition_forward.1} parent=5 // pred_check_branch
      %204 = sbr.rel (%p201) target = $region12
    $region11: #{resnet_transition_forward.1} parent=5 // pred_region
      %s205 = ssub.s32 %s13, 1
      // Predicated region
      $region13: #{resnet_transition_forward.1} parent=11 // pred_check
        %p206 = pneg %p60
      $region14: #{resnet_transition_forward.1} parent=11 // pred_check_branch
        %208 = sbr.rel (%p206) target = $region16
      $region15: #{resnet_transition_forward.1} parent=11 // pred_region
        _
      $region16: #{resnet_transition_forward.1} parent=11 // pred_fallthru
        _
      // Predicated region
      $region17: #{resnet_transition_forward.1} parent=11 // pred_check
        %p209 = pneg %p81
      $region18: #{resnet_transition_forward.1} parent=11 // pred_check_branch
        %211 = sbr.rel (%p209) target = $region20
      $region19: #{resnet_transition_forward.1} parent=11 // pred_region
        _
      $region20: #{resnet_transition_forward.1} parent=11 // pred_fallthru
        _
      // Predicated region
      $region21: #{resnet_transition_forward.1} parent=11 // pred_check
        %p212 = pneg %p102
      $region22: #{resnet_transition_forward.1} parent=11 // pred_check_branch
        %214 = sbr.rel (%p212) target = $region24
      $region23: #{resnet_transition_forward.1} parent=11 // pred_region
        _
      $region24: #{resnet_transition_forward.1} parent=11 // pred_fallthru
        _
      // Predicated region
      $region25: #{resnet_transition_forward.1} parent=11 // pred_check
        %p215 = pneg %p123
      $region26: #{resnet_transition_forward.1} parent=11 // pred_check_branch
        %217 = sbr.rel (%p215) target = $region28
      $region27: #{resnet_transition_forward.1} parent=11 // pred_region
        _
      $region28: #{resnet_transition_forward.1} parent=11 // pred_fallthru
        _
      // Predicated region
      $region29: #{resnet_transition_forward.1} parent=11 // pred_check
        %p218 = pneg %p144
      $region30: #{resnet_transition_forward.1} parent=11 // pred_check_branch
        %220 = sbr.rel (%p218) target = $region32
      $region31: #{resnet_transition_forward.1} parent=11 // pred_region
        _
      $region32: #{resnet_transition_forward.1} parent=11 // pred_fallthru
        _
      // Predicated region
      $region33: #{resnet_transition_forward.1} parent=11 // pred_check
        %p221 = pneg %p165
      $region34: #{resnet_transition_forward.1} parent=11 // pred_check_branch
        %223 = sbr.rel (%p221) target = $region36
      $region35: #{resnet_transition_forward.1} parent=11 // pred_region
        _
      $region36: #{resnet_transition_forward.1} parent=11 // pred_fallthru
        _
    $region12: #{resnet_transition_forward.1} parent=5 // pred_fallthru
      _
    %p224 = scmp.lt.s32.totalorder %s13, 2
    // Predicated region
    $region37: #{resnet_transition_forward.1} parent=5 // pred_check
      %p225 = pneg %p224
    $region38: #{resnet_transition_forward.1} parent=5 // pred_check_branch
      %227 = sbr.rel (%p225) target = $region40
    $region39: #{resnet_transition_forward.1} parent=5 // pred_region
      // Predicated region
      $region41: #{resnet_transition_forward.1} parent=39 // pred_check
        %p228 = pneg %p33
      $region42: #{resnet_transition_forward.1} parent=39 // pred_check_branch
        %230 = sbr.rel (%p228) target = $region44
      $region43: #{resnet_transition_forward.1} parent=39 // pred_region
        %s231 = smul.u32 8, %s13
        %p232 = scmp.lt.s32.totalorder %s231, 15
        %s233 = scalar_select %p232, %s231, 15
        %s234 = smul.addr %s233, 8
        %s235 = smul.addr %s234, 4
        %s236 = scalar_lea.vmem %s0, %s235
        %s237 = smul.u32 8, %s13
      $region44: #{resnet_transition_forward.1} parent=39 // pred_fallthru
        _
    $region40: #{resnet_transition_forward.1} parent=5 // pred_fallthru
      _
    %p238 = scmp.le.s32.totalorder 1, %s13
    %p239 = scmp.lt.s32.totalorder %s13, 3
    %p240 = pnand %p238, %p239
    %p241 = pneg %p240
    // Predicated region
    $region45: #{resnet_transition_forward.1} parent=5 // pred_check
      _
    $region46: #{resnet_transition_forward.1} parent=5 // pred_check_branch
      %243 = sbr.rel (%p240) target = $region48
    $region47: #{resnet_transition_forward.1} parent=5 // pred_region
      %s244 = ssub.s32 %s13, 1
      %s245 = smul.u32 8, %s18
      %p246 = scmp.lt.s32.totalorder %s245, 15
      %s247 = scalar_select %p246, %s245, 15
      %s248 = smul.addr %s247, 8
      %s249 = smul.addr %s248, 4
      %s250 = scalar_lea.vmem %s0, %s249
      %p251 = pneg %p39
      %p252 = pneg %p36
      %p253 = pneg %p60
      %p254 = pneg %p57
      %p255 = pneg %p81
      %p256 = pneg %p78
      %p257 = pneg %p102
      %p258 = pneg %p99
      %p259 = pneg %p123
      %p260 = pneg %p120
      %p261 = pneg %p144
      %p262 = pneg %p141
      %p263 = pneg %p165
      %p264 = pneg %p162
      %p265 = pneg %p191
      %p266 = pneg %p188
      %p267 = scmp.lt.s32.totalorder %s18, 1
      %s268 = scalar_select %p267, %s18, 1
      %s269 = smul.addr %s268, 8
      %s270 = scalar_lea.vmem %s7, %s269
      %s271 = smul.u32 8, %s18
      %p272 = scmp.lt.s32.totalorder %s271, 15
      %s273 = scalar_select %p272, %s271, 15
      %s274 = smul.addr %s273, 8
      %s275 = smul.addr %s274, 4
      %s276 = scalar_lea.vmem %s0, %s275
      %s277 = smul.u32 8, %s18
      %p278 = scmp.lt.s32.totalorder %s18, 1
      %s279 = scalar_select %p278, %s18, 1
      %s280 = smul.addr %s279, 8
      %s281 = scalar_lea.vmem %s7, %s280
      %v282 = vld [vmem:[%s276] sm:$0xf]
      %v283 = vld [vmem:[%s276 + $0x4] sm:$0xf]
      %v284 = vld [vmem:[%s276 + $0x8] sm:$0xf]
      %v285 = vld [vmem:[%s276 + $0xc] sm:$0xf]
      %v286 = vld [vmem:[%s276 + $0x10] sm:$0xf]
      %v287 = vld [vmem:[%s276 + $0x14] sm:$0xf]
      %v288 = vld [vmem:[%s276 + $0x18] sm:$0xf]
      %v289 = vld [vmem:[%s276 + $0x1c] sm:$0xf]
      %v290 = vld [vmem:[%s276 + $0x20] sm:$0xf]
      %v291 = vld [vmem:[%s276 + $0x24] sm:$0xf]
      %v292 = vld [vmem:[%s276 + $0x28] sm:$0xf]
      %v293 = vld [vmem:[%s276 + $0x2c] sm:$0xf]
      %v294 = vld [vmem:[%s276 + $0x30] sm:$0xf]
      %v295 = vld [vmem:[%s276 + $0x34] sm:$0xf]
      %v296 = vld [vmem:[%s276 + $0x38] sm:$0xf]
      %v297 = vld [vmem:[%s276 + $0x3c] sm:$0xf]
      %v298 = vld [vmem:[%s276 + $0x40] sm:$0xf]
      %v299 = vld [vmem:[%s276 + $0x44] sm:$0xf]
      %v300 = vld [vmem:[%s276 + $0x48] sm:$0xf]
      %v301 = vld [vmem:[%s276 + $0x4c] sm:$0xf]
      %v302 = vld [vmem:[%s276 + $0x50] sm:$0xf]
      %v303 = vld [vmem:[%s276 + $0x54] sm:$0xf]
      %v304 = vld [vmem:[%s276 + $0x58] sm:$0xf]
      %v305 = vld [vmem:[%s276 + $0x5c] sm:$0xf]
      %v306 = vld [vmem:[%s276 + $0x60] sm:$0xf]
      %v307 = vld [vmem:[%s276 + $0x64] sm:$0xf]
      %v308 = vld [vmem:[%s276 + $0x68] sm:$0xf]
      %v309 = vld [vmem:[%s276 + $0x6c] sm:$0xf]
      %v310 = vld [vmem:[%s276 + $0x70] sm:$0xf]
      %v311 = vld [vmem:[%s276 + $0x74] sm:$0xf]
      %v312 = vld [vmem:[%s276 + $0x78] sm:$0xf]
      %v313 = vld [vmem:[%s276 + $0x7c] sm:$0xf]
      %v314 = vld [vmem:[%s276 + $0x80] sm:$0xf]
      %v315 = vld [vmem:[%s276 + $0x84] sm:$0xf]
      %v316 = vld [vmem:[%s276 + $0x88] sm:$0xf]
      %v317 = vld [vmem:[%s276 + $0x8c] sm:$0xf]
      %v318 = vld [vmem:[%s276 + $0x90] sm:$0xf]
      %v319 = vld [vmem:[%s276 + $0x94] sm:$0xf]
      %v320 = vld [vmem:[%s276 + $0x98] sm:$0xf]
      %v321 = vld [vmem:[%s276 + $0x9c] sm:$0xf]
      %v322 = vld [vmem:[%s276 + $0xa0] sm:$0xf]
      %v323 = vld [vmem:[%s276 + $0xa4] sm:$0xf]
      %v324 = vld [vmem:[%s276 + $0xa8] sm:$0xf]
      %v325 = vld [vmem:[%s276 + $0xac] sm:$0xf]
      %v326 = vld [vmem:[%s276 + $0xb0] sm:$0xf]
      %v327 = vld [vmem:[%s276 + $0xb4] sm:$0xf]
      %v328 = vld [vmem:[%s276 + $0xb8] sm:$0xf]
      %v329 = vld [vmem:[%s276 + $0xbc] sm:$0xf]
      %v330 = vld [vmem:[%s276 + $0xc0] sm:$0xf]
      %v331 = vld [vmem:[%s276 + $0xc4] sm:$0xf]
      %v332 = vld [vmem:[%s276 + $0xc8] sm:$0xf]
      %v333 = vld [vmem:[%s276 + $0xcc] sm:$0xf]
      %v334 = vld [vmem:[%s276 + $0xd0] sm:$0xf]
      %v335 = vld [vmem:[%s276 + $0xd4] sm:$0xf]
      %v336 = vld [vmem:[%s276 + $0xd8] sm:$0xf]
      %v337 = vld [vmem:[%s276 + $0xdc] sm:$0xf]
      %v338 = vld [vmem:[%s276 + $0xe0] sm:$0xf]
      %v339 = vld [vmem:[%s276 + $0xe4] sm:$0xf]
      %v340 = vld [vmem:[%s276 + $0xe8] sm:$0xf]
      %v341 = vld [vmem:[%s276 + $0xec] sm:$0xf]
      %v342 = vld [vmem:[%s276 + $0xf0] sm:$0xf]
      %v343 = vld [vmem:[%s276 + $0xf4] sm:$0xf]
      %v344 = vld [vmem:[%s276 + $0xf8] sm:$0xf]
      %v345 = vld [vmem:[%s276 + $0xfc] sm:$0xf]
      %v346 = vunpack.c.l.bf16 %v282
      %v347 = vunpack.c.l.bf16 %v283
      %v348 = vunpack.c.l.bf16 %v284
      %v349 = vunpack.c.l.bf16 %v285
      %v350 = vunpack.c.l.bf16 %v286
      %v351 = vunpack.c.l.bf16 %v287
      %v352 = vunpack.c.l.bf16 %v288
      %v353 = vunpack.c.l.bf16 %v289
      %v354 = vunpack.c.l.bf16 %v290
      %v355 = vunpack.c.l.bf16 %v291
      %v356 = vunpack.c.l.bf16 %v292
      %v357 = vunpack.c.l.bf16 %v293
      %v358 = vunpack.c.l.bf16 %v294
      %v359 = vunpack.c.l.bf16 %v295
      %v360 = vunpack.c.l.bf16 %v296
      %v361 = vunpack.c.l.bf16 %v297
      %v362 = vunpack.c.l.bf16 %v298
      %v363 = vunpack.c.l.bf16 %v299
      %v364 = vunpack.c.l.bf16 %v300
      %v365 = vunpack.c.l.bf16 %v301
      %v366 = vunpack.c.l.bf16 %v302
      %v367 = vunpack.c.l.bf16 %v303
      %v368 = vunpack.c.l.bf16 %v304
      %v369 = vunpack.c.l.bf16 %v305
      %v370 = vunpack.c.l.bf16 %v306
      %v371 = vunpack.c.l.bf16 %v307
      %v372 = vunpack.c.l.bf16 %v308
      %v373 = vunpack.c.l.bf16 %v309
      %v374 = vunpack.c.l.bf16 %v310
      %v375 = vunpack.c.l.bf16 %v311
      %v376 = vunpack.c.l.bf16 %v312
      %v377 = vunpack.c.l.bf16 %v313
      %v378 = vunpack.c.l.bf16 %v314
      %v379 = vunpack.c.l.bf16 %v315
      %v380 = vunpack.c.l.bf16 %v316
      %v381 = vunpack.c.l.bf16 %v317
      %v382 = vunpack.c.l.bf16 %v318
      %v383 = vunpack.c.l.bf16 %v319
      %v384 = vunpack.c.l.bf16 %v320
      %v385 = vunpack.c.l.bf16 %v321
      %v386 = vunpack.c.l.bf16 %v322
      %v387 = vunpack.c.l.bf16 %v323
      %v388 = vunpack.c.l.bf16 %v324
      %v389 = vunpack.c.l.bf16 %v325
      %v390 = vunpack.c.l.bf16 %v326
      %v391 = vunpack.c.l.bf16 %v327
      %v392 = vunpack.c.l.bf16 %v328
      %v393 = vunpack.c.l.bf16 %v329
      %v394 = vunpack.c.l.bf16 %v330
      %v395 = vunpack.c.l.bf16 %v331
      %v396 = vunpack.c.l.bf16 %v332
      %v397 = vunpack.c.l.bf16 %v333
      %v398 = vunpack.c.l.bf16 %v334
      %v399 = vunpack.c.l.bf16 %v335
      %v400 = vunpack.c.l.bf16 %v336
      %v401 = vunpack.c.l.bf16 %v337
      %v402 = vunpack.c.l.bf16 %v338
      %v403 = vunpack.c.l.bf16 %v339
      %v404 = vunpack.c.l.bf16 %v340
      %v405 = vunpack.c.l.bf16 %v341
      %v406 = vunpack.c.l.bf16 %v342
      %v407 = vunpack.c.l.bf16 %v343
      %v408 = vunpack.c.l.bf16 %v344
      %v409 = vunpack.c.l.bf16 %v345
      %vm410 = vcmask 130048
      %v411 = vsel %vm410, %v346, 0.0
      %412 = vadd.xlane.f32.xlu0 %v411
      %v413 = vpop.xlane.xlu0 %412
      %v414 = vsel %vm410, %v347, 0.0
      %415 = vadd.xlane.f32.xlu0 %v414
      %v416 = vpop.xlane.xlu0 %415
      %v417 = vsel %vm410, %v348, 0.0
      %418 = vadd.xlane.f32.xlu0 %v417
      %v419 = vpop.xlane.xlu0 %418
      %v420 = vsel %vm410, %v349, 0.0
      %421 = vadd.xlane.f32.xlu0 %v420
      %v422 = vpop.xlane.xlu0 %421
      %v423 = vsel %vm410, %v350, 0.0
      %424 = vadd.xlane.f32.xlu0 %v423
      %v425 = vpop.xlane.xlu0 %424
      %v426 = vsel %vm410, %v351, 0.0
      %427 = vadd.xlane.f32.xlu0 %v426
      %v428 = vpop.xlane.xlu0 %427
      %v429 = vsel %vm410, %v352, 0.0
      %430 = vadd.xlane.f32.xlu0 %v429
      %v431 = vpop.xlane.xlu0 %430
      %v432 = vsel %vm410, %v353, 0.0
      %433 = vadd.xlane.f32.xlu0 %v432
      %v434 = vpop.xlane.xlu0 %433
      %v435 = vsel %vm410, %v354, 0.0
      %436 = vadd.xlane.f32.xlu0 %v435
      %v437 = vpop.xlane.xlu0 %436
      %v438 = vsel %vm410, %v355, 0.0
      %439 = vadd.xlane.f32.xlu0 %v438
      %v440 = vpop.xlane.xlu0 %439
      %v441 = vsel %vm410, %v356, 0.0
      %442 = vadd.xlane.f32.xlu0 %v441
      %v443 = vpop.xlane.xlu0 %442
      %v444 = vsel %vm410, %v357, 0.0
      %445 = vadd.xlane.f32.xlu0 %v444
      %v446 = vpop.xlane.xlu0 %445
      %v447 = vsel %vm410, %v358, 0.0
      %448 = vadd.xlane.f32.xlu0 %v447
      %v449 = vpop.xlane.xlu0 %448
      %v450 = vsel %vm410, %v359, 0.0
      %451 = vadd.xlane.f32.xlu0 %v450
      %v452 = vpop.xlane.xlu0 %451
      %v453 = vsel %vm410, %v360, 0.0
      %454 = vadd.xlane.f32.xlu0 %v453
      %v455 = vpop.xlane.xlu0 %454
      %v456 = vsel %vm410, %v361, 0.0
      %457 = vadd.xlane.f32.xlu0 %v456
      %v458 = vpop.xlane.xlu0 %457
      %v459 = vsel %vm410, %v362, 0.0
      %460 = vadd.xlane.f32.xlu0 %v459
      %v461 = vpop.xlane.xlu0 %460
      %v462 = vsel %vm410, %v363, 0.0
      %463 = vadd.xlane.f32.xlu0 %v462
      %v464 = vpop.xlane.xlu0 %463
      %v465 = vsel %vm410, %v364, 0.0
      %466 = vadd.xlane.f32.xlu0 %v465
      %v467 = vpop.xlane.xlu0 %466
      %v468 = vsel %vm410, %v365, 0.0
      %469 = vadd.xlane.f32.xlu0 %v468
      %v470 = vpop.xlane.xlu0 %469
      %v471 = vsel %vm410, %v366, 0.0
      %472 = vadd.xlane.f32.xlu0 %v471
      %v473 = vpop.xlane.xlu0 %472
      %v474 = vsel %vm410, %v367, 0.0
      %475 = vadd.xlane.f32.xlu0 %v474
      %v476 = vpop.xlane.xlu0 %475
      %v477 = vsel %vm410, %v368, 0.0
      %478 = vadd.xlane.f32.xlu0 %v477
      %v479 = vpop.xlane.xlu0 %478
      %v480 = vsel %vm410, %v369, 0.0
      %481 = vadd.xlane.f32.xlu0 %v480
      %v482 = vpop.xlane.xlu0 %481
      %v483 = vsel %vm410, %v370, 0.0
      %484 = vadd.xlane.f32.xlu0 %v483
      %v485 = vpop.xlane.xlu0 %484
      %v486 = vsel %vm410, %v371, 0.0
      %487 = vadd.xlane.f32.xlu0 %v486
      %v488 = vpop.xlane.xlu0 %487
      %v489 = vsel %vm410, %v372, 0.0
      %490 = vadd.xlane.f32.xlu0 %v489
      %v491 = vpop.xlane.xlu0 %490
      %v492 = vsel %vm410, %v373, 0.0
      %493 = vadd.xlane.f32.xlu0 %v492
      %v494 = vpop.xlane.xlu0 %493
      %v495 = vsel %vm410, %v374, 0.0
      %496 = vadd.xlane.f32.xlu0 %v495
      %v497 = vpop.xlane.xlu0 %496
      %v498 = vsel %vm410, %v375, 0.0
      %499 = vadd.xlane.f32.xlu0 %v498
      %v500 = vpop.xlane.xlu0 %499
      %v501 = vsel %vm410, %v376, 0.0
      %502 = vadd.xlane.f32.xlu0 %v501
      %v503 = vpop.xlane.xlu0 %502
      %v504 = vsel %vm410, %v377, 0.0
      %505 = vadd.xlane.f32.xlu0 %v504
      %v506 = vpop.xlane.xlu0 %505
      %v507 = vsel %vm410, %v378, 0.0
      %508 = vadd.xlane.f32.xlu0 %v507
      %v509 = vpop.xlane.xlu0 %508
      %v510 = vsel %vm410, %v379, 0.0
      %511 = vadd.xlane.f32.xlu0 %v510
      %v512 = vpop.xlane.xlu0 %511
      %v513 = vsel %vm410, %v380, 0.0
      %514 = vadd.xlane.f32.xlu0 %v513
      %v515 = vpop.xlane.xlu0 %514
      %v516 = vsel %vm410, %v381, 0.0
      %517 = vadd.xlane.f32.xlu0 %v516
      %v518 = vpop.xlane.xlu0 %517
      %v519 = vsel %vm410, %v382, 0.0
      %520 = vadd.xlane.f32.xlu0 %v519
      %v521 = vpop.xlane.xlu0 %520
      %v522 = vsel %vm410, %v383, 0.0
      %523 = vadd.xlane.f32.xlu0 %v522
      %v524 = vpop.xlane.xlu0 %523
      %v525 = vsel %vm410, %v384, 0.0
      %526 = vadd.xlane.f32.xlu0 %v525
      %v527 = vpop.xlane.xlu0 %526
      %v528 = vsel %vm410, %v385, 0.0
      %529 = vadd.xlane.f32.xlu0 %v528
      %v530 = vpop.xlane.xlu0 %529
      %v531 = vsel %vm410, %v386, 0.0
      %532 = vadd.xlane.f32.xlu0 %v531
      %v533 = vpop.xlane.xlu0 %532
      %v534 = vsel %vm410, %v387, 0.0
      %535 = vadd.xlane.f32.xlu0 %v534
      %v536 = vpop.xlane.xlu0 %535
      %v537 = vsel %vm410, %v388, 0.0
      %538 = vadd.xlane.f32.xlu0 %v537
      %v539 = vpop.xlane.xlu0 %538
      %v540 = vsel %vm410, %v389, 0.0
      %541 = vadd.xlane.f32.xlu0 %v540
      %v542 = vpop.xlane.xlu0 %541
      %v543 = vsel %vm410, %v390, 0.0
      %544 = vadd.xlane.f32.xlu0 %v543
      %v545 = vpop.xlane.xlu0 %544
      %v546 = vsel %vm410, %v391, 0.0
      %547 = vadd.xlane.f32.xlu0 %v546
      %v548 = vpop.xlane.xlu0 %547
      %v549 = vsel %vm410, %v392, 0.0
      %550 = vadd.xlane.f32.xlu0 %v549
      %v551 = vpop.xlane.xlu0 %550
      %v552 = vsel %vm410, %v393, 0.0
      %553 = vadd.xlane.f32.xlu0 %v552
      %v554 = vpop.xlane.xlu0 %553
      %v555 = vsel %vm410, %v394, 0.0
      %556 = vadd.xlane.f32.xlu0 %v555
      %v557 = vpop.xlane.xlu0 %556
      %v558 = vsel %vm410, %v395, 0.0
      %559 = vadd.xlane.f32.xlu0 %v558
      %v560 = vpop.xlane.xlu0 %559
      %v561 = vsel %vm410, %v396, 0.0
      %562 = vadd.xlane.f32.xlu0 %v561
      %v563 = vpop.xlane.xlu0 %562
      %v564 = vsel %vm410, %v397, 0.0
      %565 = vadd.xlane.f32.xlu0 %v564
      %v566 = vpop.xlane.xlu0 %565
      %v567 = vsel %vm410, %v398, 0.0
      %568 = vadd.xlane.f32.xlu0 %v567
      %v569 = vpop.xlane.xlu0 %568
      %v570 = vsel %vm410, %v399, 0.0
      %571 = vadd.xlane.f32.xlu0 %v570
      %v572 = vpop.xlane.xlu0 %571
      %v573 = vsel %vm410, %v400, 0.0
      %574 = vadd.xlane.f32.xlu0 %v573
      %v575 = vpop.xlane.xlu0 %574
      %v576 = vsel %vm410, %v401, 0.0
      %577 = vadd.xlane.f32.xlu0 %v576
      %v578 = vpop.xlane.xlu0 %577
      %v579 = vsel %vm410, %v402, 0.0
      %580 = vadd.xlane.f32.xlu0 %v579
      %v581 = vpop.xlane.xlu0 %580
      %v582 = vsel %vm410, %v403, 0.0
      %583 = vadd.xlane.f32.xlu0 %v582
      %v584 = vpop.xlane.xlu0 %583
      %v585 = vsel %vm410, %v404, 0.0
      %586 = vadd.xlane.f32.xlu0 %v585
      %v587 = vpop.xlane.xlu0 %586
      %v588 = vsel %vm410, %v405, 0.0
      %589 = vadd.xlane.f32.xlu0 %v588
      %v590 = vpop.xlane.xlu0 %589
      %v591 = vsel %vm410, %v406, 0.0
      %592 = vadd.xlane.f32.xlu0 %v591
      %v593 = vpop.xlane.xlu0 %592
      %v594 = vsel %vm410, %v407, 0.0
      %595 = vadd.xlane.f32.xlu0 %v594
      %v596 = vpop.xlane.xlu0 %595
      %v597 = vsel %vm410, %v408, 0.0
      %598 = vadd.xlane.f32.xlu0 %v597
      %v599 = vpop.xlane.xlu0 %598
      %v600 = vsel %vm410, %v409, 0.0
      %601 = vadd.xlane.f32.xlu0 %v600
      %v602 = vpop.xlane.xlu0 %601
      %v603 = vld [vmem:[%s1] sm:$0xff]
      %v604 = vld [vmem:[%s1 + $0x8] sm:$0xff]
      %v605 = vld [vmem:[%s1 + $0x10] sm:$0xff]
      %v606 = vld [vmem:[%s1 + $0x18] sm:$0xff]
      %v607 = vld [vmem:[%s1 + $0x20] sm:$0xff]
      %v608 = vld [vmem:[%s1 + $0x28] sm:$0xff]
      %v609 = vld [vmem:[%s1 + $0x30] sm:$0xff]
      %v610 = vld [vmem:[%s1 + $0x38] sm:$0xff]
      %v611 = vld [vmem:[%s2] sm:$0x1]
      %v613 = vperm.slane %v611, 0
      %v679 = vlaneseq
      %v680 = vand.u32 %v679, 127
      %v681 = vperm.slane %v413, %v680
      %v682 = vadd.s32 %v680, 4294967288
      %v683 = vperm.slane %v416, %v682
      %vm684 = vcmask 130112
      %v685 = vsel %vm684, %v683, %v681
      %v686 = vadd.s32 %v680, 4294967280
      %v687 = vperm.slane %v419, %v686
      %vm688 = vcmask 195712
      %v689 = vsel %vm688, %v687, %v685
      %v690 = vadd.s32 %v680, 4294967272
      %v691 = vperm.slane %v422, %v690
      %vm692 = vcmask 261312
      %v693 = vsel %vm692, %v691, %v689
      %v694 = vadd.s32 %v680, 4294967264
      %v695 = vperm.slane %v425, %v694
      %vm696 = vcmask 326912
      %v697 = vsel %vm696, %v695, %v693
      %v698 = vadd.s32 %v680, 4294967256
      %v699 = vperm.slane %v428, %v698
      %vm700 = vcmask 392512
      %v701 = vsel %vm700, %v699, %v697
      %v702 = vadd.s32 %v680, 4294967248
      %v703 = vperm.slane %v431, %v702
      %vm704 = vcmask 458112
      %v705 = vsel %vm704, %v703, %v701
      %v706 = vadd.s32 %v680, 4294967240
      %v707 = vperm.slane %v434, %v706
      %vm708 = vcmask 523712
      %v709 = vsel %vm708, %v707, %v705
      %v710 = vperm.slane %v437, %v680
      %v711 = vperm.slane %v440, %v682
      %v712 = vsel %vm684, %v711, %v710
      %v713 = vperm.slane %v443, %v686
      %v714 = vsel %vm688, %v713, %v712
      %v715 = vperm.slane %v446, %v690
      %v716 = vsel %vm692, %v715, %v714
      %v717 = vperm.slane %v449, %v694
      %v718 = vsel %vm696, %v717, %v716
      %v719 = vperm.slane %v452, %v698
      %v720 = vsel %vm700, %v719, %v718
      %v721 = vperm.slane %v455, %v702
      %v722 = vsel %vm704, %v721, %v720
      %v723 = vperm.slane %v458, %v706
      %v724 = vsel %vm708, %v723, %v722
      %v725 = vperm.slane %v461, %v680
      %v726 = vperm.slane %v464, %v682
      %v727 = vsel %vm684, %v726, %v725
      %v728 = vperm.slane %v467, %v686
      %v729 = vsel %vm688, %v728, %v727
      %v730 = vperm.slane %v470, %v690
      %v731 = vsel %vm692, %v730, %v729
      %v732 = vperm.slane %v473, %v694
      %v733 = vsel %vm696, %v732, %v731
      %v734 = vperm.slane %v476, %v698
      %v735 = vsel %vm700, %v734, %v733
      %v736 = vperm.slane %v479, %v702
      %v737 = vsel %vm704, %v736, %v735
      %v738 = vperm.slane %v482, %v706
      %v739 = vsel %vm708, %v738, %v737
      %v740 = vperm.slane %v485, %v680
      %v741 = vperm.slane %v488, %v682
      %v742 = vsel %vm684, %v741, %v740
      %v743 = vperm.slane %v491, %v686
      %v744 = vsel %vm688, %v743, %v742
      %v745 = vperm.slane %v494, %v690
      %v746 = vsel %vm692, %v745, %v744
      %v747 = vperm.slane %v497, %v694
      %v748 = vsel %vm696, %v747, %v746
      %v749 = vperm.slane %v500, %v698
      %v750 = vsel %vm700, %v749, %v748
      %v751 = vperm.slane %v503, %v702
      %v752 = vsel %vm704, %v751, %v750
      %v753 = vperm.slane %v506, %v706
      %v754 = vsel %vm708, %v753, %v752
      %v755 = vperm.slane %v509, %v680
      %v756 = vperm.slane %v512, %v682
      %v757 = vsel %vm684, %v756, %v755
      %v758 = vperm.slane %v515, %v686
      %v759 = vsel %vm688, %v758, %v757
      %v760 = vperm.slane %v518, %v690
      %v761 = vsel %vm692, %v760, %v759
      %v762 = vperm.slane %v521, %v694
      %v763 = vsel %vm696, %v762, %v761
      %v764 = vperm.slane %v524, %v698
      %v765 = vsel %vm700, %v764, %v763
      %v766 = vperm.slane %v527, %v702
      %v767 = vsel %vm704, %v766, %v765
      %v768 = vperm.slane %v530, %v706
      %v769 = vsel %vm708, %v768, %v767
      %v770 = vperm.slane %v533, %v680
      %v771 = vperm.slane %v536, %v682
      %v772 = vsel %vm684, %v771, %v770
      %v773 = vperm.slane %v539, %v686
      %v774 = vsel %vm688, %v773, %v772
      %v775 = vperm.slane %v542, %v690
      %v776 = vsel %vm692, %v775, %v774
      %v777 = vperm.slane %v545, %v694
      %v778 = vsel %vm696, %v777, %v776
      %v779 = vperm.slane %v548, %v698
      %v780 = vsel %vm700, %v779, %v778
      %v781 = vperm.slane %v551, %v702
      %v782 = vsel %vm704, %v781, %v780
      %v783 = vperm.slane %v554, %v706
      %v784 = vsel %vm708, %v783, %v782
      %v785 = vperm.slane %v557, %v680
      %v786 = vperm.slane %v560, %v682
      %v787 = vsel %vm684, %v786, %v785
      %v788 = vperm.slane %v563, %v686
      %v789 = vsel %vm688, %v788, %v787
      %v790 = vperm.slane %v566, %v690
      %v791 = vsel %vm692, %v790, %v789
      %v792 = vperm.slane %v569, %v694
      %v793 = vsel %vm696, %v792, %v791
      %v794 = vperm.slane %v572, %v698
      %v795 = vsel %vm700, %v794, %v793
      %v796 = vperm.slane %v575, %v702
      %v797 = vsel %vm704, %v796, %v795
      %v798 = vperm.slane %v578, %v706
      %v799 = vsel %vm708, %v798, %v797
      %v800 = vperm.slane %v581, %v680
      %v801 = vperm.slane %v584, %v682
      %v802 = vsel %vm684, %v801, %v800
      %v803 = vperm.slane %v587, %v686
      %v804 = vsel %vm688, %v803, %v802
      %v805 = vperm.slane %v590, %v690
      %v806 = vsel %vm692, %v805, %v804
      %v807 = vperm.slane %v593, %v694
      %v808 = vsel %vm696, %v807, %v806
      %v809 = vperm.slane %v596, %v698
      %v810 = vsel %vm700, %v809, %v808
      %v811 = vperm.slane %v599, %v702
      %v812 = vsel %vm704, %v811, %v810
      %v813 = vperm.slane %v602, %v706
      %v814 = vsel %vm708, %v813, %v812
      %vm815 = vcmask 1041409
      %v816 = vsel %vm815, %v724, %v709
      %vm817 = vcmask 1042434
      %v818 = vsel %vm817, %v739, %v816
      %vm819 = vcmask 1043459
      %v820 = vsel %vm819, %v754, %v818
      %vm821 = vcmask 1044484
      %v822 = vsel %vm821, %v769, %v820
      %vm823 = vcmask 1045509
      %v824 = vsel %vm823, %v784, %v822
      %vm825 = vcmask 1046534
      %v826 = vsel %vm825, %v799, %v824
      %vm827 = vcmask 1047559
      %v828 = vsel %vm827, %v814, %v826
      %vm829 = vcmask 523264
      %v830 = vsel %vm829, %v828, 0
      %832 = vmatpush.msra.mxu0 0.0
      %833 = vmatpush.msra.mxu0 0.0
      %834 = vmatpush.msra.mxu0 0.0
      %835 = vmatpush.msra.mxu0 0.0
      %836 = vmatpush.msra.mxu0 0.0
      %837 = vmatpush.msra.mxu0 0.0
      %838 = vmatpush.msra.mxu0 0.0
      %839 = vmatpush.msra.mxu0 0.0
      %840 = vmatpush.msra.mxu0 %v610
      %841 = vmatpush.msra.mxu0 %v609
      %842 = vmatpush.msra.mxu0 %v608
      %843 = vmatpush.msra.mxu0 %v607
      %844 = vmatpush.msra.mxu0 %v606
      %845 = vmatpush.msra.mxu0 %v605
      %846 = vmatpush.msra.mxu0 %v604
      %847 = vmatpush.msra.mxu0 %v603
      %848 = vmatmul.f32.gmra.mxu0 %v830
      %v849 = vpop.f32.mrf.mxu0
      %v850 = vadd.f32 %v613, %v849
      %851 = vdwg.mxu0
      %vm852 = vcmp.gt.f32.partialorder %v850, 0.0
      %v853 = vmin.f32 %v850, 0.0
      %v854 = vmul.f32 %v853, 1.442695
      %v855 = vpow.pop %v854
      %v856 = vsub.f32 %v855, 1.0
      %v857 = vsel %vm852, %v850, %v856
      %v858 = vld [vmem:[%s3] sm:$0xff]
      %v859 = vld [vmem:[%s3 + $0x8] sm:$0xff]
      %v860 = vld [vmem:[%s3 + $0x10] sm:$0xff]
      %v861 = vld [vmem:[%s3 + $0x18] sm:$0xff]
      %v862 = vld [vmem:[%s3 + $0x20] sm:$0xff]
      %v863 = vld [vmem:[%s3 + $0x28] sm:$0xff]
      %v864 = vld [vmem:[%s3 + $0x30] sm:$0xff]
      %v865 = vld [vmem:[%s3 + $0x38] sm:$0xff]
      %v866 = vld [vmem:[%s3 + $0x40] sm:$0xff]
      %v867 = vld [vmem:[%s3 + $0x48] sm:$0xff]
      %v868 = vld [vmem:[%s3 + $0x50] sm:$0xff]
      %v869 = vld [vmem:[%s3 + $0x58] sm:$0xff]
      %v870 = vld [vmem:[%s3 + $0x60] sm:$0xff]
      %v871 = vld [vmem:[%s3 + $0x68] sm:$0xff]
      %v872 = vld [vmem:[%s3 + $0x70] sm:$0xff]
      %v873 = vld [vmem:[%s3 + $0x78] sm:$0xff]
      %v874 = vld [vmem:[%s3 + $0x80] sm:$0xff]
      %v875 = vld [vmem:[%s3 + $0x88] sm:$0xff]
      %v876 = vld [vmem:[%s3 + $0x90] sm:$0xff]
      %v877 = vld [vmem:[%s3 + $0x98] sm:$0xff]
      %v878 = vld [vmem:[%s3 + $0xa0] sm:$0xff]
      %v879 = vld [vmem:[%s3 + $0xa8] sm:$0xff]
      %v880 = vld [vmem:[%s3 + $0xb0] sm:$0xff]
      %v881 = vld [vmem:[%s3 + $0xb8] sm:$0xff]
      %v882 = vld [vmem:[%s3 + $0xc0] sm:$0xff]
      %v883 = vld [vmem:[%s3 + $0xc8] sm:$0xff]
      %v884 = vld [vmem:[%s3 + $0xd0] sm:$0xff]
      %v885 = vld [vmem:[%s4] sm:$0xff]
      %v886 = vld [vmem:[%s4 + $0x8] sm:$0x1]
      %v889 = vperm.slane %v885, 0
      %v890 = vperm.slane %v885, 1
      %v891 = vperm.slane %v885, 2
      %v892 = vperm.slane %v885, 3
      %v893 = vperm.slane %v885, 4
      %v894 = vperm.slane %v885, 5
      %v895 = vperm.slane %v885, 6
      %v896 = vperm.slane %v885, 7
      %v897 = vperm.slane %v886, 0
      %vm907 = vcmask 195584
      %v909 = vsel %vm907, %v857, 0
      %911 = vmatpush.msra.mxu0 0.0
      %912 = vmatpush.msra.mxu0 0.0
      %913 = vmatpush.msra.mxu0 0.0
      %914 = vmatpush.msra.mxu0 0.0
      %915 = vmatpush.msra.mxu0 0.0
      %916 = vmatpush.msra.mxu0 0.0
      %917 = vmatpush.msra.mxu0 0.0
      %918 = vmatpush.msra.mxu0 0.0
      %919 = vmatpush.msra.mxu0 0.0
      %920 = vmatpush.msra.mxu0 0.0
      %921 = vmatpush.msra.mxu0 0.0
      %922 = vmatpush.msra.mxu0 0.0
      %923 = vmatpush.msra.mxu0 0.0
      %924 = vmatpush.msra.mxu0 %v876
      %925 = vmatpush.msra.mxu0 %v867
      %926 = vmatpush.msra.mxu0 %v858
      %927 = vmatmul.f32.gmra.mxu0 %v909
      %v928 = vpop.f32.mrf.mxu0
      %v929 = vadd.f32 %v889, %v928
      %930 = vdwg.mxu0
      %931 = vmatpush.msra.mxu0 0.0
      %932 = vmatpush.msra.mxu0 0.0
      %933 = vmatpush.msra.mxu0 0.0
      %934 = vmatpush.msra.mxu0 0.0
      %935 = vmatpush.msra.mxu0 0.0
      %936 = vmatpush.msra.mxu0 0.0
      %937 = vmatpush.msra.mxu0 0.0
      %938 = vmatpush.msra.mxu0 0.0
      %939 = vmatpush.msra.mxu0 0.0
      %940 = vmatpush.msra.mxu0 0.0
      %941 = vmatpush.msra.mxu0 0.0
      %942 = vmatpush.msra.mxu0 0.0
      %943 = vmatpush.msra.mxu0 0.0
      %944 = vmatpush.msra.mxu0 %v877
      %945 = vmatpush.msra.mxu0 %v868
      %946 = vmatpush.msra.mxu0 %v859
      %947 = vmatmul.f32.gmra.mxu0 %v909
      %v948 = vpop.f32.mrf.mxu0
      %v949 = vadd.f32 %v890, %v948
      %950 = vdwg.mxu0
      %951 = vmatpush.msra.mxu0 0.0
      %952 = vmatpush.msra.mxu0 0.0
      %953 = vmatpush.msra.mxu0 0.0
      %954 = vmatpush.msra.mxu0 0.0
      %955 = vmatpush.msra.mxu0 0.0
      %956 = vmatpush.msra.mxu0 0.0
      %957 = vmatpush.msra.mxu0 0.0
      %958 = vmatpush.msra.mxu0 0.0
      %959 = vmatpush.msra.mxu0 0.0
      %960 = vmatpush.msra.mxu0 0.0
      %961 = vmatpush.msra.mxu0 0.0
      %962 = vmatpush.msra.mxu0 0.0
      %963 = vmatpush.msra.mxu0 0.0
      %964 = vmatpush.msra.mxu0 %v878
      %965 = vmatpush.msra.mxu0 %v869
      %966 = vmatpush.msra.mxu0 %v860
      %967 = vmatmul.f32.gmra.mxu0 %v909
      %v968 = vpop.f32.mrf.mxu0
      %v969 = vadd.f32 %v891, %v968
      %970 = vdwg.mxu0
      %971 = vmatpush.msra.mxu0 0.0
      %972 = vmatpush.msra.mxu0 0.0
      %973 = vmatpush.msra.mxu0 0.0
      %974 = vmatpush.msra.mxu0 0.0
      %975 = vmatpush.msra.mxu0 0.0
      %976 = vmatpush.msra.mxu0 0.0
      %977 = vmatpush.msra.mxu0 0.0
      %978 = vmatpush.msra.mxu0 0.0
      %979 = vmatpush.msra.mxu0 0.0
      %980 = vmatpush.msra.mxu0 0.0
      %981 = vmatpush.msra.mxu0 0.0
      %982 = vmatpush.msra.mxu0 0.0
      %983 = vmatpush.msra.mxu0 0.0
      %984 = vmatpush.msra.mxu0 %v879
      %985 = vmatpush.msra.mxu0 %v870
      %986 = vmatpush.msra.mxu0 %v861
      %987 = vmatmul.f32.gmra.mxu0 %v909
      %v988 = vpop.f32.mrf.mxu0
      %v989 = vadd.f32 %v892, %v988
      %990 = vdwg.mxu0
      %991 = vmatpush.msra.mxu0 0.0
      %992 = vmatpush.msra.mxu0 0.0
      %993 = vmatpush.msra.mxu0 0.0
      %994 = vmatpush.msra.mxu0 0.0
      %995 = vmatpush.msra.mxu0 0.0
      %996 = vmatpush.msra.mxu0 0.0
      %997 = vmatpush.msra.mxu0 0.0
      %998 = vmatpush.msra.mxu0 0.0
      %999 = vmatpush.msra.mxu0 0.0
      %1000 = vmatpush.msra.mxu0 0.0
      %1001 = vmatpush.msra.mxu0 0.0
      %1002 = vmatpush.msra.mxu0 0.0
      %1003 = vmatpush.msra.mxu0 0.0
      %1004 = vmatpush.msra.mxu0 %v880
      %1005 = vmatpush.msra.mxu0 %v871
      %1006 = vmatpush.msra.mxu0 %v862
      %1007 = vmatmul.f32.gmra.mxu0 %v909
      %v1008 = vpop.f32.mrf.mxu0
      %v1009 = vadd.f32 %v893, %v1008
      %1010 = vdwg.mxu0
      %1011 = vmatpush.msra.mxu0 0.0
      %1012 = vmatpush.msra.mxu0 0.0
      %1013 = vmatpush.msra.mxu0 0.0
      %1014 = vmatpush.msra.mxu0 0.0
      %1015 = vmatpush.msra.mxu0 0.0
      %1016 = vmatpush.msra.mxu0 0.0
      %1017 = vmatpush.msra.mxu0 0.0
      %1018 = vmatpush.msra.mxu0 0.0
      %1019 = vmatpush.msra.mxu0 0.0
      %1020 = vmatpush.msra.mxu0 0.0
      %1021 = vmatpush.msra.mxu0 0.0
      %1022 = vmatpush.msra.mxu0 0.0
      %1023 = vmatpush.msra.mxu0 0.0
      %1024 = vmatpush.msra.mxu0 %v881
      %1025 = vmatpush.msra.mxu0 %v872
      %1026 = vmatpush.msra.mxu0 %v863
      %1027 = vmatmul.f32.gmra.mxu0 %v909
      %v1028 = vpop.f32.mrf.mxu0
      %v1029 = vadd.f32 %v894, %v1028
      %1030 = vdwg.mxu0
      %1031 = vmatpush.msra.mxu0 0.0
      %1032 = vmatpush.msra.mxu0 0.0
      %1033 = vmatpush.msra.mxu0 0.0
      %1034 = vmatpush.msra.mxu0 0.0
      %1035 = vmatpush.msra.mxu0 0.0
      %1036 = vmatpush.msra.mxu0 0.0
      %1037 = vmatpush.msra.mxu0 0.0
      %1038 = vmatpush.msra.mxu0 0.0
      %1039 = vmatpush.msra.mxu0 0.0
      %1040 = vmatpush.msra.mxu0 0.0
      %1041 = vmatpush.msra.mxu0 0.0
      %1042 = vmatpush.msra.mxu0 0.0
      %1043 = vmatpush.msra.mxu0 0.0
      %1044 = vmatpush.msra.mxu0 %v882
      %1045 = vmatpush.msra.mxu0 %v873
      %1046 = vmatpush.msra.mxu0 %v864
      %1047 = vmatmul.f32.gmra.mxu0 %v909
      %v1048 = vpop.f32.mrf.mxu0
      %v1049 = vadd.f32 %v895, %v1048
      %1050 = vdwg.mxu0
      %1051 = vmatpush.msra.mxu0 0.0
      %1052 = vmatpush.msra.mxu0 0.0
      %1053 = vmatpush.msra.mxu0 0.0
      %1054 = vmatpush.msra.mxu0 0.0
      %1055 = vmatpush.msra.mxu0 0.0
      %1056 = vmatpush.msra.mxu0 0.0
      %1057 = vmatpush.msra.mxu0 0.0
      %1058 = vmatpush.msra.mxu0 0.0
      %1059 = vmatpush.msra.mxu0 0.0
      %1060 = vmatpush.msra.mxu0 0.0
      %1061 = vmatpush.msra.mxu0 0.0
      %1062 = vmatpush.msra.mxu0 0.0
      %1063 = vmatpush.msra.mxu0 0.0
      %1064 = vmatpush.msra.mxu0 %v883
      %1065 = vmatpush.msra.mxu0 %v874
      %1066 = vmatpush.msra.mxu0 %v865
      %1067 = vmatmul.f32.gmra.mxu0 %v909
      %v1068 = vpop.f32.mrf.mxu0
      %v1069 = vadd.f32 %v896, %v1068
      %1070 = vdwg.mxu0
      %1071 = vmatpush.msra.mxu0 0.0
      %1072 = vmatpush.msra.mxu0 0.0
      %1073 = vmatpush.msra.mxu0 0.0
      %1074 = vmatpush.msra.mxu0 0.0
      %1075 = vmatpush.msra.mxu0 0.0
      %1076 = vmatpush.msra.mxu0 0.0
      %1077 = vmatpush.msra.mxu0 0.0
      %1078 = vmatpush.msra.mxu0 0.0
      %1079 = vmatpush.msra.mxu0 0.0
      %1080 = vmatpush.msra.mxu0 0.0
      %1081 = vmatpush.msra.mxu0 0.0
      %1082 = vmatpush.msra.mxu0 0.0
      %1083 = vmatpush.msra.mxu0 0.0
      %1084 = vmatpush.msra.mxu0 %v884
      %1085 = vmatpush.msra.mxu0 %v875
      %1086 = vmatpush.msra.mxu0 %v866
      %1087 = vmatmul.f32.gmra.mxu0 %v909
      %v1088 = vpop.f32.mrf.mxu0
      %v1089 = vadd.f32 %v897, %v1088
      %1090 = vdwg.mxu0
      %vm1091 = vcmask 23552
      %v1092 = vsel %vm1091, %v929, -inf
      %1093 = vmax.xlane.f32.xlu0 %v1092
      %v1094 = vpop.xlane.xlu0 %1093
      %v1095 = vsub.f32 %v929, %v1094
      %v1096 = vmul.f32 %v1095, 1.442695
      %v1097 = vpow.pop %v1096
      %v1098 = vsel %vm1091, %v1097, 0.0
      %1099 = vadd.xlane.f32.xlu0 %v1098
      %v1100 = vpop.xlane.xlu0 %1099
      %v1101 = vrcp.pop %v1100
      %v1102 = vmul.f32 %v1100, %v1101
      %v1103 = vsub.f32 1.0, %v1102
      %v1104 = vmul.f32 %v1101, %v1103
      %v1105 = vadd.f32 %v1101, %v1104
      %vm1106 = vweird.f32 %v1100
      %vm1107 = vweird.f32 %v1101
      %vm1108 = vmor %vm1106, %vm1107
      %v1109 = vsel %vm1108, %v1101, %v1105
      %v1110 = vand.u32 2147483647, %v1100
      %vm1111 = vcmp.eq.f32.partialorder %v1110, 8.507059e+37
      %v1112 = vand.u32 %v1100, 2147483648
      %v1113 = vor.u32 1.1754944e-38, %v1112
      %v1114 = vsel %vm1111, %v1113, %v1109
      %v1115 = vmul.f32 %v1097, %v1114
      %1116 = vst.msk [vmem:[%s281] sm:$0xff] %vm1091, %v1115
      %v1117 = vperm.slane %v989, 0
      %v1118 = vlaneseq
      %v1119 = vshrl.u32 %v1118, 7
      %1121 = vset.pattern.permute.xlu0 %v1119
      %1122 = vperm.xlu0 %1121, %v1117
      %v1123 = vpop.permute.xlu0 %1122
      %v1124 = vperm.slane %v989, 1
      %v1125 = vlaneseq
      %v1126 = vshrl.u32 %v1125, 7
      %1128 = vset.pattern.permute.xlu0 %v1126
      %1129 = vperm.xlu0 %1128, %v1124
      %v1130 = vpop.permute.xlu0 %1129
      %v1131 = vperm.slane %v989, 2
      %v1132 = vlaneseq
      %v1133 = vshrl.u32 %v1132, 7
      %1135 = vset.pattern.permute.xlu0 %v1133
      %1136 = vperm.xlu0 %1135, %v1131
      %v1137 = vpop.permute.xlu0 %1136
      %v1138 = vperm.slane %v989, 3
      %v1139 = vlaneseq
      %v1140 = vshrl.u32 %v1139, 7
      %1142 = vset.pattern.permute.xlu0 %v1140
      %1143 = vperm.xlu0 %1142, %v1138
      %v1144 = vpop.permute.xlu0 %1143
      %v1145 = vperm.slane %v989, 4
      %v1146 = vlaneseq
      %v1147 = vshrl.u32 %v1146, 7
      %1149 = vset.pattern.permute.xlu0 %v1147
      %1150 = vperm.xlu0 %1149, %v1145
      %v1151 = vpop.permute.xlu0 %1150
      %v1152 = vperm.slane %v989, 5
      %v1153 = vlaneseq
      %v1154 = vshrl.u32 %v1153, 7
      %1156 = vset.pattern.permute.xlu0 %v1154
      %1157 = vperm.xlu0 %1156, %v1152
      %v1158 = vpop.permute.xlu0 %1157
      %v1159 = vperm.slane %v989, 6
      %v1160 = vlaneseq
      %v1161 = vshrl.u32 %v1160, 7
      %1163 = vset.pattern.permute.xlu0 %v1161
      %1164 = vperm.xlu0 %1163, %v1159
      %v1165 = vpop.permute.xlu0 %1164
      %v1166 = vperm.slane %v989, 7
      %v1167 = vlaneseq
      %v1168 = vshrl.u32 %v1167, 7
      %1170 = vset.pattern.permute.xlu0 %v1168
      %1171 = vperm.xlu0 %1170, %v1166
      %v1172 = vpop.permute.xlu0 %1171
      %v1174 = vrot.slane %v949, 1
      %v1175 = vrot.slane %v949, 2
      %v1176 = vrot.slane %v949, 3
      %v1177 = vrot.slane %v949, 4
      %v1178 = vrot.slane %v949, 5
      %v1179 = vrot.slane %v949, 6
      %v1180 = vrot.slane %v949, 7
      %v1181 = vperm.slane %v949, 0
      %v1182 = vperm.slane %v1174, 0
      %v1183 = vperm.slane %v1175, 0
      %v1184 = vperm.slane %v1176, 0
      %v1185 = vperm.slane %v1177, 0
      %v1186 = vperm.slane %v1178, 0
      %v1187 = vperm.slane %v1179, 0
      %v1188 = vperm.slane %v1180, 0
      %v1197 = vmul.f32 %v1123, %v1181
      %v1198 = vmul.f32 %v1130, %v1182
      %v1199 = vmul.f32 %v1137, %v1183
      %v1200 = vmul.f32 %v1144, %v1184
      %v1201 = vmul.f32 %v1151, %v1185
      %v1202 = vmul.f32 %v1158, %v1186
      %v1203 = vmul.f32 %v1165, %v1187
      %v1204 = vmul.f32 %v1172, %v1188
      %v1205 = vadd.f32 %v1197, 0.0
      %v1206 = vadd.f32 %v1198, 0.0
      %v1207 = vadd.f32 %v1199, 0.0
      %v1208 = vadd.f32 %v1200, 0.0
      %v1209 = vadd.f32 %v1201, 0.0
      %v1210 = vadd.f32 %v1202, 0.0
      %v1211 = vadd.f32 %v1203, 0.0
      %v1212 = vadd.f32 %v1204, 0.0
      %v1213 = vperm.slane %v1009, 0
      %v1214 = vlaneseq
      %v1215 = vshrl.u32 %v1214, 7
      %1217 = vset.pattern.permute.xlu0 %v1215
      %1218 = vperm.xlu0 %1217, %v1213
      %v1219 = vpop.permute.xlu0 %1218
      %v1220 = vperm.slane %v1009, 1
      %v1221 = vlaneseq
      %v1222 = vshrl.u32 %v1221, 7
      %1224 = vset.pattern.permute.xlu0 %v1222
      %1225 = vperm.xlu0 %1224, %v1220
      %v1226 = vpop.permute.xlu0 %1225
      %v1227 = vperm.slane %v1009, 2
      %v1228 = vlaneseq
      %v1229 = vshrl.u32 %v1228, 7
      %1231 = vset.pattern.permute.xlu0 %v1229
      %1232 = vperm.xlu0 %1231, %v1227
      %v1233 = vpop.permute.xlu0 %1232
      %v1234 = vperm.slane %v1009, 3
      %v1235 = vlaneseq
      %v1236 = vshrl.u32 %v1235, 7
      %1238 = vset.pattern.permute.xlu0 %v1236
      %1239 = vperm.xlu0 %1238, %v1234
      %v1240 = vpop.permute.xlu0 %1239
      %v1241 = vperm.slane %v1009, 4
      %v1242 = vlaneseq
      %v1243 = vshrl.u32 %v1242, 7
      %1245 = vset.pattern.permute.xlu0 %v1243
      %1246 = vperm.xlu0 %1245, %v1241
      %v1247 = vpop.permute.xlu0 %1246
      %v1248 = vperm.slane %v1009, 5
      %v1249 = vlaneseq
      %v1250 = vshrl.u32 %v1249, 7
      %1252 = vset.pattern.permute.xlu0 %v1250
      %1253 = vperm.xlu0 %1252, %v1248
      %v1254 = vpop.permute.xlu0 %1253
      %v1255 = vperm.slane %v1009, 6
      %v1256 = vlaneseq
      %v1257 = vshrl.u32 %v1256, 7
      %1259 = vset.pattern.permute.xlu0 %v1257
      %1260 = vperm.xlu0 %1259, %v1255
      %v1261 = vpop.permute.xlu0 %1260
      %v1262 = vperm.slane %v1009, 7
      %v1263 = vlaneseq
      %v1264 = vshrl.u32 %v1263, 7
      %1266 = vset.pattern.permute.xlu0 %v1264
      %1267 = vperm.xlu0 %1266, %v1262
      %v1268 = vpop.permute.xlu0 %1267
      %v1270 = vrot.slane %v969, 1
      %v1271 = vrot.slane %v969, 2
      %v1272 = vrot.slane %v969, 3
      %v1273 = vrot.slane %v969, 4
      %v1274 = vrot.slane %v969, 5
      %v1275 = vrot.slane %v969, 6
      %v1276 = vrot.slane %v969, 7
      %v1277 = vperm.slane %v969, 0
      %v1278 = vperm.slane %v1270, 0
      %v1279 = vperm.slane %v1271, 0
      %v1280 = vperm.slane %v1272, 0
      %v1281 = vperm.slane %v1273, 0
      %v1282 = vperm.slane %v1274, 0
      %v1283 = vperm.slane %v1275, 0
      %v1284 = vperm.slane %v1276, 0
      %v1293 = vmul.f32 %v1219, %v1277
      %v1294 = vmul.f32 %v1226, %v1278
      %v1295 = vmul.f32 %v1233, %v1279
      %v1296 = vmul.f32 %v1240, %v1280
      %v1297 = vmul.f32 %v1247, %v1281
      %v1298 = vmul.f32 %v1254, %v1282
      %v1299 = vmul.f32 %v1261, %v1283
      %v1300 = vmul.f32 %v1268, %v1284
      %v1301 = vadd.f32 %v1205, %v1293
      %v1302 = vadd.f32 %v1206, %v1294
      %v1303 = vadd.f32 %v1207, %v1295
      %v1304 = vadd.f32 %v1208, %v1296
      %v1305 = vadd.f32 %v1209, %v1297
      %v1306 = vadd.f32 %v1210, %v1298
      %v1307 = vadd.f32 %v1211, %v1299
      %v1308 = vadd.f32 %v1212, %v1300
      %v1309 = vld [vmem:[%s5] sm:$0x1f]
      %v1310 = vadd.f32 %v1301, %v1309
      %v1311 = vadd.f32 %v1302, %v1309
      %v1312 = vadd.f32 %v1303, %v1309
      %v1313 = vadd.f32 %v1304, %v1309
      %v1314 = vadd.f32 %v1305, %v1309
      %v1315 = vadd.f32 %v1306, %v1309
      %v1316 = vadd.f32 %v1307, %v1309
      %v1317 = vadd.f32 %v1308, %v1309
      %vm1318 = vcmask 20480
      %v1319 = vsel %vm1318, %v1310, -inf
      %v1320 = vrot.slane %v1319, 4
      %v1321 = vmax.f32 %v1319, %v1320
      %v1322 = vrot.slane %v1321, 2
      %v1323 = vmax.f32 %v1321, %v1322
      %v1324 = vrot.slane %v1323, 1
      %v1325 = vmax.f32 %v1323, %v1324
      %v1326 = vsel %vm1318, %v1311, -inf
      %v1327 = vrot.slane %v1326, 4
      %v1328 = vmax.f32 %v1326, %v1327
      %v1329 = vrot.slane %v1328, 2
      %v1330 = vmax.f32 %v1328, %v1329
      %v1331 = vrot.slane %v1330, 1
      %v1332 = vmax.f32 %v1330, %v1331
      %v1333 = vsel %vm1318, %v1312, -inf
      %v1334 = vrot.slane %v1333, 4
      %v1335 = vmax.f32 %v1333, %v1334
      %v1336 = vrot.slane %v1335, 2
      %v1337 = vmax.f32 %v1335, %v1336
      %v1338 = vrot.slane %v1337, 1
      %v1339 = vmax.f32 %v1337, %v1338
      %v1340 = vsel %vm1318, %v1313, -inf
      %v1341 = vrot.slane %v1340, 4
      %v1342 = vmax.f32 %v1340, %v1341
      %v1343 = vrot.slane %v1342, 2
      %v1344 = vmax.f32 %v1342, %v1343
      %v1345 = vrot.slane %v1344, 1
      %v1346 = vmax.f32 %v1344, %v1345
      %v1347 = vsel %vm1318, %v1314, -inf
      %v1348 = vrot.slane %v1347, 4
      %v1349 = vmax.f32 %v1347, %v1348
      %v1350 = vrot.slane %v1349, 2
      %v1351 = vmax.f32 %v1349, %v1350
      %v1352 = vrot.slane %v1351, 1
      %v1353 = vmax.f32 %v1351, %v1352
      %v1354 = vsel %vm1318, %v1315, -inf
      %v1355 = vrot.slane %v1354, 4
      %v1356 = vmax.f32 %v1354, %v1355
      %v1357 = vrot.slane %v1356, 2
      %v1358 = vmax.f32 %v1356, %v1357
      %v1359 = vrot.slane %v1358, 1
      %v1360 = vmax.f32 %v1358, %v1359
      %v1361 = vsel %vm1318, %v1316, -inf
      %v1362 = vrot.slane %v1361, 4
      %v1363 = vmax.f32 %v1361, %v1362
      %v1364 = vrot.slane %v1363, 2
      %v1365 = vmax.f32 %v1363, %v1364
      %v1366 = vrot.slane %v1365, 1
      %v1367 = vmax.f32 %v1365, %v1366
      %v1368 = vsel %vm1318, %v1317, -inf
      %v1369 = vrot.slane %v1368, 4
      %v1370 = vmax.f32 %v1368, %v1369
      %v1371 = vrot.slane %v1370, 2
      %v1372 = vmax.f32 %v1370, %v1371
      %v1373 = vrot.slane %v1372, 1
      %v1374 = vmax.f32 %v1372, %v1373
      %v1375 = vsub.f32 %v1310, %v1325
      %v1376 = vsub.f32 %v1311, %v1332
      %v1377 = vsub.f32 %v1312, %v1339
      %v1378 = vsub.f32 %v1313, %v1346
      %v1379 = vsub.f32 %v1314, %v1353
      %v1380 = vsub.f32 %v1315, %v1360
      %v1381 = vsub.f32 %v1316, %v1367
      %v1382 = vsub.f32 %v1317, %v1374
      %v1383 = vmul.f32 %v1375, 1.442695
      %v1384 = vpow.pop %v1383
      %v1385 = vmul.f32 %v1376, 1.442695
      %v1386 = vpow.pop %v1385
      %v1387 = vmul.f32 %v1377, 1.442695
      %v1388 = vpow.pop %v1387
      %v1389 = vmul.f32 %v1378, 1.442695
      %v1390 = vpow.pop %v1389
      %v1391 = vmul.f32 %v1379, 1.442695
      %v1392 = vpow.pop %v1391
      %v1393 = vmul.f32 %v1380, 1.442695
      %v1394 = vpow.pop %v1393
      %v1395 = vmul.f32 %v1381, 1.442695
      %v1396 = vpow.pop %v1395
      %v1397 = vmul.f32 %v1382, 1.442695
      %v1398 = vpow.pop %v1397
      %v1399 = vsel %vm1318, %v1384, 0.0
      %v1400 = vrot.slane %v1399, 4
      %v1401 = vadd.f32 %v1399, %v1400
      %v1402 = vrot.slane %v1401, 2
      %v1403 = vadd.f32 %v1401, %v1402
      %v1404 = vrot.slane %v1403, 1
      %v1405 = vadd.f32 %v1403, %v1404
      %v1406 = vsel %vm1318, %v1386, 0.0
      %v1407 = vrot.slane %v1406, 4
      %v1408 = vadd.f32 %v1406, %v1407
      %v1409 = vrot.slane %v1408, 2
      %v1410 = vadd.f32 %v1408, %v1409
      %v1411 = vrot.slane %v1410, 1
      %v1412 = vadd.f32 %v1410, %v1411
      %v1413 = vsel %vm1318, %v1388, 0.0
      %v1414 = vrot.slane %v1413, 4
      %v1415 = vadd.f32 %v1413, %v1414
      %v1416 = vrot.slane %v1415, 2
      %v1417 = vadd.f32 %v1415, %v1416
      %v1418 = vrot.slane %v1417, 1
      %v1419 = vadd.f32 %v1417, %v1418
      %v1420 = vsel %vm1318, %v1390, 0.0
      %v1421 = vrot.slane %v1420, 4
      %v1422 = vadd.f32 %v1420, %v1421
      %v1423 = vrot.slane %v1422, 2
      %v1424 = vadd.f32 %v1422, %v1423
      %v1425 = vrot.slane %v1424, 1
      %v1426 = vadd.f32 %v1424, %v1425
      %v1427 = vsel %vm1318, %v1392, 0.0
      %v1428 = vrot.slane %v1427, 4
      %v1429 = vadd.f32 %v1427, %v1428
      %v1430 = vrot.slane %v1429, 2
      %v1431 = vadd.f32 %v1429, %v1430
      %v1432 = vrot.slane %v1431, 1
      %v1433 = vadd.f32 %v1431, %v1432
      %v1434 = vsel %vm1318, %v1394, 0.0
      %v1435 = vrot.slane %v1434, 4
      %v1436 = vadd.f32 %v1434, %v1435
      %v1437 = vrot.slane %v1436, 2
      %v1438 = vadd.f32 %v1436, %v1437
      %v1439 = vrot.slane %v1438, 1
      %v1440 = vadd.f32 %v1438, %v1439
      %v1441 = vsel %vm1318, %v1396, 0.0
      %v1442 = vrot.slane %v1441, 4
      %v1443 = vadd.f32 %v1441, %v1442
      %v1444 = vrot.slane %v1443, 2
      %v1445 = vadd.f32 %v1443, %v1444
      %v1446 = vrot.slane %v1445, 1
      %v1447 = vadd.f32 %v1445, %v1446
      %v1448 = vsel %vm1318, %v1398, 0.0
      %v1449 = vrot.slane %v1448, 4
      %v1450 = vadd.f32 %v1448, %v1449
      %v1451 = vrot.slane %v1450, 2
      %v1452 = vadd.f32 %v1450, %v1451
      %v1453 = vrot.slane %v1452, 1
      %v1454 = vadd.f32 %v1452, %v1453
      %v1455 = vrcp.pop %v1405
      %v1456 = vmul.f32 %v1405, %v1455
      %v1457 = vsub.f32 1.0, %v1456
      %v1458 = vmul.f32 %v1455, %v1457
      %v1459 = vadd.f32 %v1455, %v1458
      %vm1460 = vweird.f32 %v1405
      %vm1461 = vweird.f32 %v1455
      %vm1462 = vmor %vm1460, %vm1461
      %v1463 = vsel %vm1462, %v1455, %v1459
      %v1464 = vand.u32 2147483647, %v1405
      %vm1465 = vcmp.eq.f32.partialorder %v1464, 8.507059e+37
      %v1466 = vand.u32 %v1405, 2147483648
      %v1467 = vor.u32 1.1754944e-38, %v1466
      %v1468 = vsel %vm1465, %v1467, %v1463
      %v1469 = vmul.f32 %v1384, %v1468
      %v1470 = vrcp.pop %v1412
      %v1471 = vmul.f32 %v1412, %v1470
      %v1472 = vsub.f32 1.0, %v1471
      %v1473 = vmul.f32 %v1470, %v1472
      %v1474 = vadd.f32 %v1470, %v1473
      %vm1475 = vweird.f32 %v1412
      %vm1476 = vweird.f32 %v1470
      %vm1477 = vmor %vm1475, %vm1476
      %v1478 = vsel %vm1477, %v1470, %v1474
      %v1479 = vand.u32 2147483647, %v1412
      %vm1480 = vcmp.eq.f32.partialorder %v1479, 8.507059e+37
      %v1481 = vand.u32 %v1412, 2147483648
      %v1482 = vor.u32 1.1754944e-38, %v1481
      %v1483 = vsel %vm1480, %v1482, %v1478
      %v1484 = vmul.f32 %v1386, %v1483
      %v1485 = vrcp.pop %v1419
      %v1486 = vmul.f32 %v1419, %v1485
      %v1487 = vsub.f32 1.0, %v1486
      %v1488 = vmul.f32 %v1485, %v1487
      %v1489 = vadd.f32 %v1485, %v1488
      %vm1490 = vweird.f32 %v1419
      %vm1491 = vweird.f32 %v1485
      %vm1492 = vmor %vm1490, %vm1491
      %v1493 = vsel %vm1492, %v1485, %v1489
      %v1494 = vand.u32 2147483647, %v1419
      %vm1495 = vcmp.eq.f32.partialorder %v1494, 8.507059e+37
      %v1496 = vand.u32 %v1419, 2147483648
      %v1497 = vor.u32 1.1754944e-38, %v1496
      %v1498 = vsel %vm1495, %v1497, %v1493
      %v1499 = vmul.f32 %v1388, %v1498
      %v1500 = vrcp.pop %v1426
      %v1501 = vmul.f32 %v1426, %v1500
      %v1502 = vsub.f32 1.0, %v1501
      %v1503 = vmul.f32 %v1500, %v1502
      %v1504 = vadd.f32 %v1500, %v1503
      %vm1505 = vweird.f32 %v1426
      %vm1506 = vweird.f32 %v1500
      %vm1507 = vmor %vm1505, %vm1506
      %v1508 = vsel %vm1507, %v1500, %v1504
      %v1509 = vand.u32 2147483647, %v1426
      %vm1510 = vcmp.eq.f32.partialorder %v1509, 8.507059e+37
      %v1511 = vand.u32 %v1426, 2147483648
      %v1512 = vor.u32 1.1754944e-38, %v1511
      %v1513 = vsel %vm1510, %v1512, %v1508
      %v1514 = vmul.f32 %v1390, %v1513
      %v1515 = vrcp.pop %v1433
      %v1516 = vmul.f32 %v1433, %v1515
      %v1517 = vsub.f32 1.0, %v1516
      %v1518 = vmul.f32 %v1515, %v1517
      %v1519 = vadd.f32 %v1515, %v1518
      %vm1520 = vweird.f32 %v1433
      %vm1521 = vweird.f32 %v1515
      %vm1522 = vmor %vm1520, %vm1521
      %v1523 = vsel %vm1522, %v1515, %v1519
      %v1524 = vand.u32 2147483647, %v1433
      %vm1525 = vcmp.eq.f32.partialorder %v1524, 8.507059e+37
      %v1526 = vand.u32 %v1433, 2147483648
      %v1527 = vor.u32 1.1754944e-38, %v1526
      %v1528 = vsel %vm1525, %v1527, %v1523
      %v1529 = vmul.f32 %v1392, %v1528
      %v1530 = vrcp.pop %v1440
      %v1531 = vmul.f32 %v1440, %v1530
      %v1532 = vsub.f32 1.0, %v1531
      %v1533 = vmul.f32 %v1530, %v1532
      %v1534 = vadd.f32 %v1530, %v1533
      %vm1535 = vweird.f32 %v1440
      %vm1536 = vweird.f32 %v1530
      %vm1537 = vmor %vm1535, %vm1536
      %v1538 = vsel %vm1537, %v1530, %v1534
      %v1539 = vand.u32 2147483647, %v1440
      %vm1540 = vcmp.eq.f32.partialorder %v1539, 8.507059e+37
      %v1541 = vand.u32 %v1440, 2147483648
      %v1542 = vor.u32 1.1754944e-38, %v1541
      %v1543 = vsel %vm1540, %v1542, %v1538
      %v1544 = vmul.f32 %v1394, %v1543
      %v1545 = vrcp.pop %v1447
      %v1546 = vmul.f32 %v1447, %v1545
      %v1547 = vsub.f32 1.0, %v1546
      %v1548 = vmul.f32 %v1545, %v1547
      %v1549 = vadd.f32 %v1545, %v1548
      %vm1550 = vweird.f32 %v1447
      %vm1551 = vweird.f32 %v1545
      %vm1552 = vmor %vm1550, %vm1551
      %v1553 = vsel %vm1552, %v1545, %v1549
      %v1554 = vand.u32 2147483647, %v1447
      %vm1555 = vcmp.eq.f32.partialorder %v1554, 8.507059e+37
      %v1556 = vand.u32 %v1447, 2147483648
      %v1557 = vor.u32 1.1754944e-38, %v1556
      %v1558 = vsel %vm1555, %v1557, %v1553
      %v1559 = vmul.f32 %v1396, %v1558
      %v1560 = vrcp.pop %v1454
      %v1561 = vmul.f32 %v1454, %v1560
      %v1562 = vsub.f32 1.0, %v1561
      %v1563 = vmul.f32 %v1560, %v1562
      %v1564 = vadd.f32 %v1560, %v1563
      %vm1565 = vweird.f32 %v1454
      %vm1566 = vweird.f32 %v1560
      %vm1567 = vmor %vm1565, %vm1566
      %v1568 = vsel %vm1567, %v1560, %v1564
      %v1569 = vand.u32 2147483647, %v1454
      %vm1570 = vcmp.eq.f32.partialorder %v1569, 8.507059e+37
      %v1571 = vand.u32 %v1454, 2147483648
      %v1572 = vor.u32 1.1754944e-38, %v1571
      %v1573 = vsel %vm1570, %v1572, %v1568
      %v1574 = vmul.f32 %v1398, %v1573
      %v1576 = vrot.slane %v1115, 1
      %v1577 = vrot.slane %v1115, 2
      %v1578 = vrot.slane %v1115, 3
      %v1579 = vrot.slane %v1115, 4
      %v1580 = vrot.slane %v1115, 5
      %v1581 = vrot.slane %v1115, 6
      %v1582 = vrot.slane %v1115, 7
      %v1583 = vperm.slane %v1115, 0
      %v1584 = vperm.slane %v1576, 0
      %v1585 = vperm.slane %v1577, 0
      %v1586 = vperm.slane %v1578, 0
      %v1587 = vperm.slane %v1579, 0
      %v1588 = vperm.slane %v1580, 0
      %v1589 = vperm.slane %v1581, 0
      %v1590 = vperm.slane %v1582, 0
      %v1599 = vmul.f32 %v1469, %v1583
      %v1600 = vmul.f32 %v1484, %v1584
      %v1601 = vmul.f32 %v1499, %v1585
      %v1602 = vmul.f32 %v1514, %v1586
      %v1603 = vmul.f32 %v1529, %v1587
      %v1604 = vmul.f32 %v1544, %v1588
      %v1605 = vmul.f32 %v1559, %v1589
      %v1606 = vmul.f32 %v1574, %v1590
      %v1607 = vsel %vm1318, %v1599, 0.0
      %1608 = vadd.xlane.f32.xlu0 %v1607
      %v1609 = vpop.xlane.xlu0 %1608
      %v1610 = vsel %vm1318, %v1600, 0.0
      %1611 = vadd.xlane.f32.xlu0 %v1610
      %v1612 = vpop.xlane.xlu0 %1611
      %v1613 = vsel %vm1318, %v1601, 0.0
      %1614 = vadd.xlane.f32.xlu0 %v1613
      %v1615 = vpop.xlane.xlu0 %1614
      %v1616 = vsel %vm1318, %v1602, 0.0
      %1617 = vadd.xlane.f32.xlu0 %v1616
      %v1618 = vpop.xlane.xlu0 %1617
      %v1619 = vsel %vm1318, %v1603, 0.0
      %1620 = vadd.xlane.f32.xlu0 %v1619
      %v1621 = vpop.xlane.xlu0 %1620
      %v1622 = vsel %vm1318, %v1604, 0.0
      %1623 = vadd.xlane.f32.xlu0 %v1622
      %v1624 = vpop.xlane.xlu0 %1623
      %v1625 = vsel %vm1318, %v1605, 0.0
      %1626 = vadd.xlane.f32.xlu0 %v1625
      %v1627 = vpop.xlane.xlu0 %1626
      %v1628 = vsel %vm1318, %v1606, 0.0
      %1629 = vadd.xlane.f32.xlu0 %v1628
      %v1630 = vpop.xlane.xlu0 %1629
      %v1639 = vadd.s32 %v680, 4294967293
      %v1640 = vperm.slane %v1609, %v1639
      %v1641 = vperm.slane %v1612, %v1639
      %v1642 = vperm.slane %v1615, %v1639
      %v1643 = vperm.slane %v1618, %v1639
      %v1644 = vperm.slane %v1621, %v1639
      %v1645 = vperm.slane %v1624, %v1639
      %v1646 = vperm.slane %v1627, %v1639
      %v1647 = vperm.slane %v1630, %v1639
      %v1648 = vsel %vm815, %v1641, %v1640
      %v1649 = vsel %vm817, %v1642, %v1648
      %v1650 = vsel %vm819, %v1643, %v1649
      %v1651 = vsel %vm821, %v1644, %v1650
      %v1652 = vsel %vm823, %v1645, %v1651
      %v1653 = vsel %vm825, %v1646, %v1652
      %v1654 = vsel %vm827, %v1647, %v1653
      %vm1656 = vcmask 64536
      %1657 = vst.msk [vmem:[%s281] sm:$0xff] %vm1656, %v1654
      %v1666 = vrot.slane %v1484, 7
      %v1667 = vsel %vm815, %v1666, %v1469
      %v1668 = vrot.slane %v1499, 6
      %v1669 = vsel %vm817, %v1668, %v1667
      %v1670 = vrot.slane %v1514, 5
      %v1671 = vsel %vm819, %v1670, %v1669
      %v1672 = vrot.slane %v1529, 4
      %v1673 = vsel %vm821, %v1672, %v1671
      %v1674 = vrot.slane %v1544, 3
      %v1675 = vsel %vm823, %v1674, %v1673
      %v1676 = vrot.slane %v1559, 2
      %v1677 = vsel %vm825, %v1676, %v1675
      %v1678 = vrot.slane %v1574, 1
      %v1679 = vsel %vm827, %v1678, %v1677
      %1680 = vrot.lane.b32.xlu0 %v1679, 15
      %v1681 = vpop.permute.xlu0 %1680
      %vm1683 = vcmask 146552
      %1684 = vst.msk [vmem:[%s281] sm:$0xff] %vm1683, %v1681
      %v1685 = vsel %vm817, %v1666, %v1469
      %v1686 = vsel %vm819, %v1668, %v1685
      %v1687 = vsel %vm821, %v1670, %v1686
      %v1688 = vsel %vm823, %v1672, %v1687
      %v1689 = vsel %vm825, %v1674, %v1688
      %v1690 = vsel %vm827, %v1676, %v1689
      %1691 = vrot.lane.b32.xlu0 %v1690, 18
      %v1692 = vpop.permute.xlu0 %1691
      %1693 = vrot.lane.b32.xlu0 %v1678, 18
      %v1694 = vpop.permute.xlu0 %1693
      %vm1697 = vcmask 171153
      %1698 = vst.msk [vmem:[%s281 - $0x1] sm:$0xfe] %vm1697, %v1692
      %vm1699 = vcmask 163984
      %1700 = vst.msk [vmem:[%s281 + $0x7] sm:$0x1] %vm1699, %v1694
      %v1701 = vsel %vm819, %v1666, %v1469
      %v1702 = vsel %vm821, %v1668, %v1701
      %v1703 = vsel %vm823, %v1670, %v1702
      %v1704 = vsel %vm825, %v1672, %v1703
      %v1705 = vsel %vm827, %v1674, %v1704
      %v1706 = vsel %vm815, %v1678, %v1676
      %1707 = vrot.lane.b32.xlu0 %v1705, 21
      %v1708 = vpop.permute.xlu0 %1707
      %1709 = vrot.lane.b32.xlu0 %v1706, 21
      %v1710 = vpop.permute.xlu0 %1709
      %vm1713 = vcmask 195754
      %1714 = vst.msk [vmem:[%s281 - $0x2] sm:$0xfc] %vm1713, %v1708
      %vm1715 = vcmask 189608
      %1716 = vst.msk [vmem:[%s281 + $0x6] sm:$0x3] %vm1715, %v1710
      %v1717 = vsel %vm821, %v1666, %v1469
      %v1718 = vsel %vm823, %v1668, %v1717
      %v1719 = vsel %vm825, %v1670, %v1718
      %v1720 = vsel %vm827, %v1672, %v1719
      %v1721 = vsel %vm815, %v1676, %v1674
      %v1722 = vsel %vm817, %v1678, %v1721
      %1723 = vrot.lane.b32.xlu0 %v1720, 24
      %v1724 = vpop.permute.xlu0 %1723
      %1725 = vrot.lane.b32.xlu0 %v1722, 24
      %v1726 = vpop.permute.xlu0 %1725
      %vm1729 = vcmask 220355
      %1730 = vst.msk [vmem:[%s281 - $0x3] sm:$0xf8] %vm1729, %v1724
      %vm1731 = vcmask 215232
      %1732 = vst.msk [vmem:[%s281 + $0x5] sm:$0x7] %vm1731, %v1726
      %v1733 = vsel %vm823, %v1666, %v1469
      %v1734 = vsel %vm825, %v1668, %v1733
      %v1735 = vsel %vm827, %v1670, %v1734
      %v1736 = vsel %vm815, %v1674, %v1672
      %v1737 = vsel %vm817, %v1676, %v1736
      %v1738 = vsel %vm819, %v1678, %v1737
      %1739 = vrot.lane.b32.xlu0 %v1735, 27
      %v1740 = vpop.permute.xlu0 %1739
      %1741 = vrot.lane.b32.xlu0 %v1738, 27
      %v1742 = vpop.permute.xlu0 %1741
      %vm1745 = vcmask 244956
      %1746 = vst.msk [vmem:[%s281 - $0x4] sm:$0xf0] %vm1745, %v1740
      %vm1747 = vcmask 240856
      %1748 = vst.msk [vmem:[%s281 + $0x4] sm:$0xf] %vm1747, %v1742
      %v1749 = vperm.slane %v1069, 0
      %v1750 = vlaneseq
      %v1751 = vshrl.u32 %v1750, 7
      %1753 = vset.pattern.permute.xlu0 %v1751
      %1754 = vperm.xlu0 %1753, %v1749
      %v1755 = vpop.permute.xlu0 %1754
      %v1756 = vperm.slane %v1069, 1
      %v1757 = vlaneseq
      %v1758 = vshrl.u32 %v1757, 7
      %1760 = vset.pattern.permute.xlu0 %v1758
      %1761 = vperm.xlu0 %1760, %v1756
      %v1762 = vpop.permute.xlu0 %1761
      %v1763 = vperm.slane %v1069, 2
      %v1764 = vlaneseq
      %v1765 = vshrl.u32 %v1764, 7
      %1767 = vset.pattern.permute.xlu0 %v1765
      %1768 = vperm.xlu0 %1767, %v1763
      %v1769 = vpop.permute.xlu0 %1768
      %v1770 = vperm.slane %v1069, 3
      %v1771 = vlaneseq
      %v1772 = vshrl.u32 %v1771, 7
      %1774 = vset.pattern.permute.xlu0 %v1772
      %1775 = vperm.xlu0 %1774, %v1770
      %v1776 = vpop.permute.xlu0 %1775
      %v1777 = vperm.slane %v1069, 4
      %v1778 = vlaneseq
      %v1779 = vshrl.u32 %v1778, 7
      %1781 = vset.pattern.permute.xlu0 %v1779
      %1782 = vperm.xlu0 %1781, %v1777
      %v1783 = vpop.permute.xlu0 %1782
      %v1784 = vperm.slane %v1069, 5
      %v1785 = vlaneseq
      %v1786 = vshrl.u32 %v1785, 7
      %1788 = vset.pattern.permute.xlu0 %v1786
      %1789 = vperm.xlu0 %1788, %v1784
      %v1790 = vpop.permute.xlu0 %1789
      %v1791 = vperm.slane %v1069, 6
      %v1792 = vlaneseq
      %v1793 = vshrl.u32 %v1792, 7
      %1795 = vset.pattern.permute.xlu0 %v1793
      %1796 = vperm.xlu0 %1795, %v1791
      %v1797 = vpop.permute.xlu0 %1796
      %v1798 = vperm.slane %v1069, 7
      %v1799 = vlaneseq
      %v1800 = vshrl.u32 %v1799, 7
      %1802 = vset.pattern.permute.xlu0 %v1800
      %1803 = vperm.xlu0 %1802, %v1798
      %v1804 = vpop.permute.xlu0 %1803
      %v1806 = vrot.slane %v1029, 1
      %v1807 = vrot.slane %v1029, 2
      %v1808 = vrot.slane %v1029, 3
      %v1809 = vrot.slane %v1029, 4
      %v1810 = vrot.slane %v1029, 5
      %v1811 = vrot.slane %v1029, 6
      %v1812 = vrot.slane %v1029, 7
      %v1813 = vperm.slane %v1029, 0
      %v1814 = vperm.slane %v1806, 0
      %v1815 = vperm.slane %v1807, 0
      %v1816 = vperm.slane %v1808, 0
      %v1817 = vperm.slane %v1809, 0
      %v1818 = vperm.slane %v1810, 0
      %v1819 = vperm.slane %v1811, 0
      %v1820 = vperm.slane %v1812, 0
      %v1829 = vmul.f32 %v1755, %v1813
      %v1830 = vmul.f32 %v1762, %v1814
      %v1831 = vmul.f32 %v1769, %v1815
      %v1832 = vmul.f32 %v1776, %v1816
      %v1833 = vmul.f32 %v1783, %v1817
      %v1834 = vmul.f32 %v1790, %v1818
      %v1835 = vmul.f32 %v1797, %v1819
      %v1836 = vmul.f32 %v1804, %v1820
      %v1837 = vadd.f32 %v1829, 0.0
      %v1838 = vadd.f32 %v1830, 0.0
      %v1839 = vadd.f32 %v1831, 0.0
      %v1840 = vadd.f32 %v1832, 0.0
      %v1841 = vadd.f32 %v1833, 0.0
      %v1842 = vadd.f32 %v1834, 0.0
      %v1843 = vadd.f32 %v1835, 0.0
      %v1844 = vadd.f32 %v1836, 0.0
      %v1845 = vperm.slane %v1089, 0
      %v1846 = vlaneseq
      %v1847 = vshrl.u32 %v1846, 7
      %1849 = vset.pattern.permute.xlu0 %v1847
      %1850 = vperm.xlu0 %1849, %v1845
      %v1851 = vpop.permute.xlu0 %1850
      %v1852 = vperm.slane %v1089, 1
      %v1853 = vlaneseq
      %v1854 = vshrl.u32 %v1853, 7
      %1856 = vset.pattern.permute.xlu0 %v1854
      %1857 = vperm.xlu0 %1856, %v1852
      %v1858 = vpop.permute.xlu0 %1857
      %v1859 = vperm.slane %v1089, 2
      %v1860 = vlaneseq
      %v1861 = vshrl.u32 %v1860, 7
      %1863 = vset.pattern.permute.xlu0 %v1861
      %1864 = vperm.xlu0 %1863, %v1859
      %v1865 = vpop.permute.xlu0 %1864
      %v1866 = vperm.slane %v1089, 3
      %v1867 = vlaneseq
      %v1868 = vshrl.u32 %v1867, 7
      %1870 = vset.pattern.permute.xlu0 %v1868
      %1871 = vperm.xlu0 %1870, %v1866
      %v1872 = vpop.permute.xlu0 %1871
      %v1873 = vperm.slane %v1089, 4
      %v1874 = vlaneseq
      %v1875 = vshrl.u32 %v1874, 7
      %1877 = vset.pattern.permute.xlu0 %v1875
      %1878 = vperm.xlu0 %1877, %v1873
      %v1879 = vpop.permute.xlu0 %1878
      %v1880 = vperm.slane %v1089, 5
      %v1881 = vlaneseq
      %v1882 = vshrl.u32 %v1881, 7
      %1884 = vset.pattern.permute.xlu0 %v1882
      %1885 = vperm.xlu0 %1884, %v1880
      %v1886 = vpop.permute.xlu0 %1885
      %v1887 = vperm.slane %v1089, 6
      %v1888 = vlaneseq
      %v1889 = vshrl.u32 %v1888, 7
      %1891 = vset.pattern.permute.xlu0 %v1889
      %1892 = vperm.xlu0 %1891, %v1887
      %v1893 = vpop.permute.xlu0 %1892
      %v1894 = vperm.slane %v1089, 7
      %v1895 = vlaneseq
      %v1896 = vshrl.u32 %v1895, 7
      %1898 = vset.pattern.permute.xlu0 %v1896
      %1899 = vperm.xlu0 %1898, %v1894
      %v1900 = vpop.permute.xlu0 %1899
      %v1902 = vrot.slane %v1049, 1
      %v1903 = vrot.slane %v1049, 2
      %v1904 = vrot.slane %v1049, 3
      %v1905 = vrot.slane %v1049, 4
      %v1906 = vrot.slane %v1049, 5
      %v1907 = vrot.slane %v1049, 6
      %v1908 = vrot.slane %v1049, 7
      %v1909 = vperm.slane %v1049, 0
      %v1910 = vperm.slane %v1902, 0
      %v1911 = vperm.slane %v1903, 0
      %v1912 = vperm.slane %v1904, 0
      %v1913 = vperm.slane %v1905, 0
      %v1914 = vperm.slane %v1906, 0
      %v1915 = vperm.slane %v1907, 0
      %v1916 = vperm.slane %v1908, 0
      %v1925 = vmul.f32 %v1851, %v1909
      %v1926 = vmul.f32 %v1858, %v1910
      %v1927 = vmul.f32 %v1865, %v1911
      %v1928 = vmul.f32 %v1872, %v1912
      %v1929 = vmul.f32 %v1879, %v1913
      %v1930 = vmul.f32 %v1886, %v1914
      %v1931 = vmul.f32 %v1893, %v1915
      %v1932 = vmul.f32 %v1900, %v1916
      %v1933 = vadd.f32 %v1837, %v1925
      %v1934 = vadd.f32 %v1838, %v1926
      %v1935 = vadd.f32 %v1839, %v1927
      %v1936 = vadd.f32 %v1840, %v1928
      %v1937 = vadd.f32 %v1841, %v1929
      %v1938 = vadd.f32 %v1842, %v1930
      %v1939 = vadd.f32 %v1843, %v1931
      %v1940 = vadd.f32 %v1844, %v1932
      %v1941 = vld [vmem:[%s6] sm:$0x7f]
      %v1942 = vadd.f32 %v1933, %v1941
      %v1943 = vadd.f32 %v1934, %v1941
      %v1944 = vadd.f32 %v1935, %v1941
      %v1945 = vadd.f32 %v1936, %v1941
      %v1946 = vadd.f32 %v1937, %v1941
      %v1947 = vadd.f32 %v1938, %v1941
      %v1948 = vadd.f32 %v1939, %v1941
      %v1949 = vadd.f32 %v1940, %v1941
      %vm1950 = vcmask 38912
      %v1951 = vsel %vm1950, %v1942, -inf
      %v1952 = vrot.slane %v1951, 4
      %v1953 = vmax.f32 %v1951, %v1952
      %v1954 = vrot.slane %v1953, 2
      %v1955 = vmax.f32 %v1953, %v1954
      %v1956 = vrot.slane %v1955, 1
      %v1957 = vmax.f32 %v1955, %v1956
      %v1958 = vsel %vm1950, %v1943, -inf
      %v1959 = vrot.slane %v1958, 4
      %v1960 = vmax.f32 %v1958, %v1959
      %v1961 = vrot.slane %v1960, 2
      %v1962 = vmax.f32 %v1960, %v1961
      %v1963 = vrot.slane %v1962, 1
      %v1964 = vmax.f32 %v1962, %v1963
      %v1965 = vsel %vm1950, %v1944, -inf
      %v1966 = vrot.slane %v1965, 4
      %v1967 = vmax.f32 %v1965, %v1966
      %v1968 = vrot.slane %v1967, 2
      %v1969 = vmax.f32 %v1967, %v1968
      %v1970 = vrot.slane %v1969, 1
      %v1971 = vmax.f32 %v1969, %v1970
      %v1972 = vsel %vm1950, %v1945, -inf
      %v1973 = vrot.slane %v1972, 4
      %v1974 = vmax.f32 %v1972, %v1973
      %v1975 = vrot.slane %v1974, 2
      %v1976 = vmax.f32 %v1974, %v1975
      %v1977 = vrot.slane %v1976, 1
      %v1978 = vmax.f32 %v1976, %v1977
      %v1979 = vsel %vm1950, %v1946, -inf
      %v1980 = vrot.slane %v1979, 4
      %v1981 = vmax.f32 %v1979, %v1980
      %v1982 = vrot.slane %v1981, 2
      %v1983 = vmax.f32 %v1981, %v1982
      %v1984 = vrot.slane %v1983, 1
      %v1985 = vmax.f32 %v1983, %v1984
      %v1986 = vsel %vm1950, %v1947, -inf
      %v1987 = vrot.slane %v1986, 4
      %v1988 = vmax.f32 %v1986, %v1987
      %v1989 = vrot.slane %v1988, 2
      %v1990 = vmax.f32 %v1988, %v1989
      %v1991 = vrot.slane %v1990, 1
      %v1992 = vmax.f32 %v1990, %v1991
      %v1993 = vsel %vm1950, %v1948, -inf
      %v1994 = vrot.slane %v1993, 4
      %v1995 = vmax.f32 %v1993, %v1994
      %v1996 = vrot.slane %v1995, 2
      %v1997 = vmax.f32 %v1995, %v1996
      %v1998 = vrot.slane %v1997, 1
      %v1999 = vmax.f32 %v1997, %v1998
      %v2000 = vsel %vm1950, %v1949, -inf
      %v2001 = vrot.slane %v2000, 4
      %v2002 = vmax.f32 %v2000, %v2001
      %v2003 = vrot.slane %v2002, 2
      %v2004 = vmax.f32 %v2002, %v2003
      %v2005 = vrot.slane %v2004, 1
      %v2006 = vmax.f32 %v2004, %v2005
      %v2007 = vsub.f32 %v1942, %v1957
      %v2008 = vsub.f32 %v1943, %v1964
      %v2009 = vsub.f32 %v1944, %v1971
      %v2010 = vsub.f32 %v1945, %v1978
      %v2011 = vsub.f32 %v1946, %v1985
      %v2012 = vsub.f32 %v1947, %v1992
      %v2013 = vsub.f32 %v1948, %v1999
      %v2014 = vsub.f32 %v1949, %v2006
      %v2015 = vmul.f32 %v2007, 1.442695
      %v2016 = vpow.pop %v2015
      %v2017 = vmul.f32 %v2008, 1.442695
      %v2018 = vpow.pop %v2017
      %v2019 = vmul.f32 %v2009, 1.442695
      %v2020 = vpow.pop %v2019
      %v2021 = vmul.f32 %v2010, 1.442695
      %v2022 = vpow.pop %v2021
      %v2023 = vmul.f32 %v2011, 1.442695
      %v2024 = vpow.pop %v2023
      %v2025 = vmul.f32 %v2012, 1.442695
      %v2026 = vpow.pop %v2025
      %v2027 = vmul.f32 %v2013, 1.442695
      %v2028 = vpow.pop %v2027
      %v2029 = vmul.f32 %v2014, 1.442695
      %v2030 = vpow.pop %v2029
      %v2031 = vsel %vm1950, %v2016, 0.0
      %v2032 = vrot.slane %v2031, 4
      %v2033 = vadd.f32 %v2031, %v2032
      %v2034 = vrot.slane %v2033, 2
      %v2035 = vadd.f32 %v2033, %v2034
      %v2036 = vrot.slane %v2035, 1
      %v2037 = vadd.f32 %v2035, %v2036
      %v2038 = vsel %vm1950, %v2018, 0.0
      %v2039 = vrot.slane %v2038, 4
      %v2040 = vadd.f32 %v2038, %v2039
      %v2041 = vrot.slane %v2040, 2
      %v2042 = vadd.f32 %v2040, %v2041
      %v2043 = vrot.slane %v2042, 1
      %v2044 = vadd.f32 %v2042, %v2043
      %v2045 = vsel %vm1950, %v2020, 0.0
      %v2046 = vrot.slane %v2045, 4
      %v2047 = vadd.f32 %v2045, %v2046
      %v2048 = vrot.slane %v2047, 2
      %v2049 = vadd.f32 %v2047, %v2048
      %v2050 = vrot.slane %v2049, 1
      %v2051 = vadd.f32 %v2049, %v2050
      %v2052 = vsel %vm1950, %v2022, 0.0
      %v2053 = vrot.slane %v2052, 4
      %v2054 = vadd.f32 %v2052, %v2053
      %v2055 = vrot.slane %v2054, 2
      %v2056 = vadd.f32 %v2054, %v2055
      %v2057 = vrot.slane %v2056, 1
      %v2058 = vadd.f32 %v2056, %v2057
      %v2059 = vsel %vm1950, %v2024, 0.0
      %v2060 = vrot.slane %v2059, 4
      %v2061 = vadd.f32 %v2059, %v2060
      %v2062 = vrot.slane %v2061, 2
      %v2063 = vadd.f32 %v2061, %v2062
      %v2064 = vrot.slane %v2063, 1
      %v2065 = vadd.f32 %v2063, %v2064
      %v2066 = vsel %vm1950, %v2026, 0.0
      %v2067 = vrot.slane %v2066, 4
      %v2068 = vadd.f32 %v2066, %v2067
      %v2069 = vrot.slane %v2068, 2
      %v2070 = vadd.f32 %v2068, %v2069
      %v2071 = vrot.slane %v2070, 1
      %v2072 = vadd.f32 %v2070, %v2071
      %v2073 = vsel %vm1950, %v2028, 0.0
      %v2074 = vrot.slane %v2073, 4
      %v2075 = vadd.f32 %v2073, %v2074
      %v2076 = vrot.slane %v2075, 2
      %v2077 = vadd.f32 %v2075, %v2076
      %v2078 = vrot.slane %v2077, 1
      %v2079 = vadd.f32 %v2077, %v2078
      %v2080 = vsel %vm1950, %v2030, 0.0
      %v2081 = vrot.slane %v2080, 4
      %v2082 = vadd.f32 %v2080, %v2081
      %v2083 = vrot.slane %v2082, 2
      %v2084 = vadd.f32 %v2082, %v2083
      %v2085 = vrot.slane %v2084, 1
      %v2086 = vadd.f32 %v2084, %v2085
      %v2087 = vrcp.pop %v2037
      %v2088 = vmul.f32 %v2037, %v2087
      %v2089 = vsub.f32 1.0, %v2088
      %v2090 = vmul.f32 %v2087, %v2089
      %v2091 = vadd.f32 %v2087, %v2090
      %vm2092 = vweird.f32 %v2037
      %vm2093 = vweird.f32 %v2087
      %vm2094 = vmor %vm2092, %vm2093
      %v2095 = vsel %vm2094, %v2087, %v2091
      %v2096 = vand.u32 2147483647, %v2037
      %vm2097 = vcmp.eq.f32.partialorder %v2096, 8.507059e+37
      %v2098 = vand.u32 %v2037, 2147483648
      %v2099 = vor.u32 1.1754944e-38, %v2098
      %v2100 = vsel %vm2097, %v2099, %v2095
      %v2101 = vmul.f32 %v2016, %v2100
      %v2102 = vrcp.pop %v2044
      %v2103 = vmul.f32 %v2044, %v2102
      %v2104 = vsub.f32 1.0, %v2103
      %v2105 = vmul.f32 %v2102, %v2104
      %v2106 = vadd.f32 %v2102, %v2105
      %vm2107 = vweird.f32 %v2044
      %vm2108 = vweird.f32 %v2102
      %vm2109 = vmor %vm2107, %vm2108
      %v2110 = vsel %vm2109, %v2102, %v2106
      %v2111 = vand.u32 2147483647, %v2044
      %vm2112 = vcmp.eq.f32.partialorder %v2111, 8.507059e+37
      %v2113 = vand.u32 %v2044, 2147483648
      %v2114 = vor.u32 1.1754944e-38, %v2113
      %v2115 = vsel %vm2112, %v2114, %v2110
      %v2116 = vmul.f32 %v2018, %v2115
      %v2117 = vrcp.pop %v2051
      %v2118 = vmul.f32 %v2051, %v2117
      %v2119 = vsub.f32 1.0, %v2118
      %v2120 = vmul.f32 %v2117, %v2119
      %v2121 = vadd.f32 %v2117, %v2120
      %vm2122 = vweird.f32 %v2051
      %vm2123 = vweird.f32 %v2117
      %vm2124 = vmor %vm2122, %vm2123
      %v2125 = vsel %vm2124, %v2117, %v2121
      %v2126 = vand.u32 2147483647, %v2051
      %vm2127 = vcmp.eq.f32.partialorder %v2126, 8.507059e+37
      %v2128 = vand.u32 %v2051, 2147483648
      %v2129 = vor.u32 1.1754944e-38, %v2128
      %v2130 = vsel %vm2127, %v2129, %v2125
      %v2131 = vmul.f32 %v2020, %v2130
      %v2132 = vrcp.pop %v2058
      %v2133 = vmul.f32 %v2058, %v2132
      %v2134 = vsub.f32 1.0, %v2133
      %v2135 = vmul.f32 %v2132, %v2134
      %v2136 = vadd.f32 %v2132, %v2135
      %vm2137 = vweird.f32 %v2058
      %vm2138 = vweird.f32 %v2132
      %vm2139 = vmor %vm2137, %vm2138
      %v2140 = vsel %vm2139, %v2132, %v2136
      %v2141 = vand.u32 2147483647, %v2058
      %vm2142 = vcmp.eq.f32.partialorder %v2141, 8.507059e+37
      %v2143 = vand.u32 %v2058, 2147483648
      %v2144 = vor.u32 1.1754944e-38, %v2143
      %v2145 = vsel %vm2142, %v2144, %v2140
      %v2146 = vmul.f32 %v2022, %v2145
      %v2147 = vrcp.pop %v2065
      %v2148 = vmul.f32 %v2065, %v2147
      %v2149 = vsub.f32 1.0, %v2148
      %v2150 = vmul.f32 %v2147, %v2149
      %v2151 = vadd.f32 %v2147, %v2150
      %vm2152 = vweird.f32 %v2065
      %vm2153 = vweird.f32 %v2147
      %vm2154 = vmor %vm2152, %vm2153
      %v2155 = vsel %vm2154, %v2147, %v2151
      %v2156 = vand.u32 2147483647, %v2065
      %vm2157 = vcmp.eq.f32.partialorder %v2156, 8.507059e+37
      %v2158 = vand.u32 %v2065, 2147483648
      %v2159 = vor.u32 1.1754944e-38, %v2158
      %v2160 = vsel %vm2157, %v2159, %v2155
      %v2161 = vmul.f32 %v2024, %v2160
      %v2162 = vrcp.pop %v2072
      %v2163 = vmul.f32 %v2072, %v2162
      %v2164 = vsub.f32 1.0, %v2163
      %v2165 = vmul.f32 %v2162, %v2164
      %v2166 = vadd.f32 %v2162, %v2165
      %vm2167 = vweird.f32 %v2072
      %vm2168 = vweird.f32 %v2162
      %vm2169 = vmor %vm2167, %vm2168
      %v2170 = vsel %vm2169, %v2162, %v2166
      %v2171 = vand.u32 2147483647, %v2072
      %vm2172 = vcmp.eq.f32.partialorder %v2171, 8.507059e+37
      %v2173 = vand.u32 %v2072, 2147483648
      %v2174 = vor.u32 1.1754944e-38, %v2173
      %v2175 = vsel %vm2172, %v2174, %v2170
      %v2176 = vmul.f32 %v2026, %v2175
      %v2177 = vrcp.pop %v2079
      %v2178 = vmul.f32 %v2079, %v2177
      %v2179 = vsub.f32 1.0, %v2178
      %v2180 = vmul.f32 %v2177, %v2179
      %v2181 = vadd.f32 %v2177, %v2180
      %vm2182 = vweird.f32 %v2079
      %vm2183 = vweird.f32 %v2177
      %vm2184 = vmor %vm2182, %vm2183
      %v2185 = vsel %vm2184, %v2177, %v2181
      %v2186 = vand.u32 2147483647, %v2079
      %vm2187 = vcmp.eq.f32.partialorder %v2186, 8.507059e+37
      %v2188 = vand.u32 %v2079, 2147483648
      %v2189 = vor.u32 1.1754944e-38, %v2188
      %v2190 = vsel %vm2187, %v2189, %v2185
      %v2191 = vmul.f32 %v2028, %v2190
      %v2192 = vrcp.pop %v2086
      %v2193 = vmul.f32 %v2086, %v2192
      %v2194 = vsub.f32 1.0, %v2193
      %v2195 = vmul.f32 %v2192, %v2194
      %v2196 = vadd.f32 %v2192, %v2195
      %vm2197 = vweird.f32 %v2086
      %vm2198 = vweird.f32 %v2192
      %vm2199 = vmor %vm2197, %vm2198
      %v2200 = vsel %vm2199, %v2192, %v2196
      %v2201 = vand.u32 2147483647, %v2086
      %vm2202 = vcmp.eq.f32.partialorder %v2201, 8.507059e+37
      %v2203 = vand.u32 %v2086, 2147483648
      %v2204 = vor.u32 1.1754944e-38, %v2203
      %v2205 = vsel %vm2202, %v2204, %v2200
      %v2206 = vmul.f32 %v2030, %v2205
      %v2207 = vperm.slane %v1609, %v680
      %v2208 = vperm.slane %v1612, %v680
      %v2209 = vperm.slane %v1615, %v680
      %v2210 = vperm.slane %v1618, %v680
      %v2211 = vperm.slane %v1621, %v680
      %v2212 = vperm.slane %v1624, %v680
      %v2213 = vperm.slane %v1627, %v680
      %v2214 = vperm.slane %v1630, %v680
      %v2215 = vsel %vm817, %v2207, %v2207
      %v2216 = vsel %vm819, %v2207, %v2215
      %v2217 = vsel %vm821, %v2207, %v2216
      %v2218 = vsel %vm823, %v2207, %v2217
      %v2219 = vsel %vm825, %v2207, %v2218
      %v2220 = vsel %vm817, %v2208, %v2208
      %v2221 = vsel %vm819, %v2208, %v2220
      %v2222 = vsel %vm821, %v2208, %v2221
      %v2223 = vsel %vm823, %v2208, %v2222
      %v2224 = vsel %vm825, %v2208, %v2223
      %v2225 = vsel %vm817, %v2209, %v2209
      %v2226 = vsel %vm819, %v2209, %v2225
      %v2227 = vsel %vm821, %v2209, %v2226
      %v2228 = vsel %vm823, %v2209, %v2227
      %v2229 = vsel %vm825, %v2209, %v2228
      %v2230 = vsel %vm817, %v2210, %v2210
      %v2231 = vsel %vm819, %v2210, %v2230
      %v2232 = vsel %vm821, %v2210, %v2231
      %v2233 = vsel %vm823, %v2210, %v2232
      %v2234 = vsel %vm825, %v2210, %v2233
      %v2235 = vsel %vm817, %v2211, %v2211
      %v2236 = vsel %vm819, %v2211, %v2235
      %v2237 = vsel %vm821, %v2211, %v2236
      %v2238 = vsel %vm823, %v2211, %v2237
      %v2239 = vsel %vm825, %v2211, %v2238
      %v2240 = vsel %vm817, %v2212, %v2212
      %v2241 = vsel %vm819, %v2212, %v2240
      %v2242 = vsel %vm821, %v2212, %v2241
      %v2243 = vsel %vm823, %v2212, %v2242
      %v2244 = vsel %vm825, %v2212, %v2243
      %v2245 = vsel %vm817, %v2213, %v2213
      %v2246 = vsel %vm819, %v2213, %v2245
      %v2247 = vsel %vm821, %v2213, %v2246
      %v2248 = vsel %vm823, %v2213, %v2247
      %v2249 = vsel %vm825, %v2213, %v2248
      %v2250 = vsel %vm817, %v2214, %v2214
      %v2251 = vsel %vm819, %v2214, %v2250
      %v2252 = vsel %vm821, %v2214, %v2251
      %v2253 = vsel %vm823, %v2214, %v2252
      %v2254 = vsel %vm825, %v2214, %v2253
      %v2263 = vmul.f32 %v2101, %v2219
      %v2264 = vmul.f32 %v2116, %v2224
      %v2265 = vmul.f32 %v2131, %v2229
      %v2266 = vmul.f32 %v2146, %v2234
      %v2267 = vmul.f32 %v2161, %v2239
      %v2268 = vmul.f32 %v2176, %v2244
      %v2269 = vmul.f32 %v2191, %v2249
      %v2270 = vmul.f32 %v2206, %v2254
      %v2271 = vsel %vm1950, %v2263, 0.0
      %2272 = vadd.xlane.f32.xlu0 %v2271
      %v2273 = vpop.xlane.xlu0 %2272
      %v2274 = vsel %vm1950, %v2264, 0.0
      %2275 = vadd.xlane.f32.xlu0 %v2274
      %v2276 = vpop.xlane.xlu0 %2275
      %v2277 = vsel %vm1950, %v2265, 0.0
      %2278 = vadd.xlane.f32.xlu0 %v2277
      %v2279 = vpop.xlane.xlu0 %2278
      %v2280 = vsel %vm1950, %v2266, 0.0
      %2281 = vadd.xlane.f32.xlu0 %v2280
      %v2282 = vpop.xlane.xlu0 %2281
      %v2283 = vsel %vm1950, %v2267, 0.0
      %2284 = vadd.xlane.f32.xlu0 %v2283
      %v2285 = vpop.xlane.xlu0 %2284
      %v2286 = vsel %vm1950, %v2268, 0.0
      %2287 = vadd.xlane.f32.xlu0 %v2286
      %v2288 = vpop.xlane.xlu0 %2287
      %v2289 = vsel %vm1950, %v2269, 0.0
      %2290 = vadd.xlane.f32.xlu0 %v2289
      %v2291 = vpop.xlane.xlu0 %2290
      %v2292 = vsel %vm1950, %v2270, 0.0
      %2293 = vadd.xlane.f32.xlu0 %v2292
      %v2294 = vpop.xlane.xlu0 %2293
      %v2303 = vperm.slane %v2273, %v682
      %v2304 = vperm.slane %v2276, %v682
      %v2305 = vperm.slane %v2279, %v682
      %v2306 = vperm.slane %v2282, %v682
      %v2307 = vperm.slane %v2285, %v682
      %v2308 = vperm.slane %v2288, %v682
      %v2309 = vperm.slane %v2291, %v682
      %v2310 = vperm.slane %v2294, %v682
      %v2311 = vsel %vm815, %v2304, %v2303
      %v2312 = vsel %vm817, %v2305, %v2311
      %v2313 = vsel %vm819, %v2306, %v2312
      %v2314 = vsel %vm821, %v2307, %v2313
      %v2315 = vsel %vm823, %v2308, %v2314
      %v2316 = vsel %vm825, %v2309, %v2315
      %v2317 = vsel %vm827, %v2310, %v2316
      %vm2319 = vcmask 121920
      %2320 = vst.msk [vmem:[%s281] sm:$0xff] %vm2319, %v2317
      %v2329 = vrot.slane %v2116, 7
      %v2330 = vsel %vm815, %v2329, %v2101
      %v2331 = vrot.slane %v2131, 6
      %v2332 = vsel %vm817, %v2331, %v2330
      %v2333 = vrot.slane %v2146, 5
      %v2334 = vsel %vm819, %v2333, %v2332
      %v2335 = vrot.slane %v2161, 4
      %v2336 = vsel %vm821, %v2335, %v2334
      %v2337 = vrot.slane %v2176, 3
      %v2338 = vsel %vm823, %v2337, %v2336
      %v2339 = vrot.slane %v2191, 2
      %v2340 = vsel %vm825, %v2339, %v2338
      %v2341 = vrot.slane %v2206, 1
      %v2342 = vsel %vm827, %v2341, %v2340
      %2343 = vrot.lane.b32.xlu0 %v2342, 30
      %v2344 = vpop.permute.xlu0 %2343
      %vm2346 = vcmask 285936
      %2347 = vst.msk [vmem:[%s281] sm:$0xff] %vm2346, %v2344
      %v2348 = vsel %vm817, %v2329, %v2101
      %v2349 = vsel %vm819, %v2331, %v2348
      %v2350 = vsel %vm821, %v2333, %v2349
      %v2351 = vsel %vm823, %v2335, %v2350
      %v2352 = vsel %vm825, %v2337, %v2351
      %v2353 = vsel %vm827, %v2339, %v2352
      %2354 = vrot.lane.b32.xlu0 %v2353, 35
      %v2355 = vpop.permute.xlu0 %2354
      %2356 = vrot.lane.b32.xlu0 %v2341, 35
      %v2357 = vpop.permute.xlu0 %2356
      %vm2360 = vcmask 326937
      %2361 = vst.msk [vmem:[%s281 - $0x1] sm:$0xfe] %vm2360, %v2355
      %vm2362 = vcmask 319768
      %2363 = vst.msk [vmem:[%s281 + $0x7] sm:$0x1] %vm2362, %v2357
      %v2364 = vsel %vm819, %v2329, %v2101
      %v2365 = vsel %vm821, %v2331, %v2364
      %v2366 = vsel %vm823, %v2333, %v2365
      %v2367 = vsel %vm825, %v2335, %v2366
      %v2368 = vsel %vm827, %v2337, %v2367
      %v2369 = vsel %vm815, %v2341, %v2339
      %2370 = vrot.lane.b32.xlu0 %v2368, 40
      %v2371 = vpop.permute.xlu0 %2370
      %2372 = vrot.lane.b32.xlu0 %v2369, 40
      %v2373 = vpop.permute.xlu0 %2372
      %vm2376 = vcmask 367938
      %2377 = vst.msk [vmem:[%s281 - $0x2] sm:$0xfc] %vm2376, %v2371
      %vm2378 = vcmask 361792
      %2379 = vst.msk [vmem:[%s281 + $0x6] sm:$0x3] %vm2378, %v2373
      %v2380 = vsel %vm821, %v2329, %v2101
      %v2381 = vsel %vm823, %v2331, %v2380
      %v2382 = vsel %vm825, %v2333, %v2381
      %v2383 = vsel %vm827, %v2335, %v2382
      %v2384 = vsel %vm815, %v2339, %v2337
      %v2385 = vsel %vm817, %v2341, %v2384
      %2386 = vrot.lane.b32.xlu0 %v2383, 45
      %v2387 = vpop.permute.xlu0 %2386
      %2388 = vrot.lane.b32.xlu0 %v2385, 45
      %v2389 = vpop.permute.xlu0 %2388
      %vm2392 = vcmask 408939
      %2393 = vst.msk [vmem:[%s281 - $0x3] sm:$0xf8] %vm2392, %v2387
      %vm2394 = vcmask 403816
      %2395 = vst.msk [vmem:[%s281 + $0x5] sm:$0x7] %vm2394, %v2389
      %v2396 = vsel %vm823, %v2329, %v2101
      %v2397 = vsel %vm825, %v2331, %v2396
      %v2398 = vsel %vm827, %v2333, %v2397
      %v2399 = vsel %vm815, %v2337, %v2335
      %v2400 = vsel %vm817, %v2339, %v2399
      %v2401 = vsel %vm819, %v2341, %v2400
      %2402 = vrot.lane.b32.xlu0 %v2398, 50
      %v2403 = vpop.permute.xlu0 %2402
      %2404 = vrot.lane.b32.xlu0 %v2401, 50
      %v2405 = vpop.permute.xlu0 %2404
      %vm2408 = vcmask 449940
      %2409 = vst.msk [vmem:[%s281 - $0x4] sm:$0xf0] %vm2408, %v2403
      %vm2410 = vcmask 445840
      %2411 = vst.msk [vmem:[%s281 + $0x4] sm:$0xf] %vm2410, %v2405
      %v2412 = vsel %vm825, %v2329, %v2101
      %v2413 = vsel %vm827, %v2331, %v2412
      %v2414 = vsel %vm815, %v2335, %v2333
      %v2415 = vsel %vm817, %v2337, %v2414
      %v2416 = vsel %vm819, %v2339, %v2415
      %v2417 = vsel %vm821, %v2341, %v2416
      %2418 = vrot.lane.b32.xlu0 %v2413, 55
      %v2419 = vpop.permute.xlu0 %2418
      %2420 = vrot.lane.b32.xlu0 %v2417, 55
      %v2421 = vpop.permute.xlu0 %2420
      %vm2424 = vcmask 490941
      %2425 = vst.msk [vmem:[%s281 - $0x5] sm:$0xe0] %vm2424, %v2419
      %vm2426 = vcmask 487864
      %2427 = vst.msk [vmem:[%s281 + $0x3] sm:$0x1f] %vm2426, %v2421
      %v2428 = vsel %vm827, %v2329, %v2101
      %v2429 = vsel %vm815, %v2333, %v2331
      %v2430 = vsel %vm817, %v2335, %v2429
      %v2431 = vsel %vm819, %v2337, %v2430
      %v2432 = vsel %vm821, %v2339, %v2431
      %v2433 = vsel %vm823, %v2341, %v2432
      %2434 = vrot.lane.b32.xlu0 %v2428, 60
      %v2435 = vpop.permute.xlu0 %2434
      %2436 = vrot.lane.b32.xlu0 %v2433, 60
      %v2437 = vpop.permute.xlu0 %2436
      %vm2440 = vcmask 531942
      %2441 = vst.msk [vmem:[%s281 - $0x6] sm:$0xc0] %vm2440, %v2435
      %vm2442 = vcmask 529888
      %2443 = vst.msk [vmem:[%s281 + $0x2] sm:$0x3f] %vm2442, %v2437
      %vm2444 = vcmask 1048072
      %2445 = vst.msk [vmem:[%s281] sm:$0xff] %vm2444, 0.0
      %p2446 = scmp.lt.s32.totalorder %s18, 1
      %s2447 = scalar_select %p2446, %s18, 1
      %s2448 = smul.addr %s2447, 8
      %s2449 = scalar_lea.vmem %s7, %s2448
      // Predicated region
      $region49: #{resnet_transition_forward.1} parent=47 // pred_check
        %p2450 = pneg %p188
      $region50: #{resnet_transition_forward.1} parent=47 // pred_check_branch
        %2452 = sbr.rel (%p2450) target = $region52
      $region51: #{resnet_transition_forward.1} parent=47 // pred_region
        _
      $region52: #{resnet_transition_forward.1} parent=47 // pred_fallthru
        _
    $region48: #{resnet_transition_forward.1} parent=5 // pred_fallthru
      _
    %p2453 = scmp.le.s32.totalorder 2, %s13
    // Predicated region
    $region53: #{resnet_transition_forward.1} parent=5 // pred_check
      %p2454 = pneg %p2453
    $region54: #{resnet_transition_forward.1} parent=5 // pred_check_branch
      %2456 = sbr.rel (%p2454) target = $region56
    $region55: #{resnet_transition_forward.1} parent=5 // pred_region
      %s2457 = ssub.s32 %s13, 2
      // Predicated region
      $region57: #{resnet_transition_forward.1} parent=55 // pred_check
        %p2458 = pneg %p194
      $region58: #{resnet_transition_forward.1} parent=55 // pred_check_branch
        %2460 = sbr.rel (%p2458) target = $region60
      $region59: #{resnet_transition_forward.1} parent=55 // pred_region
        %p2461 = scmp.lt.s32.totalorder %s19, 1
        %s2462 = scalar_select %p2461, %s19, 1
        %s2463 = smul.addr %s2462, 8
        %s2464 = scalar_lea.vmem %s7, %s2463
      $region60: #{resnet_transition_forward.1} parent=55 // pred_fallthru
        _
    $region56: #{resnet_transition_forward.1} parent=5 // pred_fallthru
      _
  $region6: #{resnet_transition_forward.1} parent=0 // loop_footer
    %s17 = sadd.s32 1, %s13
  $region7: #{resnet_transition_forward.1} parent=0 // loop_footer_branch
    %12 = sbr.rel target = $region3
  $region8: #{resnet_transition_forward.1} parent=0 // loop_exit
    _

</llo_original>
